<compile_context>
chip_gen: v6e
topology: v6e:2x2x1
jax: 0.10.0
libtpu: 0.0.40
codegen_flags: <defaults>
</compile_context>

<pallas_src>
import functools

import jax
import jax.numpy as jnp
from jax import lax
from jax.experimental import pallas as pl
from jax.experimental.pallas import tpu as pltpu


# ----------------------------------------------------------------------------
# Config (matches the PyTorch module with relu blocks, no BN, no dropout)
# ----------------------------------------------------------------------------
class ListCVAEConfig:
    num_of_movies = 64
    slate_size = 4
    response_dims = 4
    embed_dims = 16
    encoder_dims = (32,)
    latent_dims = 16
    decoder_dims = (32,)
    prior_dims = (32,)
    activation = "relu"      # 'relu' | 'leaky' | anything-else -> tanh
    gdpp_active = False


# ----------------------------------------------------------------------------
# Parameter init (mirrors the PyTorch module layout; no derived folds here —
# folds are recomputed at trace time so they never go stale under training)
# ----------------------------------------------------------------------------
def init_params(cfg, key):
    keys = iter(jax.random.split(key, 64))

    def w(shape):
        return jax.random.normal(next(keys), shape, jnp.float32) * 0.05

    def b(dout):
        return jax.random.normal(next(keys), (1, dout), jnp.float32) * 0.05

    S, E, R, L = cfg.slate_size, cfg.embed_dims, cfg.response_dims, cfg.latent_dims
    N, V = cfg.num_of_movies, cfg.num_of_movies + 1

    params = {}

    # Embedding table [V, E] with padding row (index N) zeroed (padding_idx).
    emb = jax.random.normal(next(keys), (V, E), jnp.float32) * 0.1
    emb = emb.at[N].set(0.0)
    params["embedding"] = emb

    # ---- encoder ----
    h = cfg.encoder_dims[0]
    params["encoder_first"] = {"w_slate": w((S * E, h)), "w_user": w((E, h)),
                               "w_resp": w((R, h)), "b": b(h)}
    extra, din = [], h
    for dout in cfg.encoder_dims[1:]:
        extra.append({"w": w((din, dout)), "b": b(dout)})
        din = dout
    params["encoder_extra"] = extra
    params["encoder_mu"] = {"w": w((din, L)), "b": b(L)}
    params["encoder_log_variance"] = {"w": w((din, L)), "b": b(L)}

    # ---- decoder ----
    h = cfg.decoder_dims[0]
    params["decoder_first"] = {"w_z": w((L, h)), "w_user": w((E, h)),
                               "w_resp": w((R, h)), "b": b(h)}
    extra, din = [], h
    for dout in cfg.decoder_dims[1:]:
        extra.append({"w": w((din, dout)), "b": b(dout)})
        din = dout
    params["decoder_extra"] = extra
    params["decoder_final"] = {"w": w((din, S * E)), "b": b(S * E)}

    # ---- prior ----
    h = cfg.prior_dims[0]
    params["prior_first"] = {"w_user": w((E, h)), "w_resp": w((R, h)), "b": b(h)}
    extra, din = [], h
    for dout in cfg.prior_dims[1:]:
        extra.append({"w": w((din, dout)), "b": b(dout)})
        din = dout
    params["prior_extra"] = extra
    params["prior_mu"] = {"w": w((din, L)), "b": b(L)}
    params["prior_log_variance"] = {"w": w((din, L)), "b": b(L)}
    return params


# ----------------------------------------------------------------------------
# Fused Pallas kernel
# ----------------------------------------------------------------------------
def _make_fused_kernel(cfg, n_enc_extra, n_dec_extra, n_pri_extra,
                       mxu_dtype, store_hidden):
    S, L = cfg.slate_size, cfg.latent_dims
    V = cfg.num_of_movies + 1
    act = cfg.activation
    f32 = jnp.float32

    def act_fn(x):
        if act == "relu":
            return jnp.maximum(x, 0.0)
        if act == "leaky":
            return jnp.where(x > 0, x, 0.01 * x)
        return jnp.tanh(x)

    def dot(a, b_):
        return jnp.dot(a, b_, preferred_element_type=f32)

    def kernel(*refs):
        it = iter(refs)
        # ---- batch-sliced inputs ----
        slate_ref = next(it); hist_ref = next(it); cnt_ref = next(it)
        resp_ref = next(it); eps_ref = next(it)
        # ---- weights (VMEM-resident across grid steps) ----
        e_slate_f = next(it); e_user_f = next(it); e_wr = next(it); e_b = next(it)
        enc_extra = [(next(it), next(it)) for _ in range(n_enc_extra)]
        e_mu_w = next(it); e_mu_b = next(it); e_lv_w = next(it); e_lv_b = next(it)
        d_wz = next(it); d_user_f = next(it); d_wr = next(it); d_b = next(it)
        dec_extra = [(next(it), next(it)) for _ in range(n_dec_extra)]
        sc_w = next(it); sc_b = next(it)
        p_user_f = next(it); p_wr = next(it); p_b = next(it)
        pri_extra = [(next(it), next(it)) for _ in range(n_pri_extra)]
        p_mu_w = next(it); p_mu_b = next(it); p_lv_w = next(it); p_lv_b = next(it)
        # ---- outputs ----
        scores_ref = next(it); mu_ref = next(it); lv_ref = next(it)
        pmu_ref = next(it); plv_ref = next(it)
        hidden_ref = next(it) if store_hidden else None

        slate = slate_ref[...]            # [TB, S]  int32
        hist = hist_ref[...]              # [TB, Hh] int32
        cnt = cnt_ref[...]                # [TB, 1]  f32
        resp = resp_ref[...]              # [TB, R]  mxu_dtype
        eps = eps_ref[...]                # [TB, L]  f32
        TB = resp.shape[0]
        Hh = hist.shape[1]

        iota_v = lax.broadcasted_iota(jnp.int32, (TB, V), 1)

        # ---- multi-hot interaction counts (embedding table is folded into the
        # user-path weights; padding row N of the table is zero so padded ids
        # contribute nothing). Small integer counts are exact in bf16.
        # TODO(synk): if history length grows beyond ~8, precompute this [B, V]
        # count tensor outside the kernel (XLA segment-sum) instead of unrolling.
        mh = jnp.zeros((TB, V), f32)
        for h in range(Hh):
            mh = mh + jnp.where(iota_v == hist[:, h:h + 1], 1.0, 0.0)
        multihot = mh.astype(mxu_dtype)
        inv_cnt = pl.reciprocal(cnt, approx=True)          # EUP slot, ~free

        # ---- encoder -------------------------------------------------------
        # first-layer input = [slate_embeds | user_emb | resp]; all pieces are
        # partial dots against (embedding-folded) row-blocks of W, no concat.
        enc_acc = (dot(multihot, e_user_f[...]) * inv_cnt
                   + dot(resp, e_wr[...]) + e_b[...])
        for s in range(S):
            onehot = jnp.where(iota_v == slate[:, s:s + 1], 1.0, 0.0).astype(mxu_dtype)
            enc_acc = enc_acc + dot(onehot, e_slate_f[s])   # [V, H] folded table
        h_e = act_fn(enc_acc)
        for w_ref, b_ref in enc_extra:
            h_e = act_fn(dot(h_e.astype(mxu_dtype), w_ref[...]) + b_ref[...])

        h_e_c = h_e.astype(mxu_dtype)
        mu = dot(h_e_c, e_mu_w[...]) + e_mu_b[...]          # separate heads: no
        log_var = dot(h_e_c, e_lv_w[...]) + e_lv_b[...]     # unaligned lane slices
        # reparameterize: torch.rand_like -> UNIFORM eps (faithful to reference)
        z = mu + eps * jnp.exp(0.5 * log_var)

        # ---- decoder -------------------------------------------------------
        dec_acc = (dot(z.astype(mxu_dtype), d_wz[...])
                   + dot(multihot, d_user_f[...]) * inv_cnt
                   + dot(resp, d_wr[...]) + d_b[...])
        h_d = act_fn(dec_acc)
        for w_ref, b_ref in dec_extra:
            h_d = act_fn(dot(h_d.astype(mxu_dtype), w_ref[...]) + b_ref[...])
        # decoder_final folded into the scoring weight: one lane-dense 256-wide dot.
        scores = dot(h_d.astype(mxu_dtype), sc_w[...]) + sc_b[...]   # [TB, S*N]

        # ---- prior ---------------------------------------------------------
        pri_acc = (dot(multihot, p_user_f[...]) * inv_cnt
                   + dot(resp, p_wr[...]) + p_b[...])
        h_p = act_fn(pri_acc)
        for w_ref, b_ref in pri_extra:
            h_p = act_fn(dot(h_p.astype(mxu_dtype), w_ref[...]) + b_ref[...])
        h_p_c = h_p.astype(mxu_dtype)
        pmu = dot(h_p_c, p_mu_w[...]) + p_mu_b[...]
        plv = dot(h_p_c, p_lv_w[...]) + p_lv_b[...]

        # ---- stores (only real outputs touch VMEM/HBM) ---------------------
        scores_ref[...] = scores
        mu_ref[...] = mu
        lv_ref[...] = log_var
        pmu_ref[...] = pmu
        plv_ref[...] = plv
        if store_hidden:
            hidden_ref[...] = h_e

    return kernel


def _const_spec(shape):
    nd = len(shape)
    return pl.BlockSpec(shape, lambda i, _nd=nd: (0,) * _nd)


def _batch_spec(shape, tile_b):
    nd = len(shape)
    return pl.BlockSpec((tile_b,) + tuple(shape[1:]),
                        lambda i, _nd=nd: (i,) + (0,) * (_nd - 1))


# ----------------------------------------------------------------------------
# Forward wrapper
# ----------------------------------------------------------------------------
def forward(params, cfg, slate_inputs, user_interactions_with_padding,
            number_of_interactions_per_user, response_vector, eps_key,
            *, tile_b=128, mxu_dtype=jnp.bfloat16, need_last_hidden=True):
    S, E, R, L = cfg.slate_size, cfg.embed_dims, cfg.response_dims, cfg.latent_dims
    N, V = cfg.num_of_movies, cfg.num_of_movies + 1
    B = response_vector.shape[0]
    enc_hidden = cfg.encoder_dims[-1]
    f32 = jnp.float32

    # torch.rand_like -> uniform [0, 1) noise (faithful to the reference module).
    eps = jax.random.uniform(eps_key, (B, L), f32)
    cnt = number_of_interactions_per_user.reshape(B, 1).astype(f32)

    # ---- batch tiling: pad B to a multiple of tile_b, one grid step per tile.
    # tile_b>=128 fills the MXU M dimension; size it per generation against
    # scoped VMEM (v7x 64 MiB phys / v5e 16 MiB default scoped) — this config's
    # footprint is << 1 MiB per tile even at tile_b=512.
    n_tiles = pl.cdiv(B, tile_b)
    b_pad = n_tiles * tile_b - B

    def padb(x, value=0):
        if b_pad == 0:
            return x
        return jnp.pad(x, ((0, b_pad),) + ((0, 0),) * (x.ndim - 1),
                       constant_values=value)

    slate_p = padb(slate_inputs.astype(jnp.int32), 0)
    hist_p = padb(user_interactions_with_padding.astype(jnp.int32), N)  # padding idx
    cnt_p = padb(cnt, 1.0)                                              # avoid 1/0
    resp_p = padb(response_vector.astype(f32).astype(mxu_dtype), 0)
    eps_p = padb(eps, 0.0)

    # ---- trace-time weight folds (outside the kernel, inside jit; never stale)
    emb = params["embedding"]                       # [V, E] f32, row N == 0
    emb_n = emb[:N]                                 # [N, E]

    e_ws = params["encoder_first"]["w_slate"]       # [S*E, He]
    He = e_ws.shape[1]
    enc_slate_fold = jnp.einsum("ve,seh->svh", emb,
                                e_ws.reshape(S, E, He)).astype(mxu_dtype)   # [S,V,He]
    enc_user_fold = (emb @ params["encoder_first"]["w_user"]).astype(mxu_dtype)
    dec_user_fold = (emb @ params["decoder_first"]["w_user"]).astype(mxu_dtype)
    pri_user_fold = (emb @ params["prior_first"]["w_user"]).astype(mxu_dtype)

    d_fw = params["decoder_final"]["w"]             # [Hd, S*E]
    Hd = d_fw.shape[0]
    score_fused_w = jnp.einsum("hse,ne->hsn", d_fw.reshape(Hd, S, E),
                               emb_n).reshape(Hd, S * N).astype(mxu_dtype)  # [Hd, S*N]
    score_fused_b = jnp.einsum("se,ne->sn",
                               params["decoder_final"]["b"].reshape(S, E),
                               emb_n).reshape(1, S * N)                     # f32

    def wcast(x):
        return x.astype(mxu_dtype)

    operands = [slate_p, hist_p, cnt_p, resp_p, eps_p,
                enc_slate_fold, enc_user_fold,
                wcast(params["encoder_first"]["w_resp"]), params["encoder_first"]["b"]]
    for layer in params["encoder_extra"]:
        operands += [wcast(layer["w"]), layer["b"]]
    operands += [wcast(params["encoder_mu"]["w"]), params["encoder_mu"]["b"],
                 wcast(params["encoder_log_variance"]["w"]),
                 params["encoder_log_variance"]["b"],
                 wcast(params["decoder_first"]["w_z"]), dec_user_fold,
                 wcast(params["decoder_first"]["w_resp"]), params["decoder_first"]["b"]]
    for layer in params["decoder_extra"]:
        operands += [wcast(layer["w"]), layer["b"]]
    operands += [score_fused_w, score_fused_b,
                 pri_user_fold,
                 wcast(params["prior_first"]["w_resp"]), params["prior_first"]["b"]]
    for layer in params["prior_extra"]:
        operands += [wcast(layer["w"]), layer["b"]]
    operands += [wcast(params["prior_mu"]["w"]), params["prior_mu"]["b"],
                 wcast(params["prior_log_variance"]["w"]),
                 params["prior_log_variance"]["b"]]

    kernel = _make_fused_kernel(cfg,
                                len(params["encoder_extra"]),
                                len(params["decoder_extra"]),
                                len(params["prior_extra"]),
                                mxu_dtype, need_last_hidden)

    B_pad = B + b_pad
    out_shapes = [jax.ShapeDtypeStruct((B_pad, S * N), f32),   # lane-dense score slab
                  jax.ShapeDtypeStruct((B_pad, L), f32),       # mu
                  jax.ShapeDtypeStruct((B_pad, L), f32),       # log_variance
                  jax.ShapeDtypeStruct((B_pad, L), f32),       # prior mu
                  jax.ShapeDtypeStruct((B_pad, L), f32)]       # prior log_variance
    if need_last_hidden:
        out_shapes.append(jax.ShapeDtypeStruct((B_pad, enc_hidden), f32))

    # Batch-sliced specs for inputs/outputs; constant specs keep weights resident.
    in_specs = [_batch_spec(o.shape, tile_b) for o in operands[:5]] + \
               [_const_spec(o.shape) for o in operands[5:]]
    out_specs = tuple(_batch_spec(s.shape, tile_b) for s in out_shapes)

    outs = pl.pallas_call(
        kernel,
        out_shape=tuple(out_shapes),
        grid=(n_tiles,),
        in_specs=in_specs,
        out_specs=out_specs,
        compiler_params=pltpu.CompilerParams(
            dimension_semantics=("parallel",),            # shards across v7x's 2 TCs
            vmem_limit_bytes=32 * 1024 * 1024),
    )(*operands)

    scores_slab, mu, log_variance, prior_mu, prior_log_variance = outs[:5]
    decoder_out = scores_slab[:B].reshape(B, S, N)     # wrapper-side layout plumbing
    mu = mu[:B]
    log_variance = log_variance[:B]
    prior_mu = prior_mu[:B]
    prior_log_variance = prior_log_variance[:B]
    last_hidden_real = outs[5][:B] if need_last_hidden else None
    last_hidden_fake = None
    # TODO(synk): get_slates / gdpp_active branch (sequential argmax with -inf
    # scatter masking + re-encode) is not implemented since gdpp_active=False.
    return (decoder_out, mu, log_variance, prior_mu, prior_log_variance,
            last_hidden_real, last_hidden_fake)


# ----------------------------------------------------------------------------
# Driver
# ----------------------------------------------------------------------------
if __name__ == "__main__":
    cfg = ListCVAEConfig()
    B = 2          # batch
    H = 6          # interaction-history length

    key = jax.random.PRNGKey(0)
    k_param, k_slate, k_hist, k_cnt, k_resp, k_eps = jax.random.split(key, 6)

    params = init_params(cfg, k_param)

    slate_inputs = jax.random.randint(
        k_slate, (B, cfg.slate_size), 0, cfg.num_of_movies, dtype=jnp.int32)
    user_interactions_with_padding = jax.random.randint(
        k_hist, (B, H), 0, cfg.num_of_movies + 1, dtype=jnp.int32)
    number_of_interactions_per_user = jax.random.randint(
        k_cnt, (B,), 1, H + 1, dtype=jnp.int32).astype(jnp.float32)
    response_vector = jax.random.uniform(
        k_resp, (B, cfg.response_dims), jnp.float32)

    fwd = jax.jit(functools.partial(forward, params, cfg))
    outs = fwd(slate_inputs, user_interactions_with_padding,
               number_of_interactions_per_user, response_vector, k_eps)

    (decoder_out, mu, log_variance, prior_mu, prior_log_variance,
     last_hidden_real, last_hidden_fake) = outs

    jax.block_until_ready(decoder_out)
    jax.block_until_ready(mu)
    jax.block_until_ready(prior_log_variance)

    assert decoder_out.shape == (B, cfg.slate_size, cfg.num_of_movies)
    assert mu.shape == (B, cfg.latent_dims)
    assert log_variance.shape == (B, cfg.latent_dims)
    assert prior_mu.shape == (B, cfg.latent_dims)
    assert prior_log_variance.shape == (B, cfg.latent_dims)
    assert last_hidden_real.shape == (B, cfg.encoder_dims[-1])
    assert last_hidden_fake is None
    assert bool(jnp.all(jnp.isfinite(decoder_out)))
    assert bool(jnp.all(jnp.isfinite(mu)))
    assert bool(jnp.all(jnp.isfinite(prior_log_variance)))

    print("KERNEL_OK")
</pallas_src>

<mosaic_0001>
module attributes {stable_mosaic.version = 11 : i64} {
  func.func @kernel(%arg0: i32, %arg1: memref<128x4xi32, #tpu.memory_space<vmem>>, %arg2: memref<128x6xi32, #tpu.memory_space<vmem>>, %arg3: memref<128x1xf32, #tpu.memory_space<vmem>>, %arg4: memref<128x4xbf16, #tpu.memory_space<vmem>>, %arg5: memref<128x16xf32, #tpu.memory_space<vmem>>, %arg6: memref<4x65x32xbf16, #tpu.memory_space<vmem>>, %arg7: memref<65x32xbf16, #tpu.memory_space<vmem>>, %arg8: memref<4x32xbf16, #tpu.memory_space<vmem>>, %arg9: memref<1x32xf32, #tpu.memory_space<vmem>>, %arg10: memref<32x16xbf16, #tpu.memory_space<vmem>>, %arg11: memref<1x16xf32, #tpu.memory_space<vmem>>, %arg12: memref<32x16xbf16, #tpu.memory_space<vmem>>, %arg13: memref<1x16xf32, #tpu.memory_space<vmem>>, %arg14: memref<16x32xbf16, #tpu.memory_space<vmem>>, %arg15: memref<65x32xbf16, #tpu.memory_space<vmem>>, %arg16: memref<4x32xbf16, #tpu.memory_space<vmem>>, %arg17: memref<1x32xf32, #tpu.memory_space<vmem>>, %arg18: memref<32x256xbf16, #tpu.memory_space<vmem>>, %arg19: memref<1x256xf32, #tpu.memory_space<vmem>>, %arg20: memref<65x32xbf16, #tpu.memory_space<vmem>>, %arg21: memref<4x32xbf16, #tpu.memory_space<vmem>>, %arg22: memref<1x32xf32, #tpu.memory_space<vmem>>, %arg23: memref<32x16xbf16, #tpu.memory_space<vmem>>, %arg24: memref<1x16xf32, #tpu.memory_space<vmem>>, %arg25: memref<32x16xbf16, #tpu.memory_space<vmem>>, %arg26: memref<1x16xf32, #tpu.memory_space<vmem>>, %arg27: memref<128x256xf32, #tpu.memory_space<vmem>>, %arg28: memref<128x16xf32, #tpu.memory_space<vmem>>, %arg29: memref<128x16xf32, #tpu.memory_space<vmem>>, %arg30: memref<128x16xf32, #tpu.memory_space<vmem>>, %arg31: memref<128x16xf32, #tpu.memory_space<vmem>>, %arg32: memref<128x32xf32, #tpu.memory_space<vmem>>) attributes {dimension_semantics = [#tpu.dimension_semantics<parallel>], iteration_bounds = array<i64: 1>, scalar_prefetch = 0 : i64, scratch_operands = 0 : i64, tpu.core_type = #tpu.core_type<tc>, window_params = [{transform_indices = @transform_0, window_bounds = array<i64: 128, 4>}, {transform_indices = @transform_1, window_bounds = array<i64: 128, 6>}, {transform_indices = @transform_2, window_bounds = array<i64: 128, 1>}, {transform_indices = @transform_3, window_bounds = array<i64: 128, 4>}, {transform_indices = @transform_4, window_bounds = array<i64: 128, 16>}, {pipeline_mode = #tpu.pipeline_mode<synchronous>, transform_indices = @transform_5, window_bounds = array<i64: 4, 65, 32>}, {pipeline_mode = #tpu.pipeline_mode<synchronous>, transform_indices = @transform_6, window_bounds = array<i64: 65, 32>}, {pipeline_mode = #tpu.pipeline_mode<synchronous>, transform_indices = @transform_7, window_bounds = array<i64: 4, 32>}, {pipeline_mode = #tpu.pipeline_mode<synchronous>, transform_indices = @transform_8, window_bounds = array<i64: 1, 32>}, {pipeline_mode = #tpu.pipeline_mode<synchronous>, transform_indices = @transform_9, window_bounds = array<i64: 32, 16>}, {pipeline_mode = #tpu.pipeline_mode<synchronous>, transform_indices = @transform_10, window_bounds = array<i64: 1, 16>}, {pipeline_mode = #tpu.pipeline_mode<synchronous>, transform_indices = @transform_11, window_bounds = array<i64: 32, 16>}, {pipeline_mode = #tpu.pipeline_mode<synchronous>, transform_indices = @transform_12, window_bounds = array<i64: 1, 16>}, {pipeline_mode = #tpu.pipeline_mode<synchronous>, transform_indices = @transform_13, window_bounds = array<i64: 16, 32>}, {pipeline_mode = #tpu.pipeline_mode<synchronous>, transform_indices = @transform_14, window_bounds = array<i64: 65, 32>}, {pipeline_mode = #tpu.pipeline_mode<synchronous>, transform_indices = @transform_15, window_bounds = array<i64: 4, 32>}, {pipeline_mode = #tpu.pipeline_mode<synchronous>, transform_indices = @transform_16, window_bounds = array<i64: 1, 32>}, {pipeline_mode = #tpu.pipeline_mode<synchronous>, transform_indices = @transform_17, window_bounds = array<i64: 32, 256>}, {pipeline_mode = #tpu.pipeline_mode<synchronous>, transform_indices = @transform_18, window_bounds = array<i64: 1, 256>}, {pipeline_mode = #tpu.pipeline_mode<synchronous>, transform_indices = @transform_19, window_bounds = array<i64: 65, 32>}, {pipeline_mode = #tpu.pipeline_mode<synchronous>, transform_indices = @transform_20, window_bounds = array<i64: 4, 32>}, {pipeline_mode = #tpu.pipeline_mode<synchronous>, transform_indices = @transform_21, window_bounds = array<i64: 1, 32>}, {pipeline_mode = #tpu.pipeline_mode<synchronous>, transform_indices = @transform_22, window_bounds = array<i64: 32, 16>}, {pipeline_mode = #tpu.pipeline_mode<synchronous>, transform_indices = @transform_23, window_bounds = array<i64: 1, 16>}, {pipeline_mode = #tpu.pipeline_mode<synchronous>, transform_indices = @transform_24, window_bounds = array<i64: 32, 16>}, {pipeline_mode = #tpu.pipeline_mode<synchronous>, transform_indices = @transform_25, window_bounds = array<i64: 1, 16>}, {transform_indices = @transform_26, window_bounds = array<i64: 128, 256>}, {transform_indices = @transform_27, window_bounds = array<i64: 128, 16>}, {transform_indices = @transform_28, window_bounds = array<i64: 128, 16>}, {transform_indices = @transform_29, window_bounds = array<i64: 128, 16>}, {transform_indices = @transform_30, window_bounds = array<i64: 128, 16>}, {transform_indices = @transform_31, window_bounds = array<i64: 128, 32>}]} {
    %c0 = arith.constant 0 : index
    %c0_0 = arith.constant 0 : index
    %0 = vector.load %arg1[%c0, %c0_0] : memref<128x4xi32, #tpu.memory_space<vmem>>, vector<128x4xi32>
    %c0_1 = arith.constant 0 : index
    %c0_2 = arith.constant 0 : index
    %1 = vector.load %arg2[%c0_1, %c0_2] : memref<128x6xi32, #tpu.memory_space<vmem>>, vector<128x6xi32>
    %c0_3 = arith.constant 0 : index
    %c0_4 = arith.constant 0 : index
    %2 = vector.load %arg3[%c0_3, %c0_4] : memref<128x1xf32, #tpu.memory_space<vmem>>, vector<128x1xf32>
    %c0_5 = arith.constant 0 : index
    %c0_6 = arith.constant 0 : index
    %3 = vector.load %arg4[%c0_5, %c0_6] : memref<128x4xbf16, #tpu.memory_space<vmem>>, vector<128x4xbf16>
    %c0_7 = arith.constant 0 : index
    %c0_8 = arith.constant 0 : index
    %4 = vector.load %arg5[%c0_7, %c0_8] : memref<128x16xf32, #tpu.memory_space<vmem>>, vector<128x16xf32>
    %5 = tpu.iota {dimensions = array<i32: 1>} : vector<128x65xi32>
    %cst = arith.constant 0.000000e+00 : f32
    %6 = vector.broadcast %cst : f32 to vector<128x65xf32>
    %7 = vector.extract_strided_slice %1 {offsets = [0, 0], sizes = [128, 1], strides = [1, 1]} : vector<128x6xi32> to vector<128x1xi32>
    %8 = vector.broadcast %7 : vector<128x1xi32> to vector<128x65xi32>
    %9 = arith.cmpi eq, %5, %8 : vector<128x65xi32>
    %cst_9 = arith.constant 1.000000e+00 : f32
    %cst_10 = arith.constant 0.000000e+00 : f32
    %10 = vector.broadcast %cst_9 : f32 to vector<128x65xf32>
    %11 = vector.broadcast %cst_10 : f32 to vector<128x65xf32>
    %12 = arith.select %9, %10, %11 : vector<128x65xi1>, vector<128x65xf32>
    %13 = arith.addf %6, %12 : vector<128x65xf32>
    %14 = vector.extract_strided_slice %1 {offsets = [0, 1], sizes = [128, 1], strides = [1, 1]} : vector<128x6xi32> to vector<128x1xi32>
    %15 = vector.broadcast %14 : vector<128x1xi32> to vector<128x65xi32>
    %16 = arith.cmpi eq, %5, %15 : vector<128x65xi32>
    %cst_11 = arith.constant 1.000000e+00 : f32
    %cst_12 = arith.constant 0.000000e+00 : f32
    %17 = vector.broadcast %cst_11 : f32 to vector<128x65xf32>
    %18 = vector.broadcast %cst_12 : f32 to vector<128x65xf32>
    %19 = arith.select %16, %17, %18 : vector<128x65xi1>, vector<128x65xf32>
    %20 = arith.addf %13, %19 : vector<128x65xf32>
    %21 = vector.extract_strided_slice %1 {offsets = [0, 2], sizes = [128, 1], strides = [1, 1]} : vector<128x6xi32> to vector<128x1xi32>
    %22 = vector.broadcast %21 : vector<128x1xi32> to vector<128x65xi32>
    %23 = arith.cmpi eq, %5, %22 : vector<128x65xi32>
    %cst_13 = arith.constant 1.000000e+00 : f32
    %cst_14 = arith.constant 0.000000e+00 : f32
    %24 = vector.broadcast %cst_13 : f32 to vector<128x65xf32>
    %25 = vector.broadcast %cst_14 : f32 to vector<128x65xf32>
    %26 = arith.select %23, %24, %25 : vector<128x65xi1>, vector<128x65xf32>
    %27 = arith.addf %20, %26 : vector<128x65xf32>
    %28 = vector.extract_strided_slice %1 {offsets = [0, 3], sizes = [128, 1], strides = [1, 1]} : vector<128x6xi32> to vector<128x1xi32>
    %29 = vector.broadcast %28 : vector<128x1xi32> to vector<128x65xi32>
    %30 = arith.cmpi eq, %5, %29 : vector<128x65xi32>
    %cst_15 = arith.constant 1.000000e+00 : f32
    %cst_16 = arith.constant 0.000000e+00 : f32
    %31 = vector.broadcast %cst_15 : f32 to vector<128x65xf32>
    %32 = vector.broadcast %cst_16 : f32 to vector<128x65xf32>
    %33 = arith.select %30, %31, %32 : vector<128x65xi1>, vector<128x65xf32>
    %34 = arith.addf %27, %33 : vector<128x65xf32>
    %35 = vector.extract_strided_slice %1 {offsets = [0, 4], sizes = [128, 1], strides = [1, 1]} : vector<128x6xi32> to vector<128x1xi32>
    %36 = vector.broadcast %35 : vector<128x1xi32> to vector<128x65xi32>
    %37 = arith.cmpi eq, %5, %36 : vector<128x65xi32>
    %cst_17 = arith.constant 1.000000e+00 : f32
    %cst_18 = arith.constant 0.000000e+00 : f32
    %38 = vector.broadcast %cst_17 : f32 to vector<128x65xf32>
    %39 = vector.broadcast %cst_18 : f32 to vector<128x65xf32>
    %40 = arith.select %37, %38, %39 : vector<128x65xi1>, vector<128x65xf32>
    %41 = arith.addf %34, %40 : vector<128x65xf32>
    %42 = vector.extract_strided_slice %1 {offsets = [0, 5], sizes = [128, 1], strides = [1, 1]} : vector<128x6xi32> to vector<128x1xi32>
    %43 = vector.broadcast %42 : vector<128x1xi32> to vector<128x65xi32>
    %44 = arith.cmpi eq, %5, %43 : vector<128x65xi32>
    %cst_19 = arith.constant 1.000000e+00 : f32
    %cst_20 = arith.constant 0.000000e+00 : f32
    %45 = vector.broadcast %cst_19 : f32 to vector<128x65xf32>
    %46 = vector.broadcast %cst_20 : f32 to vector<128x65xf32>
    %47 = arith.select %44, %45, %46 : vector<128x65xi1>, vector<128x65xf32>
    %48 = arith.addf %41, %47 : vector<128x65xf32>
    %49 = arith.truncf %48 : vector<128x65xf32> to vector<128x65xbf16>
    %50 = tpu.reciprocal %2 {approx = true} : vector<128x1xf32> -> vector<128x1xf32>
    %c0_21 = arith.constant 0 : index
    %c0_22 = arith.constant 0 : index
    %51 = vector.load %arg7[%c0_21, %c0_22] : memref<65x32xbf16, #tpu.memory_space<vmem>>, vector<65x32xbf16>
    %cst_23 = arith.constant dense<0.000000e+00> : vector<128x32xf32>
    %52 = tpu.matmul %49, %51, %cst_23 {dimension_numbers = #tpu.dot_dimension_numbers<[1], [0], [0], [1], [0, 0, 1, 1], [], []>} : vector<128x65xbf16>, vector<65x32xbf16>, vector<128x32xf32> -> vector<128x32xf32>
    %53 = vector.broadcast %50 : vector<128x1xf32> to vector<128x32xf32>
    %54 = arith.mulf %52, %53 : vector<128x32xf32>
    %c0_24 = arith.constant 0 : index
    %c0_25 = arith.constant 0 : index
    %55 = vector.load %arg8[%c0_24, %c0_25] : memref<4x32xbf16, #tpu.memory_space<vmem>>, vector<4x32xbf16>
    %cst_26 = arith.constant dense<0.000000e+00> : vector<128x32xf32>
    %56 = tpu.matmul %3, %55, %cst_26 {dimension_numbers = #tpu.dot_dimension_numbers<[1], [0], [0], [1], [0, 0, 1, 1], [], []>} : vector<128x4xbf16>, vector<4x32xbf16>, vector<128x32xf32> -> vector<128x32xf32>
    %57 = arith.addf %54, %56 : vector<128x32xf32>
    %c0_27 = arith.constant 0 : index
    %c0_28 = arith.constant 0 : index
    %58 = vector.load %arg9[%c0_27, %c0_28] : memref<1x32xf32, #tpu.memory_space<vmem>>, vector<1x32xf32>
    %59 = vector.broadcast %58 : vector<1x32xf32> to vector<128x32xf32>
    %60 = arith.addf %57, %59 : vector<128x32xf32>
    %61 = vector.extract_strided_slice %0 {offsets = [0, 0], sizes = [128, 1], strides = [1, 1]} : vector<128x4xi32> to vector<128x1xi32>
    %62 = vector.broadcast %61 : vector<128x1xi32> to vector<128x65xi32>
    %63 = arith.cmpi eq, %5, %62 : vector<128x65xi32>
    %cst_29 = arith.constant 1.000000e+00 : f32
    %cst_30 = arith.constant 0.000000e+00 : f32
    %64 = vector.broadcast %cst_29 : f32 to vector<128x65xf32>
    %65 = vector.broadcast %cst_30 : f32 to vector<128x65xf32>
    %66 = arith.select %63, %64, %65 : vector<128x65xi1>, vector<128x65xf32>
    %67 = arith.truncf %66 : vector<128x65xf32> to vector<128x65xbf16>
    %c0_31 = arith.constant 0 : index
    %c0_32 = arith.constant 0 : index
    %c0_33 = arith.constant 0 : index
    %68 = vector.load %arg6[%c0_31, %c0_32, %c0_33] : memref<4x65x32xbf16, #tpu.memory_space<vmem>>, vector<1x65x32xbf16>
    %69 = vector.shape_cast %68 : vector<1x65x32xbf16> to vector<65x32xbf16>
    %cst_34 = arith.constant dense<0.000000e+00> : vector<128x32xf32>
    %70 = tpu.matmul %67, %69, %cst_34 {dimension_numbers = #tpu.dot_dimension_numbers<[1], [0], [0], [1], [0, 0, 1, 1], [], []>} : vector<128x65xbf16>, vector<65x32xbf16>, vector<128x32xf32> -> vector<128x32xf32>
    %71 = arith.addf %60, %70 : vector<128x32xf32>
    %72 = vector.extract_strided_slice %0 {offsets = [0, 1], sizes = [128, 1], strides = [1, 1]} : vector<128x4xi32> to vector<128x1xi32>
    %73 = vector.broadcast %72 : vector<128x1xi32> to vector<128x65xi32>
    %74 = arith.cmpi eq, %5, %73 : vector<128x65xi32>
    %cst_35 = arith.constant 1.000000e+00 : f32
    %cst_36 = arith.constant 0.000000e+00 : f32
    %75 = vector.broadcast %cst_35 : f32 to vector<128x65xf32>
    %76 = vector.broadcast %cst_36 : f32 to vector<128x65xf32>
    %77 = arith.select %74, %75, %76 : vector<128x65xi1>, vector<128x65xf32>
    %78 = arith.truncf %77 : vector<128x65xf32> to vector<128x65xbf16>
    %c1 = arith.constant 1 : index
    %c0_37 = arith.constant 0 : index
    %c0_38 = arith.constant 0 : index
    %79 = vector.load %arg6[%c1, %c0_37, %c0_38] : memref<4x65x32xbf16, #tpu.memory_space<vmem>>, vector<1x65x32xbf16>
    %80 = vector.shape_cast %79 : vector<1x65x32xbf16> to vector<65x32xbf16>
    %cst_39 = arith.constant dense<0.000000e+00> : vector<128x32xf32>
    %81 = tpu.matmul %78, %80, %cst_39 {dimension_numbers = #tpu.dot_dimension_numbers<[1], [0], [0], [1], [0, 0, 1, 1], [], []>} : vector<128x65xbf16>, vector<65x32xbf16>, vector<128x32xf32> -> vector<128x32xf32>
    %82 = arith.addf %71, %81 : vector<128x32xf32>
    %83 = vector.extract_strided_slice %0 {offsets = [0, 2], sizes = [128, 1], strides = [1, 1]} : vector<128x4xi32> to vector<128x1xi32>
    %84 = vector.broadcast %83 : vector<128x1xi32> to vector<128x65xi32>
    %85 = arith.cmpi eq, %5, %84 : vector<128x65xi32>
    %cst_40 = arith.constant 1.000000e+00 : f32
    %cst_41 = arith.constant 0.000000e+00 : f32
    %86 = vector.broadcast %cst_40 : f32 to vector<128x65xf32>
    %87 = vector.broadcast %cst_41 : f32 to vector<128x65xf32>
    %88 = arith.select %85, %86, %87 : vector<128x65xi1>, vector<128x65xf32>
    %89 = arith.truncf %88 : vector<128x65xf32> to vector<128x65xbf16>
    %c2 = arith.constant 2 : index
    %c0_42 = arith.constant 0 : index
    %c0_43 = arith.constant 0 : index
    %90 = vector.load %arg6[%c2, %c0_42, %c0_43] : memref<4x65x32xbf16, #tpu.memory_space<vmem>>, vector<1x65x32xbf16>
    %91 = vector.shape_cast %90 : vector<1x65x32xbf16> to vector<65x32xbf16>
    %cst_44 = arith.constant dense<0.000000e+00> : vector<128x32xf32>
    %92 = tpu.matmul %89, %91, %cst_44 {dimension_numbers = #tpu.dot_dimension_numbers<[1], [0], [0], [1], [0, 0, 1, 1], [], []>} : vector<128x65xbf16>, vector<65x32xbf16>, vector<128x32xf32> -> vector<128x32xf32>
    %93 = arith.addf %82, %92 : vector<128x32xf32>
    %94 = vector.extract_strided_slice %0 {offsets = [0, 3], sizes = [128, 1], strides = [1, 1]} : vector<128x4xi32> to vector<128x1xi32>
    %95 = vector.broadcast %94 : vector<128x1xi32> to vector<128x65xi32>
    %96 = arith.cmpi eq, %5, %95 : vector<128x65xi32>
    %cst_45 = arith.constant 1.000000e+00 : f32
    %cst_46 = arith.constant 0.000000e+00 : f32
    %97 = vector.broadcast %cst_45 : f32 to vector<128x65xf32>
    %98 = vector.broadcast %cst_46 : f32 to vector<128x65xf32>
    %99 = arith.select %96, %97, %98 : vector<128x65xi1>, vector<128x65xf32>
    %100 = arith.truncf %99 : vector<128x65xf32> to vector<128x65xbf16>
    %c3 = arith.constant 3 : index
    %c0_47 = arith.constant 0 : index
    %c0_48 = arith.constant 0 : index
    %101 = vector.load %arg6[%c3, %c0_47, %c0_48] : memref<4x65x32xbf16, #tpu.memory_space<vmem>>, vector<1x65x32xbf16>
    %102 = vector.shape_cast %101 : vector<1x65x32xbf16> to vector<65x32xbf16>
    %cst_49 = arith.constant dense<0.000000e+00> : vector<128x32xf32>
    %103 = tpu.matmul %100, %102, %cst_49 {dimension_numbers = #tpu.dot_dimension_numbers<[1], [0], [0], [1], [0, 0, 1, 1], [], []>} : vector<128x65xbf16>, vector<65x32xbf16>, vector<128x32xf32> -> vector<128x32xf32>
    %104 = arith.addf %93, %103 : vector<128x32xf32>
    %cst_50 = arith.constant 0.000000e+00 : f32
    %105 = vector.broadcast %cst_50 : f32 to vector<128x32xf32>
    %106 = arith.maximumf %104, %105 : vector<128x32xf32>
    %107 = arith.truncf %106 : vector<128x32xf32> to vector<128x32xbf16>
    %c0_51 = arith.constant 0 : index
    %c0_52 = arith.constant 0 : index
    %108 = vector.load %arg10[%c0_51, %c0_52] : memref<32x16xbf16, #tpu.memory_space<vmem>>, vector<32x16xbf16>
    %cst_53 = arith.constant dense<0.000000e+00> : vector<128x16xf32>
    %109 = tpu.matmul %107, %108, %cst_53 {dimension_numbers = #tpu.dot_dimension_numbers<[1], [0], [0], [1], [0, 0, 1, 1], [], []>} : vector<128x32xbf16>, vector<32x16xbf16>, vector<128x16xf32> -> vector<128x16xf32>
    %c0_54 = arith.constant 0 : index
    %c0_55 = arith.constant 0 : index
    %110 = vector.load %arg11[%c0_54, %c0_55] : memref<1x16xf32, #tpu.memory_space<vmem>>, vector<1x16xf32>
    %111 = vector.broadcast %110 : vector<1x16xf32> to vector<128x16xf32>
    %112 = arith.addf %109, %111 : vector<128x16xf32>
    %c0_56 = arith.constant 0 : index
    %c0_57 = arith.constant 0 : index
    %113 = vector.load %arg12[%c0_56, %c0_57] : memref<32x16xbf16, #tpu.memory_space<vmem>>, vector<32x16xbf16>
    %cst_58 = arith.constant dense<0.000000e+00> : vector<128x16xf32>
    %114 = tpu.matmul %107, %113, %cst_58 {dimension_numbers = #tpu.dot_dimension_numbers<[1], [0], [0], [1], [0, 0, 1, 1], [], []>} : vector<128x32xbf16>, vector<32x16xbf16>, vector<128x16xf32> -> vector<128x16xf32>
    %c0_59 = arith.constant 0 : index
    %c0_60 = arith.constant 0 : index
    %115 = vector.load %arg13[%c0_59, %c0_60] : memref<1x16xf32, #tpu.memory_space<vmem>>, vector<1x16xf32>
    %116 = vector.broadcast %115 : vector<1x16xf32> to vector<128x16xf32>
    %117 = arith.addf %114, %116 : vector<128x16xf32>
    %cst_61 = arith.constant 5.000000e-01 : f32
    %118 = vector.broadcast %cst_61 : f32 to vector<128x16xf32>
    %119 = arith.mulf %118, %117 : vector<128x16xf32>
    %120 = math.exp %119 : vector<128x16xf32>
    %121 = arith.mulf %4, %120 : vector<128x16xf32>
    %122 = arith.addf %112, %121 : vector<128x16xf32>
    %123 = arith.truncf %122 : vector<128x16xf32> to vector<128x16xbf16>
    %c0_62 = arith.constant 0 : index
    %c0_63 = arith.constant 0 : index
    %124 = vector.load %arg14[%c0_62, %c0_63] : memref<16x32xbf16, #tpu.memory_space<vmem>>, vector<16x32xbf16>
    %cst_64 = arith.constant dense<0.000000e+00> : vector<128x32xf32>
    %125 = tpu.matmul %123, %124, %cst_64 {dimension_numbers = #tpu.dot_dimension_numbers<[1], [0], [0], [1], [0, 0, 1, 1], [], []>} : vector<128x16xbf16>, vector<16x32xbf16>, vector<128x32xf32> -> vector<128x32xf32>
    %c0_65 = arith.constant 0 : index
    %c0_66 = arith.constant 0 : index
    %126 = vector.load %arg15[%c0_65, %c0_66] : memref<65x32xbf16, #tpu.memory_space<vmem>>, vector<65x32xbf16>
    %cst_67 = arith.constant dense<0.000000e+00> : vector<128x32xf32>
    %127 = tpu.matmul %49, %126, %cst_67 {dimension_numbers = #tpu.dot_dimension_numbers<[1], [0], [0], [1], [0, 0, 1, 1], [], []>} : vector<128x65xbf16>, vector<65x32xbf16>, vector<128x32xf32> -> vector<128x32xf32>
    %128 = vector.broadcast %50 : vector<128x1xf32> to vector<128x32xf32>
    %129 = arith.mulf %127, %128 : vector<128x32xf32>
    %130 = arith.addf %125, %129 : vector<128x32xf32>
    %c0_68 = arith.constant 0 : index
    %c0_69 = arith.constant 0 : index
    %131 = vector.load %arg16[%c0_68, %c0_69] : memref<4x32xbf16, #tpu.memory_space<vmem>>, vector<4x32xbf16>
    %cst_70 = arith.constant dense<0.000000e+00> : vector<128x32xf32>
    %132 = tpu.matmul %3, %131, %cst_70 {dimension_numbers = #tpu.dot_dimension_numbers<[1], [0], [0], [1], [0, 0, 1, 1], [], []>} : vector<128x4xbf16>, vector<4x32xbf16>, vector<128x32xf32> -> vector<128x32xf32>
    %133 = arith.addf %130, %132 : vector<128x32xf32>
    %c0_71 = arith.constant 0 : index
    %c0_72 = arith.constant 0 : index
    %134 = vector.load %arg17[%c0_71, %c0_72] : memref<1x32xf32, #tpu.memory_space<vmem>>, vector<1x32xf32>
    %135 = vector.broadcast %134 : vector<1x32xf32> to vector<128x32xf32>
    %136 = arith.addf %133, %135 : vector<128x32xf32>
    %cst_73 = arith.constant 0.000000e+00 : f32
    %137 = vector.broadcast %cst_73 : f32 to vector<128x32xf32>
    %138 = arith.maximumf %136, %137 : vector<128x32xf32>
    %139 = arith.truncf %138 : vector<128x32xf32> to vector<128x32xbf16>
    %c0_74 = arith.constant 0 : index
    %c0_75 = arith.constant 0 : index
    %140 = vector.load %arg18[%c0_74, %c0_75] : memref<32x256xbf16, #tpu.memory_space<vmem>>, vector<32x256xbf16>
    %cst_76 = arith.constant dense<0.000000e+00> : vector<128x256xf32>
    %141 = tpu.matmul %139, %140, %cst_76 {dimension_numbers = #tpu.dot_dimension_numbers<[1], [0], [0], [1], [0, 0, 1, 1], [], []>} : vector<128x32xbf16>, vector<32x256xbf16>, vector<128x256xf32> -> vector<128x256xf32>
    %c0_77 = arith.constant 0 : index
    %c0_78 = arith.constant 0 : index
    %142 = vector.load %arg19[%c0_77, %c0_78] : memref<1x256xf32, #tpu.memory_space<vmem>>, vector<1x256xf32>
    %143 = vector.broadcast %142 : vector<1x256xf32> to vector<128x256xf32>
    %144 = arith.addf %141, %143 : vector<128x256xf32>
    %c0_79 = arith.constant 0 : index
    %c0_80 = arith.constant 0 : index
    %145 = vector.load %arg20[%c0_79, %c0_80] : memref<65x32xbf16, #tpu.memory_space<vmem>>, vector<65x32xbf16>
    %cst_81 = arith.constant dense<0.000000e+00> : vector<128x32xf32>
    %146 = tpu.matmul %49, %145, %cst_81 {dimension_numbers = #tpu.dot_dimension_numbers<[1], [0], [0], [1], [0, 0, 1, 1], [], []>} : vector<128x65xbf16>, vector<65x32xbf16>, vector<128x32xf32> -> vector<128x32xf32>
    %147 = vector.broadcast %50 : vector<128x1xf32> to vector<128x32xf32>
    %148 = arith.mulf %146, %147 : vector<128x32xf32>
    %c0_82 = arith.constant 0 : index
    %c0_83 = arith.constant 0 : index
    %149 = vector.load %arg21[%c0_82, %c0_83] : memref<4x32xbf16, #tpu.memory_space<vmem>>, vector<4x32xbf16>
    %cst_84 = arith.constant dense<0.000000e+00> : vector<128x32xf32>
    %150 = tpu.matmul %3, %149, %cst_84 {dimension_numbers = #tpu.dot_dimension_numbers<[1], [0], [0], [1], [0, 0, 1, 1], [], []>} : vector<128x4xbf16>, vector<4x32xbf16>, vector<128x32xf32> -> vector<128x32xf32>
    %151 = arith.addf %148, %150 : vector<128x32xf32>
    %c0_85 = arith.constant 0 : index
    %c0_86 = arith.constant 0 : index
    %152 = vector.load %arg22[%c0_85, %c0_86] : memref<1x32xf32, #tpu.memory_space<vmem>>, vector<1x32xf32>
    %153 = vector.broadcast %152 : vector<1x32xf32> to vector<128x32xf32>
    %154 = arith.addf %151, %153 : vector<128x32xf32>
    %cst_87 = arith.constant 0.000000e+00 : f32
    %155 = vector.broadcast %cst_87 : f32 to vector<128x32xf32>
    %156 = arith.maximumf %154, %155 : vector<128x32xf32>
    %157 = arith.truncf %156 : vector<128x32xf32> to vector<128x32xbf16>
    %c0_88 = arith.constant 0 : index
    %c0_89 = arith.constant 0 : index
    %158 = vector.load %arg23[%c0_88, %c0_89] : memref<32x16xbf16, #tpu.memory_space<vmem>>, vector<32x16xbf16>
    %cst_90 = arith.constant dense<0.000000e+00> : vector<128x16xf32>
    %159 = tpu.matmul %157, %158, %cst_90 {dimension_numbers = #tpu.dot_dimension_numbers<[1], [0], [0], [1], [0, 0, 1, 1], [], []>} : vector<128x32xbf16>, vector<32x16xbf16>, vector<128x16xf32> -> vector<128x16xf32>
    %c0_91 = arith.constant 0 : index
    %c0_92 = arith.constant 0 : index
    %160 = vector.load %arg24[%c0_91, %c0_92] : memref<1x16xf32, #tpu.memory_space<vmem>>, vector<1x16xf32>
    %161 = vector.broadcast %160 : vector<1x16xf32> to vector<128x16xf32>
    %162 = arith.addf %159, %161 : vector<128x16xf32>
    %c0_93 = arith.constant 0 : index
    %c0_94 = arith.constant 0 : index
    %163 = vector.load %arg25[%c0_93, %c0_94] : memref<32x16xbf16, #tpu.memory_space<vmem>>, vector<32x16xbf16>
    %cst_95 = arith.constant dense<0.000000e+00> : vector<128x16xf32>
    %164 = tpu.matmul %157, %163, %cst_95 {dimension_numbers = #tpu.dot_dimension_numbers<[1], [0], [0], [1], [0, 0, 1, 1], [], []>} : vector<128x32xbf16>, vector<32x16xbf16>, vector<128x16xf32> -> vector<128x16xf32>
    %c0_96 = arith.constant 0 : index
    %c0_97 = arith.constant 0 : index
    %165 = vector.load %arg26[%c0_96, %c0_97] : memref<1x16xf32, #tpu.memory_space<vmem>>, vector<1x16xf32>
    %166 = vector.broadcast %165 : vector<1x16xf32> to vector<128x16xf32>
    %167 = arith.addf %164, %166 : vector<128x16xf32>
    %c0_98 = arith.constant 0 : index
    %c0_99 = arith.constant 0 : index
    %168 = vector.load %arg27[%c0_98, %c0_99] : memref<128x256xf32, #tpu.memory_space<vmem>>, vector<128x256xf32>
    tpu.vector_store %arg27[%c0_98, %c0_99], %144 {strides = array<i32>} : memref<128x256xf32, #tpu.memory_space<vmem>>, vector<128x256xf32>,
    %c0_100 = arith.constant 0 : index
    %c0_101 = arith.constant 0 : index
    %169 = vector.load %arg28[%c0_100, %c0_101] : memref<128x16xf32, #tpu.memory_space<vmem>>, vector<128x16xf32>
    tpu.vector_store %arg28[%c0_100, %c0_101], %112 {strides = array<i32>} : memref<128x16xf32, #tpu.memory_space<vmem>>, vector<128x16xf32>,
    %c0_102 = arith.constant 0 : index
    %c0_103 = arith.constant 0 : index
    %170 = vector.load %arg29[%c0_102, %c0_103] : memref<128x16xf32, #tpu.memory_space<vmem>>, vector<128x16xf32>
    tpu.vector_store %arg29[%c0_102, %c0_103], %117 {strides = array<i32>} : memref<128x16xf32, #tpu.memory_space<vmem>>, vector<128x16xf32>,
    %c0_104 = arith.constant 0 : index
    %c0_105 = arith.constant 0 : index
    %171 = vector.load %arg30[%c0_104, %c0_105] : memref<128x16xf32, #tpu.memory_space<vmem>>, vector<128x16xf32>
    tpu.vector_store %arg30[%c0_104, %c0_105], %162 {strides = array<i32>} : memref<128x16xf32, #tpu.memory_space<vmem>>, vector<128x16xf32>,
    %c0_106 = arith.constant 0 : index
    %c0_107 = arith.constant 0 : index
    %172 = vector.load %arg31[%c0_106, %c0_107] : memref<128x16xf32, #tpu.memory_space<vmem>>, vector<128x16xf32>
    tpu.vector_store %arg31[%c0_106, %c0_107], %167 {strides = array<i32>} : memref<128x16xf32, #tpu.memory_space<vmem>>, vector<128x16xf32>,
    %c0_108 = arith.constant 0 : index
    %c0_109 = arith.constant 0 : index
    %173 = vector.load %arg32[%c0_108, %c0_109] : memref<128x32xf32, #tpu.memory_space<vmem>>, vector<128x32xf32>
    tpu.vector_store %arg32[%c0_108, %c0_109], %106 {strides = array<i32>} : memref<128x32xf32, #tpu.memory_space<vmem>>, vector<128x32xf32>,
    return
  }
  func.func @transform_0(%arg0: i32) -> (i32, i32) {
    %c0_i32 = arith.constant 0 : i32
    %c0_i32_0 = arith.constant 0 : i32
    return %arg0, %c0_i32 : i32, i32
  }
  func.func @transform_1(%arg0: i32) -> (i32, i32) {
    %c0_i32 = arith.constant 0 : i32
    %c0_i32_0 = arith.constant 0 : i32
    return %arg0, %c0_i32 : i32, i32
  }
  func.func @transform_2(%arg0: i32) -> (i32, i32) {
    %c0_i32 = arith.constant 0 : i32
    %c0_i32_0 = arith.constant 0 : i32
    return %arg0, %c0_i32 : i32, i32
  }
  func.func @transform_3(%arg0: i32) -> (i32, i32) {
    %c0_i32 = arith.constant 0 : i32
    %c0_i32_0 = arith.constant 0 : i32
    return %arg0, %c0_i32 : i32, i32
  }
  func.func @transform_4(%arg0: i32) -> (i32, i32) {
    %c0_i32 = arith.constant 0 : i32
    %c0_i32_0 = arith.constant 0 : i32
    return %arg0, %c0_i32 : i32, i32
  }
  func.func @transform_5(%arg0: i32) -> (i32, i32, i32) {
    %c0_i32 = arith.constant 0 : i32
    %c0_i32_0 = arith.constant 0 : i32
    %c0_i32_1 = arith.constant 0 : i32
    %c0_i32_2 = arith.constant 0 : i32
    return %c0_i32, %c0_i32_0, %c0_i32_1 : i32, i32, i32
  }
  func.func @transform_6(%arg0: i32) -> (i32, i32) {
    %c0_i32 = arith.constant 0 : i32
    %c0_i32_0 = arith.constant 0 : i32
    %c0_i32_1 = arith.constant 0 : i32
    return %c0_i32, %c0_i32_0 : i32, i32
  }
  func.func @transform_7(%arg0: i32) -> (i32, i32) {
    %c0_i32 = arith.constant 0 : i32
    %c0_i32_0 = arith.constant 0 : i32
    %c0_i32_1 = arith.constant 0 : i32
    return %c0_i32, %c0_i32_0 : i32, i32
  }
  func.func @transform_8(%arg0: i32) -> (i32, i32) {
    %c0_i32 = arith.constant 0 : i32
    %c0_i32_0 = arith.constant 0 : i32
    %c0_i32_1 = arith.constant 0 : i32
    return %c0_i32, %c0_i32_0 : i32, i32
  }
  func.func @transform_9(%arg0: i32) -> (i32, i32) {
    %c0_i32 = arith.constant 0 : i32
    %c0_i32_0 = arith.constant 0 : i32
    %c0_i32_1 = arith.constant 0 : i32
    return %c0_i32, %c0_i32_0 : i32, i32
  }
  func.func @transform_10(%arg0: i32) -> (i32, i32) {
    %c0_i32 = arith.constant 0 : i32
    %c0_i32_0 = arith.constant 0 : i32
    %c0_i32_1 = arith.constant 0 : i32
    return %c0_i32, %c0_i32_0 : i32, i32
  }
  func.func @transform_11(%arg0: i32) -> (i32, i32) {
    %c0_i32 = arith.constant 0 : i32
    %c0_i32_0 = arith.constant 0 : i32
    %c0_i32_1 = arith.constant 0 : i32
    return %c0_i32, %c0_i32_0 : i32, i32
  }
  func.func @transform_12(%arg0: i32) -> (i32, i32) {
    %c0_i32 = arith.constant 0 : i32
    %c0_i32_0 = arith.constant 0 : i32
    %c0_i32_1 = arith.constant 0 : i32
    return %c0_i32, %c0_i32_0 : i32, i32
  }
  func.func @transform_13(%arg0: i32) -> (i32, i32) {
    %c0_i32 = arith.constant 0 : i32
    %c0_i32_0 = arith.constant 0 : i32
    %c0_i32_1 = arith.constant 0 : i32
    return %c0_i32, %c0_i32_0 : i32, i32
  }
  func.func @transform_14(%arg0: i32) -> (i32, i32) {
    %c0_i32 = arith.constant 0 : i32
    %c0_i32_0 = arith.constant 0 : i32
    %c0_i32_1 = arith.constant 0 : i32
    return %c0_i32, %c0_i32_0 : i32, i32
  }
  func.func @transform_15(%arg0: i32) -> (i32, i32) {
    %c0_i32 = arith.constant 0 : i32
    %c0_i32_0 = arith.constant 0 : i32
    %c0_i32_1 = arith.constant 0 : i32
    return %c0_i32, %c0_i32_0 : i32, i32
  }
  func.func @transform_16(%arg0: i32) -> (i32, i32) {
    %c0_i32 = arith.constant 0 : i32
    %c0_i32_0 = arith.constant 0 : i32
    %c0_i32_1 = arith.constant 0 : i32
    return %c0_i32, %c0_i32_0 : i32, i32
  }
  func.func @transform_17(%arg0: i32) -> (i32, i32) {
    %c0_i32 = arith.constant 0 : i32
    %c0_i32_0 = arith.constant 0 : i32
    %c0_i32_1 = arith.constant 0 : i32
    return %c0_i32, %c0_i32_0 : i32, i32
  }
  func.func @transform_18(%arg0: i32) -> (i32, i32) {
    %c0_i32 = arith.constant 0 : i32
    %c0_i32_0 = arith.constant 0 : i32
    %c0_i32_1 = arith.constant 0 : i32
    return %c0_i32, %c0_i32_0 : i32, i32
  }
  func.func @transform_19(%arg0: i32) -> (i32, i32) {
    %c0_i32 = arith.constant 0 : i32
    %c0_i32_0 = arith.constant 0 : i32
    %c0_i32_1 = arith.constant 0 : i32
    return %c0_i32, %c0_i32_0 : i32, i32
  }
  func.func @transform_20(%arg0: i32) -> (i32, i32) {
    %c0_i32 = arith.constant 0 : i32
    %c0_i32_0 = arith.constant 0 : i32
    %c0_i32_1 = arith.constant 0 : i32
    return %c0_i32, %c0_i32_0 : i32, i32
  }
  func.func @transform_21(%arg0: i32) -> (i32, i32) {
    %c0_i32 = arith.constant 0 : i32
    %c0_i32_0 = arith.constant 0 : i32
    %c0_i32_1 = arith.constant 0 : i32
    return %c0_i32, %c0_i32_0 : i32, i32
  }
  func.func @transform_22(%arg0: i32) -> (i32, i32) {
    %c0_i32 = arith.constant 0 : i32
    %c0_i32_0 = arith.constant 0 : i32
    %c0_i32_1 = arith.constant 0 : i32
    return %c0_i32, %c0_i32_0 : i32, i32
  }
  func.func @transform_23(%arg0: i32) -> (i32, i32) {
    %c0_i32 = arith.constant 0 : i32
    %c0_i32_0 = arith.constant 0 : i32
    %c0_i32_1 = arith.constant 0 : i32
    return %c0_i32, %c0_i32_0 : i32, i32
  }
  func.func @transform_24(%arg0: i32) -> (i32, i32) {
    %c0_i32 = arith.constant 0 : i32
    %c0_i32_0 = arith.constant 0 : i32
    %c0_i32_1 = arith.constant 0 : i32
    return %c0_i32, %c0_i32_0 : i32, i32
  }
  func.func @transform_25(%arg0: i32) -> (i32, i32) {
    %c0_i32 = arith.constant 0 : i32
    %c0_i32_0 = arith.constant 0 : i32
    %c0_i32_1 = arith.constant 0 : i32
    return %c0_i32, %c0_i32_0 : i32, i32
  }
  func.func @transform_26(%arg0: i32) -> (i32, i32) {
    %c0_i32 = arith.constant 0 : i32
    %c0_i32_0 = arith.constant 0 : i32
    return %arg0, %c0_i32 : i32, i32
  }
  func.func @transform_27(%arg0: i32) -> (i32, i32) {
    %c0_i32 = arith.constant 0 : i32
    %c0_i32_0 = arith.constant 0 : i32
    return %arg0, %c0_i32 : i32, i32
  }
  func.func @transform_28(%arg0: i32) -> (i32, i32) {
    %c0_i32 = arith.constant 0 : i32
    %c0_i32_0 = arith.constant 0 : i32
    return %arg0, %c0_i32 : i32, i32
  }
  func.func @transform_29(%arg0: i32) -> (i32, i32) {
    %c0_i32 = arith.constant 0 : i32
    %c0_i32_0 = arith.constant 0 : i32
    return %arg0, %c0_i32 : i32, i32
  }
  func.func @transform_30(%arg0: i32) -> (i32, i32) {
    %c0_i32 = arith.constant 0 : i32
    %c0_i32_0 = arith.constant 0 : i32
    return %arg0, %c0_i32 : i32, i32
  }
  func.func @transform_31(%arg0: i32) -> (i32, i32) {
    %c0_i32 = arith.constant 0 : i32
    %c0_i32_0 = arith.constant 0 : i32
    return %arg0, %c0_i32 : i32, i32
  }
}

</mosaic_0001>

<llo_original>
// kernel: forward.1
$region0: #{forward.1}
  #allocation0 [shape = 'u32[]', space=smem, size = 0x4, offset = 0x4, fixed_abs, tag = 'smem constant byte address 0x4 - core index']
  #allocation1 [shape = 'u32[144,128]{1,0:T(1,128)}', space=vmem, size = 0x12000, scoped, tag = 'internal scratch']
  %s0 = inlined_call_operand.smem [shape: u32[32], index: -1, kind: input, shape index: {}]
  %s1 = sld [smem:[%s0]]
  %s2 = scalar_lea.smem %s0, 1
  %s3 = sld [smem:[%s2]]
  %s4 = scalar_lea.smem %s0, 2
  %s5 = sld [smem:[%s4]]
  %s6 = scalar_lea.smem %s0, 3
  %s7 = sld [smem:[%s6]]
  %s8 = scalar_lea.smem %s0, 4
  %s9 = sld [smem:[%s8]]
  %s10 = scalar_lea.smem %s0, 5
  %s11 = sld [smem:[%s10]]
  %s12 = scalar_lea.smem %s0, 6
  %s13 = sld [smem:[%s12]]
  %s14 = scalar_lea.smem %s0, 7
  %s15 = sld [smem:[%s14]]
  %s16 = scalar_lea.smem %s0, 8
  %s17 = sld [smem:[%s16]]
  %s18 = scalar_lea.smem %s0, 9
  %s19 = sld [smem:[%s18]]
  %s20 = scalar_lea.smem %s0, 10
  %s21 = sld [smem:[%s20]]
  %s22 = scalar_lea.smem %s0, 11
  %s23 = sld [smem:[%s22]]
  %s24 = scalar_lea.smem %s0, 12
  %s25 = sld [smem:[%s24]]
  %s26 = scalar_lea.smem %s0, 13
  %s27 = sld [smem:[%s26]]
  %s28 = scalar_lea.smem %s0, 14
  %s29 = sld [smem:[%s28]]
  %s30 = scalar_lea.smem %s0, 15
  %s31 = sld [smem:[%s30]]
  %s32 = scalar_lea.smem %s0, 16
  %s33 = sld [smem:[%s32]]
  %s34 = scalar_lea.smem %s0, 17
  %s35 = sld [smem:[%s34]]
  %s36 = scalar_lea.smem %s0, 18
  %s37 = sld [smem:[%s36]]
  %s38 = scalar_lea.smem %s0, 19
  %s39 = sld [smem:[%s38]]
  %s40 = scalar_lea.smem %s0, 20
  %s41 = sld [smem:[%s40]]
  %s42 = scalar_lea.smem %s0, 21
  %s43 = sld [smem:[%s42]]
  %s44 = scalar_lea.smem %s0, 22
  %s45 = sld [smem:[%s44]]
  %s46 = scalar_lea.smem %s0, 23
  %s47 = sld [smem:[%s46]]
  %s48 = scalar_lea.smem %s0, 24
  %s49 = sld [smem:[%s48]]
  %s50 = scalar_lea.smem %s0, 25
  %s51 = sld [smem:[%s50]]
  %s52 = scalar_lea.smem %s0, 26
  %s53 = sld [smem:[%s52]]
  %s54 = scalar_lea.smem %s0, 27
  %s55 = sld [smem:[%s54]]
  %s56 = scalar_lea.smem %s0, 28
  %s57 = sld [smem:[%s56]]
  %s58 = scalar_lea.smem %s0, 29
  %s59 = sld [smem:[%s58]]
  %s60 = scalar_lea.smem %s0, 30
  %s61 = sld [smem:[%s60]]
  %s62 = scalar_lea.smem %s0, 31
  %s63 = sld [smem:[%s62]]
  %64 = xla_tuple %s53, %s55, %s57, %s59, %s61, %s63
  %s65 = sld [smem:[#allocation0]]
  $region154: #{forward.1} parent=0
    _
  %s67 = ssub.s32 1, %s65
  %s68 = scalar_select 0, %s67, %s65
  // Predicated region
  $region2: #{forward.1} parent=0 // pred_check
    _
  $region3: #{forward.1} parent=0 // pred_check_branch
    %70 = sbr.rel (0) target = $region5
  $region4: #{forward.1} parent=0 // pred_region
    _
  $region5: #{forward.1} parent=0 // pred_fallthru
    _
  // Predicated region
  $region6: #{forward.1} parent=0 // pred_check
    _
  $region7: #{forward.1} parent=0 // pred_check_branch
    %72 = sbr.rel (0) target = $region9
  $region8: #{forward.1} parent=0 // pred_region
    _
  $region9: #{forward.1} parent=0 // pred_fallthru
    _
  // Predicated region
  $region10: #{forward.1} parent=0 // pred_check
    _
  $region11: #{forward.1} parent=0 // pred_check_branch
    %74 = sbr.rel (0) target = $region13
  $region12: #{forward.1} parent=0 // pred_region
    _
  $region13: #{forward.1} parent=0 // pred_fallthru
    _
  // Predicated region
  $region14: #{forward.1} parent=0 // pred_check
    _
  $region15: #{forward.1} parent=0 // pred_check_branch
    %76 = sbr.rel (0) target = $region17
  $region16: #{forward.1} parent=0 // pred_region
    _
  $region17: #{forward.1} parent=0 // pred_fallthru
    _
  // Predicated region
  $region18: #{forward.1} parent=0 // pred_check
    _
  $region19: #{forward.1} parent=0 // pred_check_branch
    %78 = sbr.rel (0) target = $region21
  $region20: #{forward.1} parent=0 // pred_region
    _
  $region21: #{forward.1} parent=0 // pred_fallthru
    _
  // Predicated region
  $region22: #{forward.1} parent=0 // pred_check
    _
  $region23: #{forward.1} parent=0 // pred_check_branch
    %80 = sbr.rel (0) target = $region25
  $region24: #{forward.1} parent=0 // pred_region
    _
  $region25: #{forward.1} parent=0 // pred_fallthru
    _
  // Predicated region
  $region26: #{forward.1} parent=0 // pred_check
    _
  $region27: #{forward.1} parent=0 // pred_check_branch
    %82 = sbr.rel (0) target = $region29
  $region28: #{forward.1} parent=0 // pred_region
    _
  $region29: #{forward.1} parent=0 // pred_fallthru
    _
  // Predicated region
  $region30: #{forward.1} parent=0 // pred_check
    _
  $region31: #{forward.1} parent=0 // pred_check_branch
    %84 = sbr.rel (0) target = $region33
  $region32: #{forward.1} parent=0 // pred_region
    _
  $region33: #{forward.1} parent=0 // pred_fallthru
    _
  // Predicated region
  $region34: #{forward.1} parent=0 // pred_check
    _
  $region35: #{forward.1} parent=0 // pred_check_branch
    %86 = sbr.rel (0) target = $region37
  $region36: #{forward.1} parent=0 // pred_region
    _
  $region37: #{forward.1} parent=0 // pred_fallthru
    _
  // Predicated region
  $region38: #{forward.1} parent=0 // pred_check
    _
  $region39: #{forward.1} parent=0 // pred_check_branch
    %88 = sbr.rel (0) target = $region41
  $region40: #{forward.1} parent=0 // pred_region
    _
  $region41: #{forward.1} parent=0 // pred_fallthru
    _
  // Predicated region
  $region42: #{forward.1} parent=0 // pred_check
    _
  $region43: #{forward.1} parent=0 // pred_check_branch
    %90 = sbr.rel (0) target = $region45
  $region44: #{forward.1} parent=0 // pred_region
    _
  $region45: #{forward.1} parent=0 // pred_fallthru
    _
  // Predicated region
  $region46: #{forward.1} parent=0 // pred_check
    _
  $region47: #{forward.1} parent=0 // pred_check_branch
    %92 = sbr.rel (0) target = $region49
  $region48: #{forward.1} parent=0 // pred_region
    _
  $region49: #{forward.1} parent=0 // pred_fallthru
    _
  // Predicated region
  $region50: #{forward.1} parent=0 // pred_check
    _
  $region51: #{forward.1} parent=0 // pred_check_branch
    %94 = sbr.rel (0) target = $region53
  $region52: #{forward.1} parent=0 // pred_region
    _
  $region53: #{forward.1} parent=0 // pred_fallthru
    _
  // Predicated region
  $region54: #{forward.1} parent=0 // pred_check
    _
  $region55: #{forward.1} parent=0 // pred_check_branch
    %96 = sbr.rel (0) target = $region57
  $region56: #{forward.1} parent=0 // pred_region
    _
  $region57: #{forward.1} parent=0 // pred_fallthru
    _
  // Predicated region
  $region58: #{forward.1} parent=0 // pred_check
    _
  $region59: #{forward.1} parent=0 // pred_check_branch
    %98 = sbr.rel (0) target = $region61
  $region60: #{forward.1} parent=0 // pred_region
    _
  $region61: #{forward.1} parent=0 // pred_fallthru
    _
  // Predicated region
  $region62: #{forward.1} parent=0 // pred_check
    _
  $region63: #{forward.1} parent=0 // pred_check_branch
    %100 = sbr.rel (0) target = $region65
  $region64: #{forward.1} parent=0 // pred_region
    _
  $region65: #{forward.1} parent=0 // pred_fallthru
    _
  // Predicated region
  $region66: #{forward.1} parent=0 // pred_check
    _
  $region67: #{forward.1} parent=0 // pred_check_branch
    %102 = sbr.rel (0) target = $region69
  $region68: #{forward.1} parent=0 // pred_region
    _
  $region69: #{forward.1} parent=0 // pred_fallthru
    _
  // Predicated region
  $region70: #{forward.1} parent=0 // pred_check
    _
  $region71: #{forward.1} parent=0 // pred_check_branch
    %104 = sbr.rel (0) target = $region73
  $region72: #{forward.1} parent=0 // pred_region
    _
  $region73: #{forward.1} parent=0 // pred_fallthru
    _
  // Predicated region
  $region74: #{forward.1} parent=0 // pred_check
    _
  $region75: #{forward.1} parent=0 // pred_check_branch
    %106 = sbr.rel (0) target = $region77
  $region76: #{forward.1} parent=0 // pred_region
    _
  $region77: #{forward.1} parent=0 // pred_fallthru
    _
  // Predicated region
  $region78: #{forward.1} parent=0 // pred_check
    _
  $region79: #{forward.1} parent=0 // pred_check_branch
    %108 = sbr.rel (0) target = $region81
  $region80: #{forward.1} parent=0 // pred_region
    _
  $region81: #{forward.1} parent=0 // pred_fallthru
    _
  // Predicated region
  $region82: #{forward.1} parent=0 // pred_check
    _
  $region83: #{forward.1} parent=0 // pred_check_branch
    %110 = sbr.rel (0) target = $region85
  $region84: #{forward.1} parent=0 // pred_region
    _
  $region85: #{forward.1} parent=0 // pred_fallthru
    _
  // Predicated region
  $region86: #{forward.1} parent=0 // pred_check
    _
  $region87: #{forward.1} parent=0 // pred_check_branch
    %112 = sbr.rel (0) target = $region89
  $region88: #{forward.1} parent=0 // pred_region
    _
  $region89: #{forward.1} parent=0 // pred_fallthru
    _
  // Predicated region
  $region90: #{forward.1} parent=0 // pred_check
    _
  $region91: #{forward.1} parent=0 // pred_check_branch
    %114 = sbr.rel (0) target = $region93
  $region92: #{forward.1} parent=0 // pred_region
    _
  $region93: #{forward.1} parent=0 // pred_fallthru
    _
  // Predicated region
  $region94: #{forward.1} parent=0 // pred_check
    _
  $region95: #{forward.1} parent=0 // pred_check_branch
    %116 = sbr.rel (0) target = $region97
  $region96: #{forward.1} parent=0 // pred_region
    _
  $region97: #{forward.1} parent=0 // pred_fallthru
    _
  // Predicated region
  $region98: #{forward.1} parent=0 // pred_check
    _
  $region99: #{forward.1} parent=0 // pred_check_branch
    %118 = sbr.rel (0) target = $region101
  $region100: #{forward.1} parent=0 // pred_region
    _
  $region101: #{forward.1} parent=0 // pred_fallthru
    _
  // Predicated region
  $region102: #{forward.1} parent=0 // pred_check
    _
  $region103: #{forward.1} parent=0 // pred_check_branch
    %120 = sbr.rel (0) target = $region105
  $region104: #{forward.1} parent=0 // pred_region
    _
  $region105: #{forward.1} parent=0 // pred_fallthru
    _
  %v122 = vld [vmem:[%s1] sm:$0xff]
  %v123 = vld [vmem:[%s1 + $0x8] sm:$0xff]
  %v124 = vld [vmem:[%s1 + $0x10] sm:$0xff]
  %v125 = vld [vmem:[%s1 + $0x18] sm:$0xff]
  %v126 = vld [vmem:[%s1 + $0x20] sm:$0xff]
  %v127 = vld [vmem:[%s1 + $0x28] sm:$0xff]
  %v128 = vld [vmem:[%s1 + $0x30] sm:$0xff]
  %v129 = vld [vmem:[%s1 + $0x38] sm:$0xff]
  %v130 = vld [vmem:[%s1 + $0x40] sm:$0xff]
  %v131 = vld [vmem:[%s1 + $0x48] sm:$0xff]
  %v132 = vld [vmem:[%s1 + $0x50] sm:$0xff]
  %v133 = vld [vmem:[%s1 + $0x58] sm:$0xff]
  %v134 = vld [vmem:[%s1 + $0x60] sm:$0xff]
  %v135 = vld [vmem:[%s1 + $0x68] sm:$0xff]
  %v136 = vld [vmem:[%s1 + $0x70] sm:$0xff]
  %v137 = vld [vmem:[%s1 + $0x78] sm:$0xff]
  %v138 = vld [vmem:[%s3] sm:$0xff]
  %v139 = vld [vmem:[%s3 + $0x8] sm:$0xff]
  %v140 = vld [vmem:[%s3 + $0x10] sm:$0xff]
  %v141 = vld [vmem:[%s3 + $0x18] sm:$0xff]
  %v142 = vld [vmem:[%s3 + $0x20] sm:$0xff]
  %v143 = vld [vmem:[%s3 + $0x28] sm:$0xff]
  %v144 = vld [vmem:[%s3 + $0x30] sm:$0xff]
  %v145 = vld [vmem:[%s3 + $0x38] sm:$0xff]
  %v146 = vld [vmem:[%s3 + $0x40] sm:$0xff]
  %v147 = vld [vmem:[%s3 + $0x48] sm:$0xff]
  %v148 = vld [vmem:[%s3 + $0x50] sm:$0xff]
  %v149 = vld [vmem:[%s3 + $0x58] sm:$0xff]
  %v150 = vld [vmem:[%s3 + $0x60] sm:$0xff]
  %v151 = vld [vmem:[%s3 + $0x68] sm:$0xff]
  %v152 = vld [vmem:[%s3 + $0x70] sm:$0xff]
  %v153 = vld [vmem:[%s3 + $0x78] sm:$0xff]
  %v154 = vld [vmem:[%s5] sm:$0xff]
  %v155 = vld [vmem:[%s5 + $0x8] sm:$0xff]
  %v156 = vld [vmem:[%s5 + $0x10] sm:$0xff]
  %v157 = vld [vmem:[%s5 + $0x18] sm:$0xff]
  %v158 = vld [vmem:[%s5 + $0x20] sm:$0xff]
  %v159 = vld [vmem:[%s5 + $0x28] sm:$0xff]
  %v160 = vld [vmem:[%s5 + $0x30] sm:$0xff]
  %v161 = vld [vmem:[%s5 + $0x38] sm:$0xff]
  %v162 = vld [vmem:[%s5 + $0x40] sm:$0xff]
  %v163 = vld [vmem:[%s5 + $0x48] sm:$0xff]
  %v164 = vld [vmem:[%s5 + $0x50] sm:$0xff]
  %v165 = vld [vmem:[%s5 + $0x58] sm:$0xff]
  %v166 = vld [vmem:[%s5 + $0x60] sm:$0xff]
  %v167 = vld [vmem:[%s5 + $0x68] sm:$0xff]
  %v168 = vld [vmem:[%s5 + $0x70] sm:$0xff]
  %v169 = vld [vmem:[%s5 + $0x78] sm:$0xff]
  %v170 = vld [vmem:[%s7] sm:$0xf]
  %v171 = vld [vmem:[%s7 + $0x4] sm:$0xf]
  %v172 = vld [vmem:[%s7 + $0x8] sm:$0xf]
  %v173 = vld [vmem:[%s7 + $0xc] sm:$0xf]
  %v174 = vld [vmem:[%s7 + $0x10] sm:$0xf]
  %v175 = vld [vmem:[%s7 + $0x14] sm:$0xf]
  %v176 = vld [vmem:[%s7 + $0x18] sm:$0xf]
  %v177 = vld [vmem:[%s7 + $0x1c] sm:$0xf]
  %v178 = vld [vmem:[%s7 + $0x20] sm:$0xf]
  %v179 = vld [vmem:[%s7 + $0x24] sm:$0xf]
  %v180 = vld [vmem:[%s7 + $0x28] sm:$0xf]
  %v181 = vld [vmem:[%s7 + $0x2c] sm:$0xf]
  %v182 = vld [vmem:[%s7 + $0x30] sm:$0xf]
  %v183 = vld [vmem:[%s7 + $0x34] sm:$0xf]
  %v184 = vld [vmem:[%s7 + $0x38] sm:$0xf]
  %v185 = vld [vmem:[%s7 + $0x3c] sm:$0xf]
  %v186 = vld [vmem:[%s9] sm:$0xff]
  %v187 = vld [vmem:[%s9 + $0x8] sm:$0xff]
  %v188 = vld [vmem:[%s9 + $0x10] sm:$0xff]
  %v189 = vld [vmem:[%s9 + $0x18] sm:$0xff]
  %v190 = vld [vmem:[%s9 + $0x20] sm:$0xff]
  %v191 = vld [vmem:[%s9 + $0x28] sm:$0xff]
  %v192 = vld [vmem:[%s9 + $0x30] sm:$0xff]
  %v193 = vld [vmem:[%s9 + $0x38] sm:$0xff]
  %v194 = vld [vmem:[%s9 + $0x40] sm:$0xff]
  %v195 = vld [vmem:[%s9 + $0x48] sm:$0xff]
  %v196 = vld [vmem:[%s9 + $0x50] sm:$0xff]
  %v197 = vld [vmem:[%s9 + $0x58] sm:$0xff]
  %v198 = vld [vmem:[%s9 + $0x60] sm:$0xff]
  %v199 = vld [vmem:[%s9 + $0x68] sm:$0xff]
  %v200 = vld [vmem:[%s9 + $0x70] sm:$0xff]
  %v201 = vld [vmem:[%s9 + $0x78] sm:$0xff]
  %v202 = vlaneseq
  %v203 = vand.u32 %v202, 127
  %204 = vset.pattern.permute.xlu0 0
  %205 = vperm.xlu0 %204, %v138
  %v206 = vpop.permute.xlu0 %205
  %207 = vset.pattern.permute.xlu0 0
  %208 = vperm.xlu0 %207, %v139
  %v209 = vpop.permute.xlu0 %208
  %210 = vset.pattern.permute.xlu0 0
  %211 = vperm.xlu0 %210, %v140
  %v212 = vpop.permute.xlu0 %211
  %213 = vset.pattern.permute.xlu0 0
  %214 = vperm.xlu0 %213, %v141
  %v215 = vpop.permute.xlu0 %214
  %216 = vset.pattern.permute.xlu0 0
  %217 = vperm.xlu0 %216, %v142
  %v218 = vpop.permute.xlu0 %217
  %219 = vset.pattern.permute.xlu0 0
  %220 = vperm.xlu0 %219, %v143
  %v221 = vpop.permute.xlu0 %220
  %222 = vset.pattern.permute.xlu0 0
  %223 = vperm.xlu0 %222, %v144
  %v224 = vpop.permute.xlu0 %223
  %225 = vset.pattern.permute.xlu0 0
  %226 = vperm.xlu0 %225, %v145
  %v227 = vpop.permute.xlu0 %226
  %228 = vset.pattern.permute.xlu0 0
  %229 = vperm.xlu0 %228, %v146
  %v230 = vpop.permute.xlu0 %229
  %231 = vset.pattern.permute.xlu0 0
  %232 = vperm.xlu0 %231, %v147
  %v233 = vpop.permute.xlu0 %232
  %234 = vset.pattern.permute.xlu0 0
  %235 = vperm.xlu0 %234, %v148
  %v236 = vpop.permute.xlu0 %235
  %237 = vset.pattern.permute.xlu0 0
  %238 = vperm.xlu0 %237, %v149
  %v239 = vpop.permute.xlu0 %238
  %240 = vset.pattern.permute.xlu0 0
  %241 = vperm.xlu0 %240, %v150
  %v242 = vpop.permute.xlu0 %241
  %243 = vset.pattern.permute.xlu0 0
  %244 = vperm.xlu0 %243, %v151
  %v245 = vpop.permute.xlu0 %244
  %246 = vset.pattern.permute.xlu0 0
  %247 = vperm.xlu0 %246, %v152
  %v248 = vpop.permute.xlu0 %247
  %249 = vset.pattern.permute.xlu0 0
  %250 = vperm.xlu0 %249, %v153
  %v251 = vpop.permute.xlu0 %250
  %vm252 = vcmp.eq.s32.totalorder %v203, %v206
  %vm253 = vcmp.eq.s32.totalorder %v203, %v209
  %vm254 = vcmp.eq.s32.totalorder %v203, %v212
  %vm255 = vcmp.eq.s32.totalorder %v203, %v215
  %vm256 = vcmp.eq.s32.totalorder %v203, %v218
  %vm257 = vcmp.eq.s32.totalorder %v203, %v221
  %vm258 = vcmp.eq.s32.totalorder %v203, %v224
  %vm259 = vcmp.eq.s32.totalorder %v203, %v227
  %vm260 = vcmp.eq.s32.totalorder %v203, %v230
  %vm261 = vcmp.eq.s32.totalorder %v203, %v233
  %vm262 = vcmp.eq.s32.totalorder %v203, %v236
  %vm263 = vcmp.eq.s32.totalorder %v203, %v239
  %vm264 = vcmp.eq.s32.totalorder %v203, %v242
  %vm265 = vcmp.eq.s32.totalorder %v203, %v245
  %vm266 = vcmp.eq.s32.totalorder %v203, %v248
  %vm267 = vcmp.eq.s32.totalorder %v203, %v251
  %v268 = vsel %vm252, 1.0, 0.0
  %v269 = vsel %vm253, 1.0, 0.0
  %v270 = vsel %vm254, 1.0, 0.0
  %v271 = vsel %vm255, 1.0, 0.0
  %v272 = vsel %vm256, 1.0, 0.0
  %v273 = vsel %vm257, 1.0, 0.0
  %v274 = vsel %vm258, 1.0, 0.0
  %v275 = vsel %vm259, 1.0, 0.0
  %v276 = vsel %vm260, 1.0, 0.0
  %v277 = vsel %vm261, 1.0, 0.0
  %v278 = vsel %vm262, 1.0, 0.0
  %v279 = vsel %vm263, 1.0, 0.0
  %v280 = vsel %vm264, 1.0, 0.0
  %v281 = vsel %vm265, 1.0, 0.0
  %v282 = vsel %vm266, 1.0, 0.0
  %v283 = vsel %vm267, 1.0, 0.0
  %v284 = vadd.f32 %v268, 0.0
  %v285 = vadd.f32 %v269, 0.0
  %v286 = vadd.f32 %v270, 0.0
  %v287 = vadd.f32 %v271, 0.0
  %v288 = vadd.f32 %v272, 0.0
  %v289 = vadd.f32 %v273, 0.0
  %v290 = vadd.f32 %v274, 0.0
  %v291 = vadd.f32 %v275, 0.0
  %v292 = vadd.f32 %v276, 0.0
  %v293 = vadd.f32 %v277, 0.0
  %v294 = vadd.f32 %v278, 0.0
  %v295 = vadd.f32 %v279, 0.0
  %v296 = vadd.f32 %v280, 0.0
  %v297 = vadd.f32 %v281, 0.0
  %v298 = vadd.f32 %v282, 0.0
  %v299 = vadd.f32 %v283, 0.0
  %300 = vset.pattern.permute.xlu0 1
  %301 = vperm.xlu0 %300, %v138
  %v302 = vpop.permute.xlu0 %301
  %303 = vset.pattern.permute.xlu0 1
  %304 = vperm.xlu0 %303, %v139
  %v305 = vpop.permute.xlu0 %304
  %306 = vset.pattern.permute.xlu0 1
  %307 = vperm.xlu0 %306, %v140
  %v308 = vpop.permute.xlu0 %307
  %309 = vset.pattern.permute.xlu0 1
  %310 = vperm.xlu0 %309, %v141
  %v311 = vpop.permute.xlu0 %310
  %312 = vset.pattern.permute.xlu0 1
  %313 = vperm.xlu0 %312, %v142
  %v314 = vpop.permute.xlu0 %313
  %315 = vset.pattern.permute.xlu0 1
  %316 = vperm.xlu0 %315, %v143
  %v317 = vpop.permute.xlu0 %316
  %318 = vset.pattern.permute.xlu0 1
  %319 = vperm.xlu0 %318, %v144
  %v320 = vpop.permute.xlu0 %319
  %321 = vset.pattern.permute.xlu0 1
  %322 = vperm.xlu0 %321, %v145
  %v323 = vpop.permute.xlu0 %322
  %324 = vset.pattern.permute.xlu0 1
  %325 = vperm.xlu0 %324, %v146
  %v326 = vpop.permute.xlu0 %325
  %327 = vset.pattern.permute.xlu0 1
  %328 = vperm.xlu0 %327, %v147
  %v329 = vpop.permute.xlu0 %328
  %330 = vset.pattern.permute.xlu0 1
  %331 = vperm.xlu0 %330, %v148
  %v332 = vpop.permute.xlu0 %331
  %333 = vset.pattern.permute.xlu0 1
  %334 = vperm.xlu0 %333, %v149
  %v335 = vpop.permute.xlu0 %334
  %336 = vset.pattern.permute.xlu0 1
  %337 = vperm.xlu0 %336, %v150
  %v338 = vpop.permute.xlu0 %337
  %339 = vset.pattern.permute.xlu0 1
  %340 = vperm.xlu0 %339, %v151
  %v341 = vpop.permute.xlu0 %340
  %342 = vset.pattern.permute.xlu0 1
  %343 = vperm.xlu0 %342, %v152
  %v344 = vpop.permute.xlu0 %343
  %345 = vset.pattern.permute.xlu0 1
  %346 = vperm.xlu0 %345, %v153
  %v347 = vpop.permute.xlu0 %346
  %vm348 = vcmp.eq.s32.totalorder %v203, %v302
  %vm349 = vcmp.eq.s32.totalorder %v203, %v305
  %vm350 = vcmp.eq.s32.totalorder %v203, %v308
  %vm351 = vcmp.eq.s32.totalorder %v203, %v311
  %vm352 = vcmp.eq.s32.totalorder %v203, %v314
  %vm353 = vcmp.eq.s32.totalorder %v203, %v317
  %vm354 = vcmp.eq.s32.totalorder %v203, %v320
  %vm355 = vcmp.eq.s32.totalorder %v203, %v323
  %vm356 = vcmp.eq.s32.totalorder %v203, %v326
  %vm357 = vcmp.eq.s32.totalorder %v203, %v329
  %vm358 = vcmp.eq.s32.totalorder %v203, %v332
  %vm359 = vcmp.eq.s32.totalorder %v203, %v335
  %vm360 = vcmp.eq.s32.totalorder %v203, %v338
  %vm361 = vcmp.eq.s32.totalorder %v203, %v341
  %vm362 = vcmp.eq.s32.totalorder %v203, %v344
  %vm363 = vcmp.eq.s32.totalorder %v203, %v347
  %v364 = vsel %vm348, 1.0, 0.0
  %v365 = vsel %vm349, 1.0, 0.0
  %v366 = vsel %vm350, 1.0, 0.0
  %v367 = vsel %vm351, 1.0, 0.0
  %v368 = vsel %vm352, 1.0, 0.0
  %v369 = vsel %vm353, 1.0, 0.0
  %v370 = vsel %vm354, 1.0, 0.0
  %v371 = vsel %vm355, 1.0, 0.0
  %v372 = vsel %vm356, 1.0, 0.0
  %v373 = vsel %vm357, 1.0, 0.0
  %v374 = vsel %vm358, 1.0, 0.0
  %v375 = vsel %vm359, 1.0, 0.0
  %v376 = vsel %vm360, 1.0, 0.0
  %v377 = vsel %vm361, 1.0, 0.0
  %v378 = vsel %vm362, 1.0, 0.0
  %v379 = vsel %vm363, 1.0, 0.0
  %v380 = vadd.f32 %v284, %v364
  %v381 = vadd.f32 %v285, %v365
  %v382 = vadd.f32 %v286, %v366
  %v383 = vadd.f32 %v287, %v367
  %v384 = vadd.f32 %v288, %v368
  %v385 = vadd.f32 %v289, %v369
  %v386 = vadd.f32 %v290, %v370
  %v387 = vadd.f32 %v291, %v371
  %v388 = vadd.f32 %v292, %v372
  %v389 = vadd.f32 %v293, %v373
  %v390 = vadd.f32 %v294, %v374
  %v391 = vadd.f32 %v295, %v375
  %v392 = vadd.f32 %v296, %v376
  %v393 = vadd.f32 %v297, %v377
  %v394 = vadd.f32 %v298, %v378
  %v395 = vadd.f32 %v299, %v379
  %396 = vset.pattern.permute.xlu0 2
  %397 = vperm.xlu0 %396, %v138
  %v398 = vpop.permute.xlu0 %397
  %399 = vset.pattern.permute.xlu0 2
  %400 = vperm.xlu0 %399, %v139
  %v401 = vpop.permute.xlu0 %400
  %402 = vset.pattern.permute.xlu0 2
  %403 = vperm.xlu0 %402, %v140
  %v404 = vpop.permute.xlu0 %403
  %405 = vset.pattern.permute.xlu0 2
  %406 = vperm.xlu0 %405, %v141
  %v407 = vpop.permute.xlu0 %406
  %408 = vset.pattern.permute.xlu0 2
  %409 = vperm.xlu0 %408, %v142
  %v410 = vpop.permute.xlu0 %409
  %411 = vset.pattern.permute.xlu0 2
  %412 = vperm.xlu0 %411, %v143
  %v413 = vpop.permute.xlu0 %412
  %414 = vset.pattern.permute.xlu0 2
  %415 = vperm.xlu0 %414, %v144
  %v416 = vpop.permute.xlu0 %415
  %417 = vset.pattern.permute.xlu0 2
  %418 = vperm.xlu0 %417, %v145
  %v419 = vpop.permute.xlu0 %418
  %420 = vset.pattern.permute.xlu0 2
  %421 = vperm.xlu0 %420, %v146
  %v422 = vpop.permute.xlu0 %421
  %423 = vset.pattern.permute.xlu0 2
  %424 = vperm.xlu0 %423, %v147
  %v425 = vpop.permute.xlu0 %424
  %426 = vset.pattern.permute.xlu0 2
  %427 = vperm.xlu0 %426, %v148
  %v428 = vpop.permute.xlu0 %427
  %429 = vset.pattern.permute.xlu0 2
  %430 = vperm.xlu0 %429, %v149
  %v431 = vpop.permute.xlu0 %430
  %432 = vset.pattern.permute.xlu0 2
  %433 = vperm.xlu0 %432, %v150
  %v434 = vpop.permute.xlu0 %433
  %435 = vset.pattern.permute.xlu0 2
  %436 = vperm.xlu0 %435, %v151
  %v437 = vpop.permute.xlu0 %436
  %438 = vset.pattern.permute.xlu0 2
  %439 = vperm.xlu0 %438, %v152
  %v440 = vpop.permute.xlu0 %439
  %441 = vset.pattern.permute.xlu0 2
  %442 = vperm.xlu0 %441, %v153
  %v443 = vpop.permute.xlu0 %442
  %vm444 = vcmp.eq.s32.totalorder %v203, %v398
  %vm445 = vcmp.eq.s32.totalorder %v203, %v401
  %vm446 = vcmp.eq.s32.totalorder %v203, %v404
  %vm447 = vcmp.eq.s32.totalorder %v203, %v407
  %vm448 = vcmp.eq.s32.totalorder %v203, %v410
  %vm449 = vcmp.eq.s32.totalorder %v203, %v413
  %vm450 = vcmp.eq.s32.totalorder %v203, %v416
  %vm451 = vcmp.eq.s32.totalorder %v203, %v419
  %vm452 = vcmp.eq.s32.totalorder %v203, %v422
  %vm453 = vcmp.eq.s32.totalorder %v203, %v425
  %vm454 = vcmp.eq.s32.totalorder %v203, %v428
  %vm455 = vcmp.eq.s32.totalorder %v203, %v431
  %vm456 = vcmp.eq.s32.totalorder %v203, %v434
  %vm457 = vcmp.eq.s32.totalorder %v203, %v437
  %vm458 = vcmp.eq.s32.totalorder %v203, %v440
  %vm459 = vcmp.eq.s32.totalorder %v203, %v443
  %v460 = vsel %vm444, 1.0, 0.0
  %v461 = vsel %vm445, 1.0, 0.0
  %v462 = vsel %vm446, 1.0, 0.0
  %v463 = vsel %vm447, 1.0, 0.0
  %v464 = vsel %vm448, 1.0, 0.0
  %v465 = vsel %vm449, 1.0, 0.0
  %v466 = vsel %vm450, 1.0, 0.0
  %v467 = vsel %vm451, 1.0, 0.0
  %v468 = vsel %vm452, 1.0, 0.0
  %v469 = vsel %vm453, 1.0, 0.0
  %v470 = vsel %vm454, 1.0, 0.0
  %v471 = vsel %vm455, 1.0, 0.0
  %v472 = vsel %vm456, 1.0, 0.0
  %v473 = vsel %vm457, 1.0, 0.0
  %v474 = vsel %vm458, 1.0, 0.0
  %v475 = vsel %vm459, 1.0, 0.0
  %v476 = vadd.f32 %v380, %v460
  %v477 = vadd.f32 %v381, %v461
  %v478 = vadd.f32 %v382, %v462
  %v479 = vadd.f32 %v383, %v463
  %v480 = vadd.f32 %v384, %v464
  %v481 = vadd.f32 %v385, %v465
  %v482 = vadd.f32 %v386, %v466
  %v483 = vadd.f32 %v387, %v467
  %v484 = vadd.f32 %v388, %v468
  %v485 = vadd.f32 %v389, %v469
  %v486 = vadd.f32 %v390, %v470
  %v487 = vadd.f32 %v391, %v471
  %v488 = vadd.f32 %v392, %v472
  %v489 = vadd.f32 %v393, %v473
  %v490 = vadd.f32 %v394, %v474
  %v491 = vadd.f32 %v395, %v475
  %492 = vset.pattern.permute.xlu0 3
  %493 = vperm.xlu0 %492, %v138
  %v494 = vpop.permute.xlu0 %493
  %495 = vset.pattern.permute.xlu0 3
  %496 = vperm.xlu0 %495, %v139
  %v497 = vpop.permute.xlu0 %496
  %498 = vset.pattern.permute.xlu0 3
  %499 = vperm.xlu0 %498, %v140
  %v500 = vpop.permute.xlu0 %499
  %501 = vset.pattern.permute.xlu0 3
  %502 = vperm.xlu0 %501, %v141
  %v503 = vpop.permute.xlu0 %502
  %504 = vset.pattern.permute.xlu0 3
  %505 = vperm.xlu0 %504, %v142
  %v506 = vpop.permute.xlu0 %505
  %507 = vset.pattern.permute.xlu0 3
  %508 = vperm.xlu0 %507, %v143
  %v509 = vpop.permute.xlu0 %508
  %510 = vset.pattern.permute.xlu0 3
  %511 = vperm.xlu0 %510, %v144
  %v512 = vpop.permute.xlu0 %511
  %513 = vset.pattern.permute.xlu0 3
  %514 = vperm.xlu0 %513, %v145
  %v515 = vpop.permute.xlu0 %514
  %516 = vset.pattern.permute.xlu0 3
  %517 = vperm.xlu0 %516, %v146
  %v518 = vpop.permute.xlu0 %517
  %519 = vset.pattern.permute.xlu0 3
  %520 = vperm.xlu0 %519, %v147
  %v521 = vpop.permute.xlu0 %520
  %522 = vset.pattern.permute.xlu0 3
  %523 = vperm.xlu0 %522, %v148
  %v524 = vpop.permute.xlu0 %523
  %525 = vset.pattern.permute.xlu0 3
  %526 = vperm.xlu0 %525, %v149
  %v527 = vpop.permute.xlu0 %526
  %528 = vset.pattern.permute.xlu0 3
  %529 = vperm.xlu0 %528, %v150
  %v530 = vpop.permute.xlu0 %529
  %531 = vset.pattern.permute.xlu0 3
  %532 = vperm.xlu0 %531, %v151
  %v533 = vpop.permute.xlu0 %532
  %534 = vset.pattern.permute.xlu0 3
  %535 = vperm.xlu0 %534, %v152
  %v536 = vpop.permute.xlu0 %535
  %537 = vset.pattern.permute.xlu0 3
  %538 = vperm.xlu0 %537, %v153
  %v539 = vpop.permute.xlu0 %538
  %vm540 = vcmp.eq.s32.totalorder %v203, %v494
  %vm541 = vcmp.eq.s32.totalorder %v203, %v497
  %vm542 = vcmp.eq.s32.totalorder %v203, %v500
  %vm543 = vcmp.eq.s32.totalorder %v203, %v503
  %vm544 = vcmp.eq.s32.totalorder %v203, %v506
  %vm545 = vcmp.eq.s32.totalorder %v203, %v509
  %vm546 = vcmp.eq.s32.totalorder %v203, %v512
  %vm547 = vcmp.eq.s32.totalorder %v203, %v515
  %vm548 = vcmp.eq.s32.totalorder %v203, %v518
  %vm549 = vcmp.eq.s32.totalorder %v203, %v521
  %vm550 = vcmp.eq.s32.totalorder %v203, %v524
  %vm551 = vcmp.eq.s32.totalorder %v203, %v527
  %vm552 = vcmp.eq.s32.totalorder %v203, %v530
  %vm553 = vcmp.eq.s32.totalorder %v203, %v533
  %vm554 = vcmp.eq.s32.totalorder %v203, %v536
  %vm555 = vcmp.eq.s32.totalorder %v203, %v539
  %v556 = vsel %vm540, 1.0, 0.0
  %v557 = vsel %vm541, 1.0, 0.0
  %v558 = vsel %vm542, 1.0, 0.0
  %v559 = vsel %vm543, 1.0, 0.0
  %v560 = vsel %vm544, 1.0, 0.0
  %v561 = vsel %vm545, 1.0, 0.0
  %v562 = vsel %vm546, 1.0, 0.0
  %v563 = vsel %vm547, 1.0, 0.0
  %v564 = vsel %vm548, 1.0, 0.0
  %v565 = vsel %vm549, 1.0, 0.0
  %v566 = vsel %vm550, 1.0, 0.0
  %v567 = vsel %vm551, 1.0, 0.0
  %v568 = vsel %vm552, 1.0, 0.0
  %v569 = vsel %vm553, 1.0, 0.0
  %v570 = vsel %vm554, 1.0, 0.0
  %v571 = vsel %vm555, 1.0, 0.0
  %v572 = vadd.f32 %v476, %v556
  %v573 = vadd.f32 %v477, %v557
  %v574 = vadd.f32 %v478, %v558
  %v575 = vadd.f32 %v479, %v559
  %v576 = vadd.f32 %v480, %v560
  %v577 = vadd.f32 %v481, %v561
  %v578 = vadd.f32 %v482, %v562
  %v579 = vadd.f32 %v483, %v563
  %v580 = vadd.f32 %v484, %v564
  %v581 = vadd.f32 %v485, %v565
  %v582 = vadd.f32 %v486, %v566
  %v583 = vadd.f32 %v487, %v567
  %v584 = vadd.f32 %v488, %v568
  %v585 = vadd.f32 %v489, %v569
  %v586 = vadd.f32 %v490, %v570
  %v587 = vadd.f32 %v491, %v571
  %588 = vset.pattern.permute.xlu0 4
  %589 = vperm.xlu0 %588, %v138
  %v590 = vpop.permute.xlu0 %589
  %591 = vset.pattern.permute.xlu0 4
  %592 = vperm.xlu0 %591, %v139
  %v593 = vpop.permute.xlu0 %592
  %594 = vset.pattern.permute.xlu0 4
  %595 = vperm.xlu0 %594, %v140
  %v596 = vpop.permute.xlu0 %595
  %597 = vset.pattern.permute.xlu0 4
  %598 = vperm.xlu0 %597, %v141
  %v599 = vpop.permute.xlu0 %598
  %600 = vset.pattern.permute.xlu0 4
  %601 = vperm.xlu0 %600, %v142
  %v602 = vpop.permute.xlu0 %601
  %603 = vset.pattern.permute.xlu0 4
  %604 = vperm.xlu0 %603, %v143
  %v605 = vpop.permute.xlu0 %604
  %606 = vset.pattern.permute.xlu0 4
  %607 = vperm.xlu0 %606, %v144
  %v608 = vpop.permute.xlu0 %607
  %609 = vset.pattern.permute.xlu0 4
  %610 = vperm.xlu0 %609, %v145
  %v611 = vpop.permute.xlu0 %610
  %612 = vset.pattern.permute.xlu0 4
  %613 = vperm.xlu0 %612, %v146
  %v614 = vpop.permute.xlu0 %613
  %615 = vset.pattern.permute.xlu0 4
  %616 = vperm.xlu0 %615, %v147
  %v617 = vpop.permute.xlu0 %616
  %618 = vset.pattern.permute.xlu0 4
  %619 = vperm.xlu0 %618, %v148
  %v620 = vpop.permute.xlu0 %619
  %621 = vset.pattern.permute.xlu0 4
  %622 = vperm.xlu0 %621, %v149
  %v623 = vpop.permute.xlu0 %622
  %624 = vset.pattern.permute.xlu0 4
  %625 = vperm.xlu0 %624, %v150
  %v626 = vpop.permute.xlu0 %625
  %627 = vset.pattern.permute.xlu0 4
  %628 = vperm.xlu0 %627, %v151
  %v629 = vpop.permute.xlu0 %628
  %630 = vset.pattern.permute.xlu0 4
  %631 = vperm.xlu0 %630, %v152
  %v632 = vpop.permute.xlu0 %631
  %633 = vset.pattern.permute.xlu0 4
  %634 = vperm.xlu0 %633, %v153
  %v635 = vpop.permute.xlu0 %634
  %vm636 = vcmp.eq.s32.totalorder %v203, %v590
  %vm637 = vcmp.eq.s32.totalorder %v203, %v593
  %vm638 = vcmp.eq.s32.totalorder %v203, %v596
  %vm639 = vcmp.eq.s32.totalorder %v203, %v599
  %vm640 = vcmp.eq.s32.totalorder %v203, %v602
  %vm641 = vcmp.eq.s32.totalorder %v203, %v605
  %vm642 = vcmp.eq.s32.totalorder %v203, %v608
  %vm643 = vcmp.eq.s32.totalorder %v203, %v611
  %vm644 = vcmp.eq.s32.totalorder %v203, %v614
  %vm645 = vcmp.eq.s32.totalorder %v203, %v617
  %vm646 = vcmp.eq.s32.totalorder %v203, %v620
  %vm647 = vcmp.eq.s32.totalorder %v203, %v623
  %vm648 = vcmp.eq.s32.totalorder %v203, %v626
  %vm649 = vcmp.eq.s32.totalorder %v203, %v629
  %vm650 = vcmp.eq.s32.totalorder %v203, %v632
  %vm651 = vcmp.eq.s32.totalorder %v203, %v635
  %v652 = vsel %vm636, 1.0, 0.0
  %v653 = vsel %vm637, 1.0, 0.0
  %v654 = vsel %vm638, 1.0, 0.0
  %v655 = vsel %vm639, 1.0, 0.0
  %v656 = vsel %vm640, 1.0, 0.0
  %v657 = vsel %vm641, 1.0, 0.0
  %v658 = vsel %vm642, 1.0, 0.0
  %v659 = vsel %vm643, 1.0, 0.0
  %v660 = vsel %vm644, 1.0, 0.0
  %v661 = vsel %vm645, 1.0, 0.0
  %v662 = vsel %vm646, 1.0, 0.0
  %v663 = vsel %vm647, 1.0, 0.0
  %v664 = vsel %vm648, 1.0, 0.0
  %v665 = vsel %vm649, 1.0, 0.0
  %v666 = vsel %vm650, 1.0, 0.0
  %v667 = vsel %vm651, 1.0, 0.0
  %v668 = vadd.f32 %v572, %v652
  %v669 = vadd.f32 %v573, %v653
  %v670 = vadd.f32 %v574, %v654
  %v671 = vadd.f32 %v575, %v655
  %v672 = vadd.f32 %v576, %v656
  %v673 = vadd.f32 %v577, %v657
  %v674 = vadd.f32 %v578, %v658
  %v675 = vadd.f32 %v579, %v659
  %v676 = vadd.f32 %v580, %v660
  %v677 = vadd.f32 %v581, %v661
  %v678 = vadd.f32 %v582, %v662
  %v679 = vadd.f32 %v583, %v663
  %v680 = vadd.f32 %v584, %v664
  %v681 = vadd.f32 %v585, %v665
  %v682 = vadd.f32 %v586, %v666
  %v683 = vadd.f32 %v587, %v667
  %684 = vset.pattern.permute.xlu0 5
  %685 = vperm.xlu0 %684, %v138
  %v686 = vpop.permute.xlu0 %685
  %687 = vset.pattern.permute.xlu0 5
  %688 = vperm.xlu0 %687, %v139
  %v689 = vpop.permute.xlu0 %688
  %690 = vset.pattern.permute.xlu0 5
  %691 = vperm.xlu0 %690, %v140
  %v692 = vpop.permute.xlu0 %691
  %693 = vset.pattern.permute.xlu0 5
  %694 = vperm.xlu0 %693, %v141
  %v695 = vpop.permute.xlu0 %694
  %696 = vset.pattern.permute.xlu0 5
  %697 = vperm.xlu0 %696, %v142
  %v698 = vpop.permute.xlu0 %697
  %699 = vset.pattern.permute.xlu0 5
  %700 = vperm.xlu0 %699, %v143
  %v701 = vpop.permute.xlu0 %700
  %702 = vset.pattern.permute.xlu0 5
  %703 = vperm.xlu0 %702, %v144
  %v704 = vpop.permute.xlu0 %703
  %705 = vset.pattern.permute.xlu0 5
  %706 = vperm.xlu0 %705, %v145
  %v707 = vpop.permute.xlu0 %706
  %708 = vset.pattern.permute.xlu0 5
  %709 = vperm.xlu0 %708, %v146
  %v710 = vpop.permute.xlu0 %709
  %711 = vset.pattern.permute.xlu0 5
  %712 = vperm.xlu0 %711, %v147
  %v713 = vpop.permute.xlu0 %712
  %714 = vset.pattern.permute.xlu0 5
  %715 = vperm.xlu0 %714, %v148
  %v716 = vpop.permute.xlu0 %715
  %717 = vset.pattern.permute.xlu0 5
  %718 = vperm.xlu0 %717, %v149
  %v719 = vpop.permute.xlu0 %718
  %720 = vset.pattern.permute.xlu0 5
  %721 = vperm.xlu0 %720, %v150
  %v722 = vpop.permute.xlu0 %721
  %723 = vset.pattern.permute.xlu0 5
  %724 = vperm.xlu0 %723, %v151
  %v725 = vpop.permute.xlu0 %724
  %726 = vset.pattern.permute.xlu0 5
  %727 = vperm.xlu0 %726, %v152
  %v728 = vpop.permute.xlu0 %727
  %729 = vset.pattern.permute.xlu0 5
  %730 = vperm.xlu0 %729, %v153
  %v731 = vpop.permute.xlu0 %730
  %vm732 = vcmp.eq.s32.totalorder %v203, %v686
  %vm733 = vcmp.eq.s32.totalorder %v203, %v689
  %vm734 = vcmp.eq.s32.totalorder %v203, %v692
  %vm735 = vcmp.eq.s32.totalorder %v203, %v695
  %vm736 = vcmp.eq.s32.totalorder %v203, %v698
  %vm737 = vcmp.eq.s32.totalorder %v203, %v701
  %vm738 = vcmp.eq.s32.totalorder %v203, %v704
  %vm739 = vcmp.eq.s32.totalorder %v203, %v707
  %vm740 = vcmp.eq.s32.totalorder %v203, %v710
  %vm741 = vcmp.eq.s32.totalorder %v203, %v713
  %vm742 = vcmp.eq.s32.totalorder %v203, %v716
  %vm743 = vcmp.eq.s32.totalorder %v203, %v719
  %vm744 = vcmp.eq.s32.totalorder %v203, %v722
  %vm745 = vcmp.eq.s32.totalorder %v203, %v725
  %vm746 = vcmp.eq.s32.totalorder %v203, %v728
  %vm747 = vcmp.eq.s32.totalorder %v203, %v731
  %v748 = vsel %vm732, 1.0, 0.0
  %v749 = vsel %vm733, 1.0, 0.0
  %v750 = vsel %vm734, 1.0, 0.0
  %v751 = vsel %vm735, 1.0, 0.0
  %v752 = vsel %vm736, 1.0, 0.0
  %v753 = vsel %vm737, 1.0, 0.0
  %v754 = vsel %vm738, 1.0, 0.0
  %v755 = vsel %vm739, 1.0, 0.0
  %v756 = vsel %vm740, 1.0, 0.0
  %v757 = vsel %vm741, 1.0, 0.0
  %v758 = vsel %vm742, 1.0, 0.0
  %v759 = vsel %vm743, 1.0, 0.0
  %v760 = vsel %vm744, 1.0, 0.0
  %v761 = vsel %vm745, 1.0, 0.0
  %v762 = vsel %vm746, 1.0, 0.0
  %v763 = vsel %vm747, 1.0, 0.0
  %v764 = vadd.f32 %v668, %v748
  %v765 = vadd.f32 %v669, %v749
  %v766 = vadd.f32 %v670, %v750
  %v767 = vadd.f32 %v671, %v751
  %v768 = vadd.f32 %v672, %v752
  %v769 = vadd.f32 %v673, %v753
  %v770 = vadd.f32 %v674, %v754
  %v771 = vadd.f32 %v675, %v755
  %v772 = vadd.f32 %v676, %v756
  %v773 = vadd.f32 %v677, %v757
  %v774 = vadd.f32 %v678, %v758
  %v775 = vadd.f32 %v679, %v759
  %v776 = vadd.f32 %v680, %v760
  %v777 = vadd.f32 %v681, %v761
  %v778 = vadd.f32 %v682, %v762
  %v779 = vadd.f32 %v683, %v763
  %v780 = vpack.c.bf16 %v765, %v764
  %v781 = vpack.c.bf16 %v767, %v766
  %v782 = vpack.c.bf16 %v769, %v768
  %v783 = vpack.c.bf16 %v771, %v770
  %v784 = vpack.c.bf16 %v773, %v772
  %v785 = vpack.c.bf16 %v775, %v774
  %v786 = vpack.c.bf16 %v777, %v776
  %v787 = vpack.c.bf16 %v779, %v778
  %v788 = vrcp.pop %v154
  %v789 = vrcp.pop %v155
  %v790 = vrcp.pop %v156
  %v791 = vrcp.pop %v157
  %v792 = vrcp.pop %v158
  %v793 = vrcp.pop %v159
  %v794 = vrcp.pop %v160
  %v795 = vrcp.pop %v161
  %v796 = vrcp.pop %v162
  %v797 = vrcp.pop %v163
  %v798 = vrcp.pop %v164
  %v799 = vrcp.pop %v165
  %v800 = vrcp.pop %v166
  %v801 = vrcp.pop %v167
  %v802 = vrcp.pop %v168
  %v803 = vrcp.pop %v169
  %v804 = vld [vmem:[%s13] sm:$0xf]
  %v805 = vld [vmem:[%s13 + $0x4] sm:$0xf]
  %v806 = vld [vmem:[%s13 + $0x8] sm:$0xf]
  %v807 = vld [vmem:[%s13 + $0xc] sm:$0xf]
  %v808 = vld [vmem:[%s13 + $0x10] sm:$0xf]
  %v809 = vld [vmem:[%s13 + $0x14] sm:$0xf]
  %v810 = vld [vmem:[%s13 + $0x18] sm:$0xf]
  %v811 = vld [vmem:[%s13 + $0x1c] sm:$0xf]
  %v812 = vld [vmem:[%s13 + $0x20] sm:$0x1]
  %v822 = vunpack.c.l.b16 %v804
  %v823 = vunpack.c.l.b16 %v805
  %v824 = vunpack.c.l.b16 %v806
  %v825 = vunpack.c.l.b16 %v807
  %v826 = vunpack.c.l.b16 %v808
  %v827 = vunpack.c.l.b16 %v809
  %v828 = vunpack.c.l.b16 %v810
  %v829 = vunpack.c.l.b16 %v811
  %v830 = vunpack.c.l.b16 %v812
  %v831 = vpack.c.b16 %v823, %v822
  %v832 = vpack.c.b16 %v825, %v824
  %v833 = vpack.c.b16 %v827, %v826
  %v834 = vpack.c.b16 %v829, %v828
  %v835 = vpack.c.b16 %v830, %v830
  %vm840 = vcmask 531456
  %v842 = vsel %vm840, %v780, 0
  %v845 = vsel %vm840, %v781, 0
  %v848 = vsel %vm840, %v782, 0
  %v851 = vsel %vm840, %v783, 0
  %v854 = vsel %vm840, %v784, 0
  %v857 = vsel %vm840, %v785, 0
  %v860 = vsel %vm840, %v786, 0
  %v863 = vsel %vm840, %v787, 0
  %vm865 = vcmask 1040384
  %v866 = vsel 0, 4294967295, 65535
  %v867 = vsel %vm865, %v866, 0
  %v869 = vand.u32 %v835, %v867
  %871 = vmatprep.subr.bf16.mxu0 0
  %872 = vmatpush1.bf16.msra.mxu0 0
  %873 = vmatprep.subr.bf16.mxu0 0
  %874 = vmatpush1.bf16.msra.mxu0 0
  %875 = vmatprep.subr.bf16.mxu0 0
  %876 = vmatpush1.bf16.msra.mxu0 0
  %877 = vmatprep.subr.bf16.mxu0 0
  %878 = vmatpush1.bf16.msra.mxu0 %v869
  %879 = vmatprep.subr.bf16.mxu0 0
  %880 = vmatpush1.bf16.msra.mxu0 %v834
  %881 = vmatprep.subr.bf16.mxu0 0
  %882 = vmatpush1.bf16.msra.mxu0 %v833
  %883 = vmatprep.subr.bf16.mxu0 0
  %884 = vmatpush1.bf16.msra.mxu0 %v832
  %885 = vmatprep.subr.bf16.mxu0 0
  %886 = vmatpush1.bf16.msra.mxu0 %v831
  %887 = vmatprep.subr.bf16.mxu0 0
  %888 = vmatpush2.bf16.msra.mxu0 0
  %889 = vmatprep.subr.bf16.mxu0 0
  %890 = vmatpush2.bf16.msra.mxu0 0
  %891 = vmatprep.subr.bf16.mxu0 0
  %892 = vmatpush2.bf16.msra.mxu0 0
  %893 = vmatprep.subr.bf16.mxu0 0
  %894 = vmatpush2.bf16.msra.mxu0 0
  %895 = vmatprep.subr.bf16.mxu0 0
  %896 = vmatpush2.bf16.msra.mxu0 0
  %897 = vmatprep.subr.bf16.mxu0 0
  %898 = vmatpush2.bf16.msra.mxu0 0
  %899 = vmatprep.subr.bf16.mxu0 0
  %900 = vmatpush2.bf16.msra.mxu0 0
  %901 = vmatprep.subr.bf16.mxu0 0
  %902 = vmatpush2.bf16.msra.mxu0 0
  %903 = vmatprep.mubr.bf16.mxu0 0
  %904 = vmatmul.mubr.bf16.gmra.mxu0 %v842
  %v905 = vpop.f32.mrf.mxu0
  %v906 = vadd.f32 0.0, %v905
  %v907 = vpop.f32.mrf.mxu0
  %v908 = vpop.f32.mrf.mxu0
  %v909 = vadd.f32 0.0, %v908
  %v910 = vpop.f32.mrf.mxu0
  %911 = vmatprep.mubr.bf16.mxu0 0
  %912 = vmatmul.mubr.bf16.gmra.mxu0 %v845
  %v913 = vpop.f32.mrf.mxu0
  %v914 = vadd.f32 0.0, %v913
  %v915 = vpop.f32.mrf.mxu0
  %v916 = vpop.f32.mrf.mxu0
  %v917 = vadd.f32 0.0, %v916
  %v918 = vpop.f32.mrf.mxu0
  %919 = vmatprep.mubr.bf16.mxu0 0
  %920 = vmatmul.mubr.bf16.gmra.mxu0 %v848
  %v921 = vpop.f32.mrf.mxu0
  %v922 = vadd.f32 0.0, %v921
  %v923 = vpop.f32.mrf.mxu0
  %v924 = vpop.f32.mrf.mxu0
  %v925 = vadd.f32 0.0, %v924
  %v926 = vpop.f32.mrf.mxu0
  %927 = vmatprep.mubr.bf16.mxu0 0
  %928 = vmatmul.mubr.bf16.gmra.mxu0 %v851
  %v929 = vpop.f32.mrf.mxu0
  %v930 = vadd.f32 0.0, %v929
  %v931 = vpop.f32.mrf.mxu0
  %v932 = vpop.f32.mrf.mxu0
  %v933 = vadd.f32 0.0, %v932
  %v934 = vpop.f32.mrf.mxu0
  %935 = vmatprep.mubr.bf16.mxu0 0
  %936 = vmatmul.mubr.bf16.gmra.mxu0 %v854
  %v937 = vpop.f32.mrf.mxu0
  %v938 = vadd.f32 0.0, %v937
  %v939 = vpop.f32.mrf.mxu0
  %v940 = vpop.f32.mrf.mxu0
  %v941 = vadd.f32 0.0, %v940
  %v942 = vpop.f32.mrf.mxu0
  %943 = vmatprep.mubr.bf16.mxu0 0
  %944 = vmatmul.mubr.bf16.gmra.mxu0 %v857
  %v945 = vpop.f32.mrf.mxu0
  %v946 = vadd.f32 0.0, %v945
  %v947 = vpop.f32.mrf.mxu0
  %v948 = vpop.f32.mrf.mxu0
  %v949 = vadd.f32 0.0, %v948
  %v950 = vpop.f32.mrf.mxu0
  %951 = vmatprep.mubr.bf16.mxu0 0
  %952 = vmatmul.mubr.bf16.gmra.mxu0 %v860
  %v953 = vpop.f32.mrf.mxu0
  %v954 = vadd.f32 0.0, %v953
  %v955 = vpop.f32.mrf.mxu0
  %v956 = vpop.f32.mrf.mxu0
  %v957 = vadd.f32 0.0, %v956
  %v958 = vpop.f32.mrf.mxu0
  %959 = vmatprep.mubr.bf16.mxu0 0
  %960 = vmatmul.mubr.bf16.gmra.mxu0 %v863
  %v961 = vpop.f32.mrf.mxu0
  %v962 = vadd.f32 0.0, %v961
  %v963 = vpop.f32.mrf.mxu0
  %v964 = vpop.f32.mrf.mxu0
  %v965 = vadd.f32 0.0, %v964
  %v966 = vpop.f32.mrf.mxu0
  %967 = vdwg.mxu0
  %969 = vset.pattern.permute.xlu0 0
  %970 = vperm.xlu0 %969, %v788
  %v971 = vpop.permute.xlu0 %970
  %974 = vset.pattern.permute.xlu0 0
  %975 = vperm.xlu0 %974, %v789
  %v976 = vpop.permute.xlu0 %975
  %979 = vset.pattern.permute.xlu0 0
  %980 = vperm.xlu0 %979, %v790
  %v981 = vpop.permute.xlu0 %980
  %984 = vset.pattern.permute.xlu0 0
  %985 = vperm.xlu0 %984, %v791
  %v986 = vpop.permute.xlu0 %985
  %989 = vset.pattern.permute.xlu0 0
  %990 = vperm.xlu0 %989, %v792
  %v991 = vpop.permute.xlu0 %990
  %994 = vset.pattern.permute.xlu0 0
  %995 = vperm.xlu0 %994, %v793
  %v996 = vpop.permute.xlu0 %995
  %999 = vset.pattern.permute.xlu0 0
  %1000 = vperm.xlu0 %999, %v794
  %v1001 = vpop.permute.xlu0 %1000
  %1004 = vset.pattern.permute.xlu0 0
  %1005 = vperm.xlu0 %1004, %v795
  %v1006 = vpop.permute.xlu0 %1005
  %1009 = vset.pattern.permute.xlu0 0
  %1010 = vperm.xlu0 %1009, %v796
  %v1011 = vpop.permute.xlu0 %1010
  %1014 = vset.pattern.permute.xlu0 0
  %1015 = vperm.xlu0 %1014, %v797
  %v1016 = vpop.permute.xlu0 %1015
  %1019 = vset.pattern.permute.xlu0 0
  %1020 = vperm.xlu0 %1019, %v798
  %v1021 = vpop.permute.xlu0 %1020
  %1024 = vset.pattern.permute.xlu0 0
  %1025 = vperm.xlu0 %1024, %v799
  %v1026 = vpop.permute.xlu0 %1025
  %1029 = vset.pattern.permute.xlu0 0
  %1030 = vperm.xlu0 %1029, %v800
  %v1031 = vpop.permute.xlu0 %1030
  %1034 = vset.pattern.permute.xlu0 0
  %1035 = vperm.xlu0 %1034, %v801
  %v1036 = vpop.permute.xlu0 %1035
  %1039 = vset.pattern.permute.xlu0 0
  %1040 = vperm.xlu0 %1039, %v802
  %v1041 = vpop.permute.xlu0 %1040
  %1044 = vset.pattern.permute.xlu0 0
  %1045 = vperm.xlu0 %1044, %v803
  %v1046 = vpop.permute.xlu0 %1045
  %v1048 = vmul.f32 %v906, %v971
  %v1049 = vmul.f32 %v909, %v976
  %v1050 = vmul.f32 %v914, %v981
  %v1051 = vmul.f32 %v917, %v986
  %v1052 = vmul.f32 %v922, %v991
  %v1053 = vmul.f32 %v925, %v996
  %v1054 = vmul.f32 %v930, %v1001
  %v1055 = vmul.f32 %v933, %v1006
  %v1056 = vmul.f32 %v938, %v1011
  %v1057 = vmul.f32 %v941, %v1016
  %v1058 = vmul.f32 %v946, %v1021
  %v1059 = vmul.f32 %v949, %v1026
  %v1060 = vmul.f32 %v954, %v1031
  %v1061 = vmul.f32 %v957, %v1036
  %v1062 = vmul.f32 %v962, %v1041
  %v1063 = vmul.f32 %v965, %v1046
  %v1064 = vld [vmem:[%s15] sm:$0x3]
  %v1081 = vunpack.c.l.b16 %v170
  %v1082 = vunpack.c.l.b16 %v171
  %v1083 = vunpack.c.l.b16 %v172
  %v1084 = vunpack.c.l.b16 %v173
  %v1085 = vunpack.c.l.b16 %v174
  %v1086 = vunpack.c.l.b16 %v175
  %v1087 = vunpack.c.l.b16 %v176
  %v1088 = vunpack.c.l.b16 %v177
  %v1089 = vunpack.c.l.b16 %v178
  %v1090 = vunpack.c.l.b16 %v179
  %v1091 = vunpack.c.l.b16 %v180
  %v1092 = vunpack.c.l.b16 %v181
  %v1093 = vunpack.c.l.b16 %v182
  %v1094 = vunpack.c.l.b16 %v183
  %v1095 = vunpack.c.l.b16 %v184
  %v1096 = vunpack.c.l.b16 %v185
  %v1097 = vpack.c.b16 %v1082, %v1081
  %v1098 = vpack.c.b16 %v1084, %v1083
  %v1099 = vpack.c.b16 %v1086, %v1085
  %v1100 = vpack.c.b16 %v1088, %v1087
  %v1101 = vpack.c.b16 %v1090, %v1089
  %v1102 = vpack.c.b16 %v1092, %v1091
  %v1103 = vpack.c.b16 %v1094, %v1093
  %v1104 = vpack.c.b16 %v1096, %v1095
  %vm1105 = vcmask 31744
  %v1107 = vsel %vm1105, %v1097, 0
  %v1110 = vsel %vm1105, %v1098, 0
  %v1113 = vsel %vm1105, %v1099, 0
  %v1116 = vsel %vm1105, %v1100, 0
  %v1119 = vsel %vm1105, %v1101, 0
  %v1122 = vsel %vm1105, %v1102, 0
  %v1125 = vsel %vm1105, %v1103, 0
  %v1128 = vsel %vm1105, %v1104, 0
  %vm1130 = vcmask 1041408
  %v1132 = vsel %vm1130, %v1064, 0
  %1134 = vmatprep.subr.bf16.mxu0 0
  %1135 = vmatpush1.bf16.msra.mxu0 0
  %1136 = vmatprep.subr.bf16.mxu0 0
  %1137 = vmatpush1.bf16.msra.mxu0 0
  %1138 = vmatprep.subr.bf16.mxu0 0
  %1139 = vmatpush1.bf16.msra.mxu0 0
  %1140 = vmatprep.subr.bf16.mxu0 0
  %1141 = vmatpush1.bf16.msra.mxu0 0
  %1142 = vmatprep.subr.bf16.mxu0 0
  %1143 = vmatpush1.bf16.msra.mxu0 0
  %1144 = vmatprep.subr.bf16.mxu0 0
  %1145 = vmatpush1.bf16.msra.mxu0 0
  %1146 = vmatprep.subr.bf16.mxu0 0
  %1147 = vmatpush1.bf16.msra.mxu0 0
  %1148 = vmatprep.subr.bf16.mxu0 0
  %1149 = vmatpush1.bf16.msra.mxu0 %v1132
  %1150 = vmatprep.subr.bf16.mxu0 0
  %1151 = vmatpush2.bf16.msra.mxu0 0
  %1152 = vmatprep.subr.bf16.mxu0 0
  %1153 = vmatpush2.bf16.msra.mxu0 0
  %1154 = vmatprep.subr.bf16.mxu0 0
  %1155 = vmatpush2.bf16.msra.mxu0 0
  %1156 = vmatprep.subr.bf16.mxu0 0
  %1157 = vmatpush2.bf16.msra.mxu0 0
  %1158 = vmatprep.subr.bf16.mxu0 0
  %1159 = vmatpush2.bf16.msra.mxu0 0
  %1160 = vmatprep.subr.bf16.mxu0 0
  %1161 = vmatpush2.bf16.msra.mxu0 0
  %1162 = vmatprep.subr.bf16.mxu0 0
  %1163 = vmatpush2.bf16.msra.mxu0 0
  %1164 = vmatprep.subr.bf16.mxu0 0
  %1165 = vmatpush2.bf16.msra.mxu0 0
  %1166 = vmatprep.mubr.bf16.mxu0 0
  %1167 = vmatmul.mubr.bf16.gmra.mxu0 %v1107
  %v1168 = vpop.f32.mrf.mxu0
  %v1169 = vadd.f32 0.0, %v1168
  %v1170 = vpop.f32.mrf.mxu0
  %v1171 = vpop.f32.mrf.mxu0
  %v1172 = vadd.f32 0.0, %v1171
  %v1173 = vpop.f32.mrf.mxu0
  %1174 = vmatprep.mubr.bf16.mxu0 0
  %1175 = vmatmul.mubr.bf16.gmra.mxu0 %v1110
  %v1176 = vpop.f32.mrf.mxu0
  %v1177 = vadd.f32 0.0, %v1176
  %v1178 = vpop.f32.mrf.mxu0
  %v1179 = vpop.f32.mrf.mxu0
  %v1180 = vadd.f32 0.0, %v1179
  %v1181 = vpop.f32.mrf.mxu0
  %1182 = vmatprep.mubr.bf16.mxu0 0
  %1183 = vmatmul.mubr.bf16.gmra.mxu0 %v1113
  %v1184 = vpop.f32.mrf.mxu0
  %v1185 = vadd.f32 0.0, %v1184
  %v1186 = vpop.f32.mrf.mxu0
  %v1187 = vpop.f32.mrf.mxu0
  %v1188 = vadd.f32 0.0, %v1187
  %v1189 = vpop.f32.mrf.mxu0
  %1190 = vmatprep.mubr.bf16.mxu0 0
  %1191 = vmatmul.mubr.bf16.gmra.mxu0 %v1116
  %v1192 = vpop.f32.mrf.mxu0
  %v1193 = vadd.f32 0.0, %v1192
  %v1194 = vpop.f32.mrf.mxu0
  %v1195 = vpop.f32.mrf.mxu0
  %v1196 = vadd.f32 0.0, %v1195
  %v1197 = vpop.f32.mrf.mxu0
  %1198 = vmatprep.mubr.bf16.mxu0 0
  %1199 = vmatmul.mubr.bf16.gmra.mxu0 %v1119
  %v1200 = vpop.f32.mrf.mxu0
  %v1201 = vadd.f32 0.0, %v1200
  %v1202 = vpop.f32.mrf.mxu0
  %v1203 = vpop.f32.mrf.mxu0
  %v1204 = vadd.f32 0.0, %v1203
  %v1205 = vpop.f32.mrf.mxu0
  %1206 = vmatprep.mubr.bf16.mxu0 0
  %1207 = vmatmul.mubr.bf16.gmra.mxu0 %v1122
  %v1208 = vpop.f32.mrf.mxu0
  %v1209 = vadd.f32 0.0, %v1208
  %v1210 = vpop.f32.mrf.mxu0
  %v1211 = vpop.f32.mrf.mxu0
  %v1212 = vadd.f32 0.0, %v1211
  %v1213 = vpop.f32.mrf.mxu0
  %1214 = vmatprep.mubr.bf16.mxu0 0
  %1215 = vmatmul.mubr.bf16.gmra.mxu0 %v1125
  %v1216 = vpop.f32.mrf.mxu0
  %v1217 = vadd.f32 0.0, %v1216
  %v1218 = vpop.f32.mrf.mxu0
  %v1219 = vpop.f32.mrf.mxu0
  %v1220 = vadd.f32 0.0, %v1219
  %v1221 = vpop.f32.mrf.mxu0
  %1222 = vmatprep.mubr.bf16.mxu0 0
  %1223 = vmatmul.mubr.bf16.gmra.mxu0 %v1128
  %v1224 = vpop.f32.mrf.mxu0
  %v1225 = vadd.f32 0.0, %v1224
  %v1226 = vpop.f32.mrf.mxu0
  %v1227 = vpop.f32.mrf.mxu0
  %v1228 = vadd.f32 0.0, %v1227
  %v1229 = vpop.f32.mrf.mxu0
  %1230 = vdwg.mxu0
  %v1231 = vadd.f32 %v1048, %v1169
  %v1232 = vadd.f32 %v1049, %v1172
  %v1233 = vadd.f32 %v1050, %v1177
  %v1234 = vadd.f32 %v1051, %v1180
  %v1235 = vadd.f32 %v1052, %v1185
  %v1236 = vadd.f32 %v1053, %v1188
  %v1237 = vadd.f32 %v1054, %v1193
  %v1238 = vadd.f32 %v1055, %v1196
  %v1239 = vadd.f32 %v1056, %v1201
  %v1240 = vadd.f32 %v1057, %v1204
  %v1241 = vadd.f32 %v1058, %v1209
  %v1242 = vadd.f32 %v1059, %v1212
  %v1243 = vadd.f32 %v1060, %v1217
  %v1244 = vadd.f32 %v1061, %v1220
  %v1245 = vadd.f32 %v1062, %v1225
  %v1246 = vadd.f32 %v1063, %v1228
  %v1247 = vld [vmem:[%s17] sm:$0x1]
  %v1249 = vlaneseq
  %v1250 = vshrl.u32 %v1249, 7
  %v1251 = vsub.s32 0, %v1250
  %v1252 = vrot.slane %v1247, %v1251
  %v1254 = vadd.f32 %v1231, %v1252
  %v1255 = vadd.f32 %v1232, %v1252
  %v1256 = vadd.f32 %v1233, %v1252
  %v1257 = vadd.f32 %v1234, %v1252
  %v1258 = vadd.f32 %v1235, %v1252
  %v1259 = vadd.f32 %v1236, %v1252
  %v1260 = vadd.f32 %v1237, %v1252
  %v1261 = vadd.f32 %v1238, %v1252
  %v1262 = vadd.f32 %v1239, %v1252
  %v1263 = vadd.f32 %v1240, %v1252
  %v1264 = vadd.f32 %v1241, %v1252
  %v1265 = vadd.f32 %v1242, %v1252
  %v1266 = vadd.f32 %v1243, %v1252
  %v1267 = vadd.f32 %v1244, %v1252
  %v1268 = vadd.f32 %v1245, %v1252
  %v1269 = vadd.f32 %v1246, %v1252
  %1270 = vset.pattern.permute.xlu0 0
  %1271 = vperm.xlu0 %1270, %v122
  %v1272 = vpop.permute.xlu0 %1271
  %1273 = vset.pattern.permute.xlu0 0
  %1274 = vperm.xlu0 %1273, %v123
  %v1275 = vpop.permute.xlu0 %1274
  %1276 = vset.pattern.permute.xlu0 0
  %1277 = vperm.xlu0 %1276, %v124
  %v1278 = vpop.permute.xlu0 %1277
  %1279 = vset.pattern.permute.xlu0 0
  %1280 = vperm.xlu0 %1279, %v125
  %v1281 = vpop.permute.xlu0 %1280
  %1282 = vset.pattern.permute.xlu0 0
  %1283 = vperm.xlu0 %1282, %v126
  %v1284 = vpop.permute.xlu0 %1283
  %1285 = vset.pattern.permute.xlu0 0
  %1286 = vperm.xlu0 %1285, %v127
  %v1287 = vpop.permute.xlu0 %1286
  %1288 = vset.pattern.permute.xlu0 0
  %1289 = vperm.xlu0 %1288, %v128
  %v1290 = vpop.permute.xlu0 %1289
  %1291 = vset.pattern.permute.xlu0 0
  %1292 = vperm.xlu0 %1291, %v129
  %v1293 = vpop.permute.xlu0 %1292
  %1294 = vset.pattern.permute.xlu0 0
  %1295 = vperm.xlu0 %1294, %v130
  %v1296 = vpop.permute.xlu0 %1295
  %1297 = vset.pattern.permute.xlu0 0
  %1298 = vperm.xlu0 %1297, %v131
  %v1299 = vpop.permute.xlu0 %1298
  %1300 = vset.pattern.permute.xlu0 0
  %1301 = vperm.xlu0 %1300, %v132
  %v1302 = vpop.permute.xlu0 %1301
  %1303 = vset.pattern.permute.xlu0 0
  %1304 = vperm.xlu0 %1303, %v133
  %v1305 = vpop.permute.xlu0 %1304
  %1306 = vset.pattern.permute.xlu0 0
  %1307 = vperm.xlu0 %1306, %v134
  %v1308 = vpop.permute.xlu0 %1307
  %1309 = vset.pattern.permute.xlu0 0
  %1310 = vperm.xlu0 %1309, %v135
  %v1311 = vpop.permute.xlu0 %1310
  %1312 = vset.pattern.permute.xlu0 0
  %1313 = vperm.xlu0 %1312, %v136
  %v1314 = vpop.permute.xlu0 %1313
  %1315 = vset.pattern.permute.xlu0 0
  %1316 = vperm.xlu0 %1315, %v137
  %v1317 = vpop.permute.xlu0 %1316
  %vm1318 = vcmp.eq.s32.totalorder %v203, %v1272
  %vm1319 = vcmp.eq.s32.totalorder %v203, %v1275
  %vm1320 = vcmp.eq.s32.totalorder %v203, %v1278
  %vm1321 = vcmp.eq.s32.totalorder %v203, %v1281
  %vm1322 = vcmp.eq.s32.totalorder %v203, %v1284
  %vm1323 = vcmp.eq.s32.totalorder %v203, %v1287
  %vm1324 = vcmp.eq.s32.totalorder %v203, %v1290
  %vm1325 = vcmp.eq.s32.totalorder %v203, %v1293
  %vm1326 = vcmp.eq.s32.totalorder %v203, %v1296
  %vm1327 = vcmp.eq.s32.totalorder %v203, %v1299
  %vm1328 = vcmp.eq.s32.totalorder %v203, %v1302
  %vm1329 = vcmp.eq.s32.totalorder %v203, %v1305
  %vm1330 = vcmp.eq.s32.totalorder %v203, %v1308
  %vm1331 = vcmp.eq.s32.totalorder %v203, %v1311
  %vm1332 = vcmp.eq.s32.totalorder %v203, %v1314
  %vm1333 = vcmp.eq.s32.totalorder %v203, %v1317
  %v1334 = vsel %vm1318, 1.0, 0.0
  %v1335 = vsel %vm1319, 1.0, 0.0
  %v1336 = vsel %vm1320, 1.0, 0.0
  %v1337 = vsel %vm1321, 1.0, 0.0
  %v1338 = vsel %vm1322, 1.0, 0.0
  %v1339 = vsel %vm1323, 1.0, 0.0
  %v1340 = vsel %vm1324, 1.0, 0.0
  %v1341 = vsel %vm1325, 1.0, 0.0
  %v1342 = vsel %vm1326, 1.0, 0.0
  %v1343 = vsel %vm1327, 1.0, 0.0
  %v1344 = vsel %vm1328, 1.0, 0.0
  %v1345 = vsel %vm1329, 1.0, 0.0
  %v1346 = vsel %vm1330, 1.0, 0.0
  %v1347 = vsel %vm1331, 1.0, 0.0
  %v1348 = vsel %vm1332, 1.0, 0.0
  %v1349 = vsel %vm1333, 1.0, 0.0
  %v1350 = vpack.c.bf16 %v1335, %v1334
  %v1351 = vpack.c.bf16 %v1337, %v1336
  %v1352 = vpack.c.bf16 %v1339, %v1338
  %v1353 = vpack.c.bf16 %v1341, %v1340
  %v1354 = vpack.c.bf16 %v1343, %v1342
  %v1355 = vpack.c.bf16 %v1345, %v1344
  %v1356 = vpack.c.bf16 %v1347, %v1346
  %v1357 = vpack.c.bf16 %v1349, %v1348
  %v1358 = vld [vmem:[%s11] sm:$0xf]
  %v1359 = vld [vmem:[%s11 + $0x4] sm:$0xf]
  %v1360 = vld [vmem:[%s11 + $0x8] sm:$0xf]
  %v1361 = vld [vmem:[%s11 + $0xc] sm:$0xf]
  %v1362 = vld [vmem:[%s11 + $0x10] sm:$0xf]
  %v1363 = vld [vmem:[%s11 + $0x14] sm:$0xf]
  %v1364 = vld [vmem:[%s11 + $0x18] sm:$0xf]
  %v1365 = vld [vmem:[%s11 + $0x1c] sm:$0xf]
  %v1366 = vld [vmem:[%s11 + $0x20] sm:$0x1]
  %v1376 = vunpack.c.l.b16 %v1358
  %v1377 = vunpack.c.l.b16 %v1359
  %v1378 = vunpack.c.l.b16 %v1360
  %v1379 = vunpack.c.l.b16 %v1361
  %v1380 = vunpack.c.l.b16 %v1362
  %v1381 = vunpack.c.l.b16 %v1363
  %v1382 = vunpack.c.l.b16 %v1364
  %v1383 = vunpack.c.l.b16 %v1365
  %v1384 = vunpack.c.l.b16 %v1366
  %v1385 = vpack.c.b16 %v1377, %v1376
  %v1386 = vpack.c.b16 %v1379, %v1378
  %v1387 = vpack.c.b16 %v1381, %v1380
  %v1388 = vpack.c.b16 %v1383, %v1382
  %v1389 = vpack.c.b16 %v1384, %v1384
  %v1395 = vsel %vm840, %v1350, 0
  %v1398 = vsel %vm840, %v1351, 0
  %v1401 = vsel %vm840, %v1352, 0
  %v1404 = vsel %vm840, %v1353, 0
  %v1407 = vsel %vm840, %v1354, 0
  %v1410 = vsel %vm840, %v1355, 0
  %v1413 = vsel %vm840, %v1356, 0
  %v1416 = vsel %vm840, %v1357, 0
  %v1419 = vand.u32 %v1389, %v867
  %1421 = vmatprep.subr.bf16.mxu0 0
  %1422 = vmatpush1.bf16.msra.mxu0 0
  %1423 = vmatprep.subr.bf16.mxu0 0
  %1424 = vmatpush1.bf16.msra.mxu0 0
  %1425 = vmatprep.subr.bf16.mxu0 0
  %1426 = vmatpush1.bf16.msra.mxu0 0
  %1427 = vmatprep.subr.bf16.mxu0 0
  %1428 = vmatpush1.bf16.msra.mxu0 %v1419
  %1429 = vmatprep.subr.bf16.mxu0 0
  %1430 = vmatpush1.bf16.msra.mxu0 %v1388
  %1431 = vmatprep.subr.bf16.mxu0 0
  %1432 = vmatpush1.bf16.msra.mxu0 %v1387
  %1433 = vmatprep.subr.bf16.mxu0 0
  %1434 = vmatpush1.bf16.msra.mxu0 %v1386
  %1435 = vmatprep.subr.bf16.mxu0 0
  %1436 = vmatpush1.bf16.msra.mxu0 %v1385
  %1437 = vmatprep.subr.bf16.mxu0 0
  %1438 = vmatpush2.bf16.msra.mxu0 0
  %1439 = vmatprep.subr.bf16.mxu0 0
  %1440 = vmatpush2.bf16.msra.mxu0 0
  %1441 = vmatprep.subr.bf16.mxu0 0
  %1442 = vmatpush2.bf16.msra.mxu0 0
  %1443 = vmatprep.subr.bf16.mxu0 0
  %1444 = vmatpush2.bf16.msra.mxu0 0
  %1445 = vmatprep.subr.bf16.mxu0 0
  %1446 = vmatpush2.bf16.msra.mxu0 0
  %1447 = vmatprep.subr.bf16.mxu0 0
  %1448 = vmatpush2.bf16.msra.mxu0 0
  %1449 = vmatprep.subr.bf16.mxu0 0
  %1450 = vmatpush2.bf16.msra.mxu0 0
  %1451 = vmatprep.subr.bf16.mxu0 0
  %1452 = vmatpush2.bf16.msra.mxu0 0
  %1453 = vmatprep.mubr.bf16.mxu0 0
  %1454 = vmatmul.mubr.bf16.gmra.mxu0 %v1395
  %v1455 = vpop.f32.mrf.mxu0
  %v1456 = vadd.f32 0.0, %v1455
  %v1457 = vpop.f32.mrf.mxu0
  %v1458 = vpop.f32.mrf.mxu0
  %v1459 = vadd.f32 0.0, %v1458
  %v1460 = vpop.f32.mrf.mxu0
  %1461 = vmatprep.mubr.bf16.mxu0 0
  %1462 = vmatmul.mubr.bf16.gmra.mxu0 %v1398
  %v1463 = vpop.f32.mrf.mxu0
  %v1464 = vadd.f32 0.0, %v1463
  %v1465 = vpop.f32.mrf.mxu0
  %v1466 = vpop.f32.mrf.mxu0
  %v1467 = vadd.f32 0.0, %v1466
  %v1468 = vpop.f32.mrf.mxu0
  %1469 = vmatprep.mubr.bf16.mxu0 0
  %1470 = vmatmul.mubr.bf16.gmra.mxu0 %v1401
  %v1471 = vpop.f32.mrf.mxu0
  %v1472 = vadd.f32 0.0, %v1471
  %v1473 = vpop.f32.mrf.mxu0
  %v1474 = vpop.f32.mrf.mxu0
  %v1475 = vadd.f32 0.0, %v1474
  %v1476 = vpop.f32.mrf.mxu0
  %1477 = vmatprep.mubr.bf16.mxu0 0
  %1478 = vmatmul.mubr.bf16.gmra.mxu0 %v1404
  %v1479 = vpop.f32.mrf.mxu0
  %v1480 = vadd.f32 0.0, %v1479
  %v1481 = vpop.f32.mrf.mxu0
  %v1482 = vpop.f32.mrf.mxu0
  %v1483 = vadd.f32 0.0, %v1482
  %v1484 = vpop.f32.mrf.mxu0
  %1485 = vmatprep.mubr.bf16.mxu0 0
  %1486 = vmatmul.mubr.bf16.gmra.mxu0 %v1407
  %v1487 = vpop.f32.mrf.mxu0
  %v1488 = vadd.f32 0.0, %v1487
  %v1489 = vpop.f32.mrf.mxu0
  %v1490 = vpop.f32.mrf.mxu0
  %v1491 = vadd.f32 0.0, %v1490
  %v1492 = vpop.f32.mrf.mxu0
  %1493 = vmatprep.mubr.bf16.mxu0 0
  %1494 = vmatmul.mubr.bf16.gmra.mxu0 %v1410
  %v1495 = vpop.f32.mrf.mxu0
  %v1496 = vadd.f32 0.0, %v1495
  %v1497 = vpop.f32.mrf.mxu0
  %v1498 = vpop.f32.mrf.mxu0
  %v1499 = vadd.f32 0.0, %v1498
  %v1500 = vpop.f32.mrf.mxu0
  %1501 = vmatprep.mubr.bf16.mxu0 0
  %1502 = vmatmul.mubr.bf16.gmra.mxu0 %v1413
  %v1503 = vpop.f32.mrf.mxu0
  %v1504 = vadd.f32 0.0, %v1503
  %v1505 = vpop.f32.mrf.mxu0
  %v1506 = vpop.f32.mrf.mxu0
  %v1507 = vadd.f32 0.0, %v1506
  %v1508 = vpop.f32.mrf.mxu0
  %1509 = vmatprep.mubr.bf16.mxu0 0
  %1510 = vmatmul.mubr.bf16.gmra.mxu0 %v1416
  %v1511 = vpop.f32.mrf.mxu0
  %v1512 = vadd.f32 0.0, %v1511
  %v1513 = vpop.f32.mrf.mxu0
  %v1514 = vpop.f32.mrf.mxu0
  %v1515 = vadd.f32 0.0, %v1514
  %v1516 = vpop.f32.mrf.mxu0
  %1517 = vdwg.mxu0
  %v1518 = vadd.f32 %v1254, %v1456
  %v1519 = vadd.f32 %v1255, %v1459
  %v1520 = vadd.f32 %v1256, %v1464
  %v1521 = vadd.f32 %v1257, %v1467
  %v1522 = vadd.f32 %v1258, %v1472
  %v1523 = vadd.f32 %v1259, %v1475
  %v1524 = vadd.f32 %v1260, %v1480
  %v1525 = vadd.f32 %v1261, %v1483
  %v1526 = vadd.f32 %v1262, %v1488
  %v1527 = vadd.f32 %v1263, %v1491
  %v1528 = vadd.f32 %v1264, %v1496
  %v1529 = vadd.f32 %v1265, %v1499
  %v1530 = vadd.f32 %v1266, %v1504
  %v1531 = vadd.f32 %v1267, %v1507
  %v1532 = vadd.f32 %v1268, %v1512
  %v1533 = vadd.f32 %v1269, %v1515
  %1534 = vset.pattern.permute.xlu0 1
  %1535 = vperm.xlu0 %1534, %v122
  %v1536 = vpop.permute.xlu0 %1535
  %1537 = vset.pattern.permute.xlu0 1
  %1538 = vperm.xlu0 %1537, %v123
  %v1539 = vpop.permute.xlu0 %1538
  %1540 = vset.pattern.permute.xlu0 1
  %1541 = vperm.xlu0 %1540, %v124
  %v1542 = vpop.permute.xlu0 %1541
  %1543 = vset.pattern.permute.xlu0 1
  %1544 = vperm.xlu0 %1543, %v125
  %v1545 = vpop.permute.xlu0 %1544
  %1546 = vset.pattern.permute.xlu0 1
  %1547 = vperm.xlu0 %1546, %v126
  %v1548 = vpop.permute.xlu0 %1547
  %1549 = vset.pattern.permute.xlu0 1
  %1550 = vperm.xlu0 %1549, %v127
  %v1551 = vpop.permute.xlu0 %1550
  %1552 = vset.pattern.permute.xlu0 1
  %1553 = vperm.xlu0 %1552, %v128
  %v1554 = vpop.permute.xlu0 %1553
  %1555 = vset.pattern.permute.xlu0 1
  %1556 = vperm.xlu0 %1555, %v129
  %v1557 = vpop.permute.xlu0 %1556
  %1558 = vset.pattern.permute.xlu0 1
  %1559 = vperm.xlu0 %1558, %v130
  %v1560 = vpop.permute.xlu0 %1559
  %1561 = vset.pattern.permute.xlu0 1
  %1562 = vperm.xlu0 %1561, %v131
  %v1563 = vpop.permute.xlu0 %1562
  %1564 = vset.pattern.permute.xlu0 1
  %1565 = vperm.xlu0 %1564, %v132
  %v1566 = vpop.permute.xlu0 %1565
  %1567 = vset.pattern.permute.xlu0 1
  %1568 = vperm.xlu0 %1567, %v133
  %v1569 = vpop.permute.xlu0 %1568
  %1570 = vset.pattern.permute.xlu0 1
  %1571 = vperm.xlu0 %1570, %v134
  %v1572 = vpop.permute.xlu0 %1571
  %1573 = vset.pattern.permute.xlu0 1
  %1574 = vperm.xlu0 %1573, %v135
  %v1575 = vpop.permute.xlu0 %1574
  %1576 = vset.pattern.permute.xlu0 1
  %1577 = vperm.xlu0 %1576, %v136
  %v1578 = vpop.permute.xlu0 %1577
  %1579 = vset.pattern.permute.xlu0 1
  %1580 = vperm.xlu0 %1579, %v137
  %v1581 = vpop.permute.xlu0 %1580
  %vm1582 = vcmp.eq.s32.totalorder %v203, %v1536
  %vm1583 = vcmp.eq.s32.totalorder %v203, %v1539
  %vm1584 = vcmp.eq.s32.totalorder %v203, %v1542
  %vm1585 = vcmp.eq.s32.totalorder %v203, %v1545
  %vm1586 = vcmp.eq.s32.totalorder %v203, %v1548
  %vm1587 = vcmp.eq.s32.totalorder %v203, %v1551
  %vm1588 = vcmp.eq.s32.totalorder %v203, %v1554
  %vm1589 = vcmp.eq.s32.totalorder %v203, %v1557
  %vm1590 = vcmp.eq.s32.totalorder %v203, %v1560
  %vm1591 = vcmp.eq.s32.totalorder %v203, %v1563
  %vm1592 = vcmp.eq.s32.totalorder %v203, %v1566
  %vm1593 = vcmp.eq.s32.totalorder %v203, %v1569
  %vm1594 = vcmp.eq.s32.totalorder %v203, %v1572
  %vm1595 = vcmp.eq.s32.totalorder %v203, %v1575
  %vm1596 = vcmp.eq.s32.totalorder %v203, %v1578
  %vm1597 = vcmp.eq.s32.totalorder %v203, %v1581
  %v1598 = vsel %vm1582, 1.0, 0.0
  %v1599 = vsel %vm1583, 1.0, 0.0
  %v1600 = vsel %vm1584, 1.0, 0.0
  %v1601 = vsel %vm1585, 1.0, 0.0
  %v1602 = vsel %vm1586, 1.0, 0.0
  %v1603 = vsel %vm1587, 1.0, 0.0
  %v1604 = vsel %vm1588, 1.0, 0.0
  %v1605 = vsel %vm1589, 1.0, 0.0
  %v1606 = vsel %vm1590, 1.0, 0.0
  %v1607 = vsel %vm1591, 1.0, 0.0
  %v1608 = vsel %vm1592, 1.0, 0.0
  %v1609 = vsel %vm1593, 1.0, 0.0
  %v1610 = vsel %vm1594, 1.0, 0.0
  %v1611 = vsel %vm1595, 1.0, 0.0
  %v1612 = vsel %vm1596, 1.0, 0.0
  %v1613 = vsel %vm1597, 1.0, 0.0
  %v1614 = vpack.c.bf16 %v1599, %v1598
  %v1615 = vpack.c.bf16 %v1601, %v1600
  %v1616 = vpack.c.bf16 %v1603, %v1602
  %v1617 = vpack.c.bf16 %v1605, %v1604
  %v1618 = vpack.c.bf16 %v1607, %v1606
  %v1619 = vpack.c.bf16 %v1609, %v1608
  %v1620 = vpack.c.bf16 %v1611, %v1610
  %v1621 = vpack.c.bf16 %v1613, %v1612
  %s1622 = scalar_lea.vmem %s11, 36
  %v1623 = vld [vmem:[%s1622] sm:$0xf]
  %v1624 = vld [vmem:[%s1622 + $0x4] sm:$0xf]
  %v1625 = vld [vmem:[%s1622 + $0x8] sm:$0xf]
  %v1626 = vld [vmem:[%s1622 + $0xc] sm:$0xf]
  %v1627 = vld [vmem:[%s1622 + $0x10] sm:$0xf]
  %v1628 = vld [vmem:[%s1622 + $0x14] sm:$0xf]
  %v1629 = vld [vmem:[%s1622 + $0x18] sm:$0xf]
  %v1630 = vld [vmem:[%s1622 + $0x1c] sm:$0xf]
  %v1631 = vld [vmem:[%s1622 + $0x20] sm:$0x1]
  %v1641 = vunpack.c.l.b16 %v1623
  %v1642 = vunpack.c.l.b16 %v1624
  %v1643 = vunpack.c.l.b16 %v1625
  %v1644 = vunpack.c.l.b16 %v1626
  %v1645 = vunpack.c.l.b16 %v1627
  %v1646 = vunpack.c.l.b16 %v1628
  %v1647 = vunpack.c.l.b16 %v1629
  %v1648 = vunpack.c.l.b16 %v1630
  %v1649 = vunpack.c.l.b16 %v1631
  %v1650 = vpack.c.b16 %v1642, %v1641
  %v1651 = vpack.c.b16 %v1644, %v1643
  %v1652 = vpack.c.b16 %v1646, %v1645
  %v1653 = vpack.c.b16 %v1648, %v1647
  %v1654 = vpack.c.b16 %v1649, %v1649
  %v1660 = vsel %vm840, %v1614, 0
  %v1663 = vsel %vm840, %v1615, 0
  %v1666 = vsel %vm840, %v1616, 0
  %v1669 = vsel %vm840, %v1617, 0
  %v1672 = vsel %vm840, %v1618, 0
  %v1675 = vsel %vm840, %v1619, 0
  %v1678 = vsel %vm840, %v1620, 0
  %v1681 = vsel %vm840, %v1621, 0
  %v1684 = vand.u32 %v1654, %v867
  %1686 = vmatprep.subr.bf16.mxu0 0
  %1687 = vmatpush1.bf16.msra.mxu0 0
  %1688 = vmatprep.subr.bf16.mxu0 0
  %1689 = vmatpush1.bf16.msra.mxu0 0
  %1690 = vmatprep.subr.bf16.mxu0 0
  %1691 = vmatpush1.bf16.msra.mxu0 0
  %1692 = vmatprep.subr.bf16.mxu0 0
  %1693 = vmatpush1.bf16.msra.mxu0 %v1684
  %1694 = vmatprep.subr.bf16.mxu0 0
  %1695 = vmatpush1.bf16.msra.mxu0 %v1653
  %1696 = vmatprep.subr.bf16.mxu0 0
  %1697 = vmatpush1.bf16.msra.mxu0 %v1652
  %1698 = vmatprep.subr.bf16.mxu0 0
  %1699 = vmatpush1.bf16.msra.mxu0 %v1651
  %1700 = vmatprep.subr.bf16.mxu0 0
  %1701 = vmatpush1.bf16.msra.mxu0 %v1650
  %1702 = vmatprep.subr.bf16.mxu0 0
  %1703 = vmatpush2.bf16.msra.mxu0 0
  %1704 = vmatprep.subr.bf16.mxu0 0
  %1705 = vmatpush2.bf16.msra.mxu0 0
  %1706 = vmatprep.subr.bf16.mxu0 0
  %1707 = vmatpush2.bf16.msra.mxu0 0
  %1708 = vmatprep.subr.bf16.mxu0 0
  %1709 = vmatpush2.bf16.msra.mxu0 0
  %1710 = vmatprep.subr.bf16.mxu0 0
  %1711 = vmatpush2.bf16.msra.mxu0 0
  %1712 = vmatprep.subr.bf16.mxu0 0
  %1713 = vmatpush2.bf16.msra.mxu0 0
  %1714 = vmatprep.subr.bf16.mxu0 0
  %1715 = vmatpush2.bf16.msra.mxu0 0
  %1716 = vmatprep.subr.bf16.mxu0 0
  %1717 = vmatpush2.bf16.msra.mxu0 0
  %1718 = vmatprep.mubr.bf16.mxu0 0
  %1719 = vmatmul.mubr.bf16.gmra.mxu0 %v1660
  %v1720 = vpop.f32.mrf.mxu0
  %v1721 = vadd.f32 0.0, %v1720
  %v1722 = vpop.f32.mrf.mxu0
  %v1723 = vpop.f32.mrf.mxu0
  %v1724 = vadd.f32 0.0, %v1723
  %v1725 = vpop.f32.mrf.mxu0
  %1726 = vmatprep.mubr.bf16.mxu0 0
  %1727 = vmatmul.mubr.bf16.gmra.mxu0 %v1663
  %v1728 = vpop.f32.mrf.mxu0
  %v1729 = vadd.f32 0.0, %v1728
  %v1730 = vpop.f32.mrf.mxu0
  %v1731 = vpop.f32.mrf.mxu0
  %v1732 = vadd.f32 0.0, %v1731
  %v1733 = vpop.f32.mrf.mxu0
  %1734 = vmatprep.mubr.bf16.mxu0 0
  %1735 = vmatmul.mubr.bf16.gmra.mxu0 %v1666
  %v1736 = vpop.f32.mrf.mxu0
  %v1737 = vadd.f32 0.0, %v1736
  %v1738 = vpop.f32.mrf.mxu0
  %v1739 = vpop.f32.mrf.mxu0
  %v1740 = vadd.f32 0.0, %v1739
  %v1741 = vpop.f32.mrf.mxu0
  %1742 = vmatprep.mubr.bf16.mxu0 0
  %1743 = vmatmul.mubr.bf16.gmra.mxu0 %v1669
  %v1744 = vpop.f32.mrf.mxu0
  %v1745 = vadd.f32 0.0, %v1744
  %v1746 = vpop.f32.mrf.mxu0
  %v1747 = vpop.f32.mrf.mxu0
  %v1748 = vadd.f32 0.0, %v1747
  %v1749 = vpop.f32.mrf.mxu0
  %1750 = vmatprep.mubr.bf16.mxu0 0
  %1751 = vmatmul.mubr.bf16.gmra.mxu0 %v1672
  %v1752 = vpop.f32.mrf.mxu0
  %v1753 = vadd.f32 0.0, %v1752
  %v1754 = vpop.f32.mrf.mxu0
  %v1755 = vpop.f32.mrf.mxu0
  %v1756 = vadd.f32 0.0, %v1755
  %v1757 = vpop.f32.mrf.mxu0
  %1758 = vmatprep.mubr.bf16.mxu0 0
  %1759 = vmatmul.mubr.bf16.gmra.mxu0 %v1675
  %v1760 = vpop.f32.mrf.mxu0
  %v1761 = vadd.f32 0.0, %v1760
  %v1762 = vpop.f32.mrf.mxu0
  %v1763 = vpop.f32.mrf.mxu0
  %v1764 = vadd.f32 0.0, %v1763
  %v1765 = vpop.f32.mrf.mxu0
  %1766 = vmatprep.mubr.bf16.mxu0 0
  %1767 = vmatmul.mubr.bf16.gmra.mxu0 %v1678
  %v1768 = vpop.f32.mrf.mxu0
  %v1769 = vadd.f32 0.0, %v1768
  %v1770 = vpop.f32.mrf.mxu0
  %v1771 = vpop.f32.mrf.mxu0
  %v1772 = vadd.f32 0.0, %v1771
  %v1773 = vpop.f32.mrf.mxu0
  %1774 = vmatprep.mubr.bf16.mxu0 0
  %1775 = vmatmul.mubr.bf16.gmra.mxu0 %v1681
  %v1776 = vpop.f32.mrf.mxu0
  %v1777 = vadd.f32 0.0, %v1776
  %v1778 = vpop.f32.mrf.mxu0
  %v1779 = vpop.f32.mrf.mxu0
  %v1780 = vadd.f32 0.0, %v1779
  %v1781 = vpop.f32.mrf.mxu0
  %1782 = vdwg.mxu0
  %v1783 = vadd.f32 %v1518, %v1721
  %v1784 = vadd.f32 %v1519, %v1724
  %v1785 = vadd.f32 %v1520, %v1729
  %v1786 = vadd.f32 %v1521, %v1732
  %v1787 = vadd.f32 %v1522, %v1737
  %v1788 = vadd.f32 %v1523, %v1740
  %v1789 = vadd.f32 %v1524, %v1745
  %v1790 = vadd.f32 %v1525, %v1748
  %v1791 = vadd.f32 %v1526, %v1753
  %v1792 = vadd.f32 %v1527, %v1756
  %v1793 = vadd.f32 %v1528, %v1761
  %v1794 = vadd.f32 %v1529, %v1764
  %v1795 = vadd.f32 %v1530, %v1769
  %v1796 = vadd.f32 %v1531, %v1772
  %v1797 = vadd.f32 %v1532, %v1777
  %v1798 = vadd.f32 %v1533, %v1780
  %1799 = vset.pattern.permute.xlu0 2
  %1800 = vperm.xlu0 %1799, %v122
  %v1801 = vpop.permute.xlu0 %1800
  %1802 = vset.pattern.permute.xlu0 2
  %1803 = vperm.xlu0 %1802, %v123
  %v1804 = vpop.permute.xlu0 %1803
  %1805 = vset.pattern.permute.xlu0 2
  %1806 = vperm.xlu0 %1805, %v124
  %v1807 = vpop.permute.xlu0 %1806
  %1808 = vset.pattern.permute.xlu0 2
  %1809 = vperm.xlu0 %1808, %v125
  %v1810 = vpop.permute.xlu0 %1809
  %1811 = vset.pattern.permute.xlu0 2
  %1812 = vperm.xlu0 %1811, %v126
  %v1813 = vpop.permute.xlu0 %1812
  %1814 = vset.pattern.permute.xlu0 2
  %1815 = vperm.xlu0 %1814, %v127
  %v1816 = vpop.permute.xlu0 %1815
  %1817 = vset.pattern.permute.xlu0 2
  %1818 = vperm.xlu0 %1817, %v128
  %v1819 = vpop.permute.xlu0 %1818
  %1820 = vset.pattern.permute.xlu0 2
  %1821 = vperm.xlu0 %1820, %v129
  %v1822 = vpop.permute.xlu0 %1821
  %1823 = vset.pattern.permute.xlu0 2
  %1824 = vperm.xlu0 %1823, %v130
  %v1825 = vpop.permute.xlu0 %1824
  %1826 = vset.pattern.permute.xlu0 2
  %1827 = vperm.xlu0 %1826, %v131
  %v1828 = vpop.permute.xlu0 %1827
  %1829 = vset.pattern.permute.xlu0 2
  %1830 = vperm.xlu0 %1829, %v132
  %v1831 = vpop.permute.xlu0 %1830
  %1832 = vset.pattern.permute.xlu0 2
  %1833 = vperm.xlu0 %1832, %v133
  %v1834 = vpop.permute.xlu0 %1833
  %1835 = vset.pattern.permute.xlu0 2
  %1836 = vperm.xlu0 %1835, %v134
  %v1837 = vpop.permute.xlu0 %1836
  %1838 = vset.pattern.permute.xlu0 2
  %1839 = vperm.xlu0 %1838, %v135
  %v1840 = vpop.permute.xlu0 %1839
  %1841 = vset.pattern.permute.xlu0 2
  %1842 = vperm.xlu0 %1841, %v136
  %v1843 = vpop.permute.xlu0 %1842
  %1844 = vset.pattern.permute.xlu0 2
  %1845 = vperm.xlu0 %1844, %v137
  %v1846 = vpop.permute.xlu0 %1845
  %vm1847 = vcmp.eq.s32.totalorder %v203, %v1801
  %vm1848 = vcmp.eq.s32.totalorder %v203, %v1804
  %vm1849 = vcmp.eq.s32.totalorder %v203, %v1807
  %vm1850 = vcmp.eq.s32.totalorder %v203, %v1810
  %vm1851 = vcmp.eq.s32.totalorder %v203, %v1813
  %vm1852 = vcmp.eq.s32.totalorder %v203, %v1816
  %vm1853 = vcmp.eq.s32.totalorder %v203, %v1819
  %vm1854 = vcmp.eq.s32.totalorder %v203, %v1822
  %vm1855 = vcmp.eq.s32.totalorder %v203, %v1825
  %vm1856 = vcmp.eq.s32.totalorder %v203, %v1828
  %vm1857 = vcmp.eq.s32.totalorder %v203, %v1831
  %vm1858 = vcmp.eq.s32.totalorder %v203, %v1834
  %vm1859 = vcmp.eq.s32.totalorder %v203, %v1837
  %vm1860 = vcmp.eq.s32.totalorder %v203, %v1840
  %vm1861 = vcmp.eq.s32.totalorder %v203, %v1843
  %vm1862 = vcmp.eq.s32.totalorder %v203, %v1846
  %v1863 = vsel %vm1847, 1.0, 0.0
  %v1864 = vsel %vm1848, 1.0, 0.0
  %v1865 = vsel %vm1849, 1.0, 0.0
  %v1866 = vsel %vm1850, 1.0, 0.0
  %v1867 = vsel %vm1851, 1.0, 0.0
  %v1868 = vsel %vm1852, 1.0, 0.0
  %v1869 = vsel %vm1853, 1.0, 0.0
  %v1870 = vsel %vm1854, 1.0, 0.0
  %v1871 = vsel %vm1855, 1.0, 0.0
  %v1872 = vsel %vm1856, 1.0, 0.0
  %v1873 = vsel %vm1857, 1.0, 0.0
  %v1874 = vsel %vm1858, 1.0, 0.0
  %v1875 = vsel %vm1859, 1.0, 0.0
  %v1876 = vsel %vm1860, 1.0, 0.0
  %v1877 = vsel %vm1861, 1.0, 0.0
  %v1878 = vsel %vm1862, 1.0, 0.0
  %v1879 = vpack.c.bf16 %v1864, %v1863
  %v1880 = vpack.c.bf16 %v1866, %v1865
  %v1881 = vpack.c.bf16 %v1868, %v1867
  %v1882 = vpack.c.bf16 %v1870, %v1869
  %v1883 = vpack.c.bf16 %v1872, %v1871
  %v1884 = vpack.c.bf16 %v1874, %v1873
  %v1885 = vpack.c.bf16 %v1876, %v1875
  %v1886 = vpack.c.bf16 %v1878, %v1877
  %s1887 = scalar_lea.vmem %s11, 72
  %v1888 = vld [vmem:[%s1887] sm:$0xf]
  %v1889 = vld [vmem:[%s1887 + $0x4] sm:$0xf]
  %v1890 = vld [vmem:[%s1887 + $0x8] sm:$0xf]
  %v1891 = vld [vmem:[%s1887 + $0xc] sm:$0xf]
  %v1892 = vld [vmem:[%s1887 + $0x10] sm:$0xf]
  %v1893 = vld [vmem:[%s1887 + $0x14] sm:$0xf]
  %v1894 = vld [vmem:[%s1887 + $0x18] sm:$0xf]
  %v1895 = vld [vmem:[%s1887 + $0x1c] sm:$0xf]
  %v1896 = vld [vmem:[%s1887 + $0x20] sm:$0x1]
  %v1906 = vunpack.c.l.b16 %v1888
  %v1907 = vunpack.c.l.b16 %v1889
  %v1908 = vunpack.c.l.b16 %v1890
  %v1909 = vunpack.c.l.b16 %v1891
  %v1910 = vunpack.c.l.b16 %v1892
  %v1911 = vunpack.c.l.b16 %v1893
  %v1912 = vunpack.c.l.b16 %v1894
  %v1913 = vunpack.c.l.b16 %v1895
  %v1914 = vunpack.c.l.b16 %v1896
  %v1915 = vpack.c.b16 %v1907, %v1906
  %v1916 = vpack.c.b16 %v1909, %v1908
  %v1917 = vpack.c.b16 %v1911, %v1910
  %v1918 = vpack.c.b16 %v1913, %v1912
  %v1919 = vpack.c.b16 %v1914, %v1914
  %v1925 = vsel %vm840, %v1879, 0
  %v1928 = vsel %vm840, %v1880, 0
  %v1931 = vsel %vm840, %v1881, 0
  %v1934 = vsel %vm840, %v1882, 0
  %v1937 = vsel %vm840, %v1883, 0
  %v1940 = vsel %vm840, %v1884, 0
  %v1943 = vsel %vm840, %v1885, 0
  %v1946 = vsel %vm840, %v1886, 0
  %v1949 = vand.u32 %v1919, %v867
  %1951 = vmatprep.subr.bf16.mxu0 0
  %1952 = vmatpush1.bf16.msra.mxu0 0
  %1953 = vmatprep.subr.bf16.mxu0 0
  %1954 = vmatpush1.bf16.msra.mxu0 0
  %1955 = vmatprep.subr.bf16.mxu0 0
  %1956 = vmatpush1.bf16.msra.mxu0 0
  %1957 = vmatprep.subr.bf16.mxu0 0
  %1958 = vmatpush1.bf16.msra.mxu0 %v1949
  %1959 = vmatprep.subr.bf16.mxu0 0
  %1960 = vmatpush1.bf16.msra.mxu0 %v1918
  %1961 = vmatprep.subr.bf16.mxu0 0
  %1962 = vmatpush1.bf16.msra.mxu0 %v1917
  %1963 = vmatprep.subr.bf16.mxu0 0
  %1964 = vmatpush1.bf16.msra.mxu0 %v1916
  %1965 = vmatprep.subr.bf16.mxu0 0
  %1966 = vmatpush1.bf16.msra.mxu0 %v1915
  %1967 = vmatprep.subr.bf16.mxu0 0
  %1968 = vmatpush2.bf16.msra.mxu0 0
  %1969 = vmatprep.subr.bf16.mxu0 0
  %1970 = vmatpush2.bf16.msra.mxu0 0
  %1971 = vmatprep.subr.bf16.mxu0 0
  %1972 = vmatpush2.bf16.msra.mxu0 0
  %1973 = vmatprep.subr.bf16.mxu0 0
  %1974 = vmatpush2.bf16.msra.mxu0 0
  %1975 = vmatprep.subr.bf16.mxu0 0
  %1976 = vmatpush2.bf16.msra.mxu0 0
  %1977 = vmatprep.subr.bf16.mxu0 0
  %1978 = vmatpush2.bf16.msra.mxu0 0
  %1979 = vmatprep.subr.bf16.mxu0 0
  %1980 = vmatpush2.bf16.msra.mxu0 0
  %1981 = vmatprep.subr.bf16.mxu0 0
  %1982 = vmatpush2.bf16.msra.mxu0 0
  %1983 = vmatprep.mubr.bf16.mxu0 0
  %1984 = vmatmul.mubr.bf16.gmra.mxu0 %v1925
  %v1985 = vpop.f32.mrf.mxu0
  %v1986 = vadd.f32 0.0, %v1985
  %v1987 = vpop.f32.mrf.mxu0
  %v1988 = vpop.f32.mrf.mxu0
  %v1989 = vadd.f32 0.0, %v1988
  %v1990 = vpop.f32.mrf.mxu0
  %1991 = vmatprep.mubr.bf16.mxu0 0
  %1992 = vmatmul.mubr.bf16.gmra.mxu0 %v1928
  %v1993 = vpop.f32.mrf.mxu0
  %v1994 = vadd.f32 0.0, %v1993
  %v1995 = vpop.f32.mrf.mxu0
  %v1996 = vpop.f32.mrf.mxu0
  %v1997 = vadd.f32 0.0, %v1996
  %v1998 = vpop.f32.mrf.mxu0
  %1999 = vmatprep.mubr.bf16.mxu0 0
  %2000 = vmatmul.mubr.bf16.gmra.mxu0 %v1931
  %v2001 = vpop.f32.mrf.mxu0
  %v2002 = vadd.f32 0.0, %v2001
  %v2003 = vpop.f32.mrf.mxu0
  %v2004 = vpop.f32.mrf.mxu0
  %v2005 = vadd.f32 0.0, %v2004
  %v2006 = vpop.f32.mrf.mxu0
  %2007 = vmatprep.mubr.bf16.mxu0 0
  %2008 = vmatmul.mubr.bf16.gmra.mxu0 %v1934
  %v2009 = vpop.f32.mrf.mxu0
  %v2010 = vadd.f32 0.0, %v2009
  %v2011 = vpop.f32.mrf.mxu0
  %v2012 = vpop.f32.mrf.mxu0
  %v2013 = vadd.f32 0.0, %v2012
  %v2014 = vpop.f32.mrf.mxu0
  %2015 = vmatprep.mubr.bf16.mxu0 0
  %2016 = vmatmul.mubr.bf16.gmra.mxu0 %v1937
  %v2017 = vpop.f32.mrf.mxu0
  %v2018 = vadd.f32 0.0, %v2017
  %v2019 = vpop.f32.mrf.mxu0
  %v2020 = vpop.f32.mrf.mxu0
  %v2021 = vadd.f32 0.0, %v2020
  %v2022 = vpop.f32.mrf.mxu0
  %2023 = vmatprep.mubr.bf16.mxu0 0
  %2024 = vmatmul.mubr.bf16.gmra.mxu0 %v1940
  %v2025 = vpop.f32.mrf.mxu0
  %v2026 = vadd.f32 0.0, %v2025
  %v2027 = vpop.f32.mrf.mxu0
  %v2028 = vpop.f32.mrf.mxu0
  %v2029 = vadd.f32 0.0, %v2028
  %v2030 = vpop.f32.mrf.mxu0
  %2031 = vmatprep.mubr.bf16.mxu0 0
  %2032 = vmatmul.mubr.bf16.gmra.mxu0 %v1943
  %v2033 = vpop.f32.mrf.mxu0
  %v2034 = vadd.f32 0.0, %v2033
  %v2035 = vpop.f32.mrf.mxu0
  %v2036 = vpop.f32.mrf.mxu0
  %v2037 = vadd.f32 0.0, %v2036
  %v2038 = vpop.f32.mrf.mxu0
  %2039 = vmatprep.mubr.bf16.mxu0 0
  %2040 = vmatmul.mubr.bf16.gmra.mxu0 %v1946
  %v2041 = vpop.f32.mrf.mxu0
  %v2042 = vadd.f32 0.0, %v2041
  %v2043 = vpop.f32.mrf.mxu0
  %v2044 = vpop.f32.mrf.mxu0
  %v2045 = vadd.f32 0.0, %v2044
  %v2046 = vpop.f32.mrf.mxu0
  %2047 = vdwg.mxu0
  %v2048 = vadd.f32 %v1783, %v1986
  %v2049 = vadd.f32 %v1784, %v1989
  %v2050 = vadd.f32 %v1785, %v1994
  %v2051 = vadd.f32 %v1786, %v1997
  %v2052 = vadd.f32 %v1787, %v2002
  %v2053 = vadd.f32 %v1788, %v2005
  %v2054 = vadd.f32 %v1789, %v2010
  %v2055 = vadd.f32 %v1790, %v2013
  %v2056 = vadd.f32 %v1791, %v2018
  %v2057 = vadd.f32 %v1792, %v2021
  %v2058 = vadd.f32 %v1793, %v2026
  %v2059 = vadd.f32 %v1794, %v2029
  %v2060 = vadd.f32 %v1795, %v2034
  %v2061 = vadd.f32 %v1796, %v2037
  %v2062 = vadd.f32 %v1797, %v2042
  %v2063 = vadd.f32 %v1798, %v2045
  %2064 = vset.pattern.permute.xlu0 3
  %2065 = vperm.xlu0 %2064, %v122
  %v2066 = vpop.permute.xlu0 %2065
  %2067 = vset.pattern.permute.xlu0 3
  %2068 = vperm.xlu0 %2067, %v123
  %v2069 = vpop.permute.xlu0 %2068
  %2070 = vset.pattern.permute.xlu0 3
  %2071 = vperm.xlu0 %2070, %v124
  %v2072 = vpop.permute.xlu0 %2071
  %2073 = vset.pattern.permute.xlu0 3
  %2074 = vperm.xlu0 %2073, %v125
  %v2075 = vpop.permute.xlu0 %2074
  %2076 = vset.pattern.permute.xlu0 3
  %2077 = vperm.xlu0 %2076, %v126
  %v2078 = vpop.permute.xlu0 %2077
  %2079 = vset.pattern.permute.xlu0 3
  %2080 = vperm.xlu0 %2079, %v127
  %v2081 = vpop.permute.xlu0 %2080
  %2082 = vset.pattern.permute.xlu0 3
  %2083 = vperm.xlu0 %2082, %v128
  %v2084 = vpop.permute.xlu0 %2083
  %2085 = vset.pattern.permute.xlu0 3
  %2086 = vperm.xlu0 %2085, %v129
  %v2087 = vpop.permute.xlu0 %2086
  %2088 = vset.pattern.permute.xlu0 3
  %2089 = vperm.xlu0 %2088, %v130
  %v2090 = vpop.permute.xlu0 %2089
  %2091 = vset.pattern.permute.xlu0 3
  %2092 = vperm.xlu0 %2091, %v131
  %v2093 = vpop.permute.xlu0 %2092
  %2094 = vset.pattern.permute.xlu0 3
  %2095 = vperm.xlu0 %2094, %v132
  %v2096 = vpop.permute.xlu0 %2095
  %2097 = vset.pattern.permute.xlu0 3
  %2098 = vperm.xlu0 %2097, %v133
  %v2099 = vpop.permute.xlu0 %2098
  %2100 = vset.pattern.permute.xlu0 3
  %2101 = vperm.xlu0 %2100, %v134
  %v2102 = vpop.permute.xlu0 %2101
  %2103 = vset.pattern.permute.xlu0 3
  %2104 = vperm.xlu0 %2103, %v135
  %v2105 = vpop.permute.xlu0 %2104
  %2106 = vset.pattern.permute.xlu0 3
  %2107 = vperm.xlu0 %2106, %v136
  %v2108 = vpop.permute.xlu0 %2107
  %2109 = vset.pattern.permute.xlu0 3
  %2110 = vperm.xlu0 %2109, %v137
  %v2111 = vpop.permute.xlu0 %2110
  %vm2112 = vcmp.eq.s32.totalorder %v203, %v2066
  %vm2113 = vcmp.eq.s32.totalorder %v203, %v2069
  %vm2114 = vcmp.eq.s32.totalorder %v203, %v2072
  %vm2115 = vcmp.eq.s32.totalorder %v203, %v2075
  %vm2116 = vcmp.eq.s32.totalorder %v203, %v2078
  %vm2117 = vcmp.eq.s32.totalorder %v203, %v2081
  %vm2118 = vcmp.eq.s32.totalorder %v203, %v2084
  %vm2119 = vcmp.eq.s32.totalorder %v203, %v2087
  %vm2120 = vcmp.eq.s32.totalorder %v203, %v2090
  %vm2121 = vcmp.eq.s32.totalorder %v203, %v2093
  %vm2122 = vcmp.eq.s32.totalorder %v203, %v2096
  %vm2123 = vcmp.eq.s32.totalorder %v203, %v2099
  %vm2124 = vcmp.eq.s32.totalorder %v203, %v2102
  %vm2125 = vcmp.eq.s32.totalorder %v203, %v2105
  %vm2126 = vcmp.eq.s32.totalorder %v203, %v2108
  %vm2127 = vcmp.eq.s32.totalorder %v203, %v2111
  %v2128 = vsel %vm2112, 1.0, 0.0
  %v2129 = vsel %vm2113, 1.0, 0.0
  %v2130 = vsel %vm2114, 1.0, 0.0
  %v2131 = vsel %vm2115, 1.0, 0.0
  %v2132 = vsel %vm2116, 1.0, 0.0
  %v2133 = vsel %vm2117, 1.0, 0.0
  %v2134 = vsel %vm2118, 1.0, 0.0
  %v2135 = vsel %vm2119, 1.0, 0.0
  %v2136 = vsel %vm2120, 1.0, 0.0
  %v2137 = vsel %vm2121, 1.0, 0.0
  %v2138 = vsel %vm2122, 1.0, 0.0
  %v2139 = vsel %vm2123, 1.0, 0.0
  %v2140 = vsel %vm2124, 1.0, 0.0
  %v2141 = vsel %vm2125, 1.0, 0.0
  %v2142 = vsel %vm2126, 1.0, 0.0
  %v2143 = vsel %vm2127, 1.0, 0.0
  %v2144 = vpack.c.bf16 %v2129, %v2128
  %v2145 = vpack.c.bf16 %v2131, %v2130
  %v2146 = vpack.c.bf16 %v2133, %v2132
  %v2147 = vpack.c.bf16 %v2135, %v2134
  %v2148 = vpack.c.bf16 %v2137, %v2136
  %v2149 = vpack.c.bf16 %v2139, %v2138
  %v2150 = vpack.c.bf16 %v2141, %v2140
  %v2151 = vpack.c.bf16 %v2143, %v2142
  %s2152 = scalar_lea.vmem %s11, 108
  %v2153 = vld [vmem:[%s2152] sm:$0xf]
  %v2154 = vld [vmem:[%s2152 + $0x4] sm:$0xf]
  %v2155 = vld [vmem:[%s2152 + $0x8] sm:$0xf]
  %v2156 = vld [vmem:[%s2152 + $0xc] sm:$0xf]
  %v2157 = vld [vmem:[%s2152 + $0x10] sm:$0xf]
  %v2158 = vld [vmem:[%s2152 + $0x14] sm:$0xf]
  %v2159 = vld [vmem:[%s2152 + $0x18] sm:$0xf]
  %v2160 = vld [vmem:[%s2152 + $0x1c] sm:$0xf]
  %v2161 = vld [vmem:[%s2152 + $0x20] sm:$0x1]
  %v2171 = vunpack.c.l.b16 %v2153
  %v2172 = vunpack.c.l.b16 %v2154
  %v2173 = vunpack.c.l.b16 %v2155
  %v2174 = vunpack.c.l.b16 %v2156
  %v2175 = vunpack.c.l.b16 %v2157
  %v2176 = vunpack.c.l.b16 %v2158
  %v2177 = vunpack.c.l.b16 %v2159
  %v2178 = vunpack.c.l.b16 %v2160
  %v2179 = vunpack.c.l.b16 %v2161
  %v2180 = vpack.c.b16 %v2172, %v2171
  %v2181 = vpack.c.b16 %v2174, %v2173
  %v2182 = vpack.c.b16 %v2176, %v2175
  %v2183 = vpack.c.b16 %v2178, %v2177
  %v2184 = vpack.c.b16 %v2179, %v2179
  %v2190 = vsel %vm840, %v2144, 0
  %v2193 = vsel %vm840, %v2145, 0
  %v2196 = vsel %vm840, %v2146, 0
  %v2199 = vsel %vm840, %v2147, 0
  %v2202 = vsel %vm840, %v2148, 0
  %v2205 = vsel %vm840, %v2149, 0
  %v2208 = vsel %vm840, %v2150, 0
  %v2211 = vsel %vm840, %v2151, 0
  %v2214 = vand.u32 %v2184, %v867
  %2216 = vmatprep.subr.bf16.mxu0 0
  %2217 = vmatpush1.bf16.msra.mxu0 0
  %2218 = vmatprep.subr.bf16.mxu0 0
  %2219 = vmatpush1.bf16.msra.mxu0 0
  %2220 = vmatprep.subr.bf16.mxu0 0
  %2221 = vmatpush1.bf16.msra.mxu0 0
  %2222 = vmatprep.subr.bf16.mxu0 0
  %2223 = vmatpush1.bf16.msra.mxu0 %v2214
  %2224 = vmatprep.subr.bf16.mxu0 0
  %2225 = vmatpush1.bf16.msra.mxu0 %v2183
  %2226 = vmatprep.subr.bf16.mxu0 0
  %2227 = vmatpush1.bf16.msra.mxu0 %v2182
  %2228 = vmatprep.subr.bf16.mxu0 0
  %2229 = vmatpush1.bf16.msra.mxu0 %v2181
  %2230 = vmatprep.subr.bf16.mxu0 0
  %2231 = vmatpush1.bf16.msra.mxu0 %v2180
  %2232 = vmatprep.subr.bf16.mxu0 0
  %2233 = vmatpush2.bf16.msra.mxu0 0
  %2234 = vmatprep.subr.bf16.mxu0 0
  %2235 = vmatpush2.bf16.msra.mxu0 0
  %2236 = vmatprep.subr.bf16.mxu0 0
  %2237 = vmatpush2.bf16.msra.mxu0 0
  %2238 = vmatprep.subr.bf16.mxu0 0
  %2239 = vmatpush2.bf16.msra.mxu0 0
  %2240 = vmatprep.subr.bf16.mxu0 0
  %2241 = vmatpush2.bf16.msra.mxu0 0
  %2242 = vmatprep.subr.bf16.mxu0 0
  %2243 = vmatpush2.bf16.msra.mxu0 0
  %2244 = vmatprep.subr.bf16.mxu0 0
  %2245 = vmatpush2.bf16.msra.mxu0 0
  %2246 = vmatprep.subr.bf16.mxu0 0
  %2247 = vmatpush2.bf16.msra.mxu0 0
  %2248 = vmatprep.mubr.bf16.mxu0 0
  %2249 = vmatmul.mubr.bf16.gmra.mxu0 %v2190
  %v2250 = vpop.f32.mrf.mxu0
  %v2251 = vadd.f32 0.0, %v2250
  %v2252 = vpop.f32.mrf.mxu0
  %v2253 = vpop.f32.mrf.mxu0
  %v2254 = vadd.f32 0.0, %v2253
  %v2255 = vpop.f32.mrf.mxu0
  %2256 = vmatprep.mubr.bf16.mxu0 0
  %2257 = vmatmul.mubr.bf16.gmra.mxu0 %v2193
  %v2258 = vpop.f32.mrf.mxu0
  %v2259 = vadd.f32 0.0, %v2258
  %v2260 = vpop.f32.mrf.mxu0
  %v2261 = vpop.f32.mrf.mxu0
  %v2262 = vadd.f32 0.0, %v2261
  %v2263 = vpop.f32.mrf.mxu0
  %2264 = vmatprep.mubr.bf16.mxu0 0
  %2265 = vmatmul.mubr.bf16.gmra.mxu0 %v2196
  %v2266 = vpop.f32.mrf.mxu0
  %v2267 = vadd.f32 0.0, %v2266
  %v2268 = vpop.f32.mrf.mxu0
  %v2269 = vpop.f32.mrf.mxu0
  %v2270 = vadd.f32 0.0, %v2269
  %v2271 = vpop.f32.mrf.mxu0
  %2272 = vmatprep.mubr.bf16.mxu0 0
  %2273 = vmatmul.mubr.bf16.gmra.mxu0 %v2199
  %v2274 = vpop.f32.mrf.mxu0
  %v2275 = vadd.f32 0.0, %v2274
  %v2276 = vpop.f32.mrf.mxu0
  %v2277 = vpop.f32.mrf.mxu0
  %v2278 = vadd.f32 0.0, %v2277
  %v2279 = vpop.f32.mrf.mxu0
  %2280 = vmatprep.mubr.bf16.mxu0 0
  %2281 = vmatmul.mubr.bf16.gmra.mxu0 %v2202
  %v2282 = vpop.f32.mrf.mxu0
  %v2283 = vadd.f32 0.0, %v2282
  %v2284 = vpop.f32.mrf.mxu0
  %v2285 = vpop.f32.mrf.mxu0
  %v2286 = vadd.f32 0.0, %v2285
  %v2287 = vpop.f32.mrf.mxu0
  %2288 = vmatprep.mubr.bf16.mxu0 0
  %2289 = vmatmul.mubr.bf16.gmra.mxu0 %v2205
  %v2290 = vpop.f32.mrf.mxu0
  %v2291 = vadd.f32 0.0, %v2290
  %v2292 = vpop.f32.mrf.mxu0
  %v2293 = vpop.f32.mrf.mxu0
  %v2294 = vadd.f32 0.0, %v2293
  %v2295 = vpop.f32.mrf.mxu0
  %2296 = vmatprep.mubr.bf16.mxu0 0
  %2297 = vmatmul.mubr.bf16.gmra.mxu0 %v2208
  %v2298 = vpop.f32.mrf.mxu0
  %v2299 = vadd.f32 0.0, %v2298
  %v2300 = vpop.f32.mrf.mxu0
  %v2301 = vpop.f32.mrf.mxu0
  %v2302 = vadd.f32 0.0, %v2301
  %v2303 = vpop.f32.mrf.mxu0
  %2304 = vmatprep.mubr.bf16.mxu0 0
  %2305 = vmatmul.mubr.bf16.gmra.mxu0 %v2211
  %v2306 = vpop.f32.mrf.mxu0
  %v2307 = vadd.f32 0.0, %v2306
  %v2308 = vpop.f32.mrf.mxu0
  %v2309 = vpop.f32.mrf.mxu0
  %v2310 = vadd.f32 0.0, %v2309
  %v2311 = vpop.f32.mrf.mxu0
  %2312 = vdwg.mxu0
  %v2313 = vadd.f32 %v2048, %v2251
  %v2314 = vadd.f32 %v2049, %v2254
  %v2315 = vadd.f32 %v2050, %v2259
  %v2316 = vadd.f32 %v2051, %v2262
  %v2317 = vadd.f32 %v2052, %v2267
  %v2318 = vadd.f32 %v2053, %v2270
  %v2319 = vadd.f32 %v2054, %v2275
  %v2320 = vadd.f32 %v2055, %v2278
  %v2321 = vadd.f32 %v2056, %v2283
  %v2322 = vadd.f32 %v2057, %v2286
  %v2323 = vadd.f32 %v2058, %v2291
  %v2324 = vadd.f32 %v2059, %v2294
  %v2325 = vadd.f32 %v2060, %v2299
  %v2326 = vadd.f32 %v2061, %v2302
  %v2327 = vadd.f32 %v2062, %v2307
  %v2328 = vadd.f32 %v2063, %v2310
  %v2329 = vmax.f32 %v2313, 0.0
  %v2330 = vmax.f32 %v2314, 0.0
  %v2331 = vmax.f32 %v2315, 0.0
  %v2332 = vmax.f32 %v2316, 0.0
  %v2333 = vmax.f32 %v2317, 0.0
  %v2334 = vmax.f32 %v2318, 0.0
  %v2335 = vmax.f32 %v2319, 0.0
  %v2336 = vmax.f32 %v2320, 0.0
  %v2337 = vmax.f32 %v2321, 0.0
  %v2338 = vmax.f32 %v2322, 0.0
  %v2339 = vmax.f32 %v2323, 0.0
  %v2340 = vmax.f32 %v2324, 0.0
  %v2341 = vmax.f32 %v2325, 0.0
  %v2342 = vmax.f32 %v2326, 0.0
  %v2343 = vmax.f32 %v2327, 0.0
  %v2344 = vmax.f32 %v2328, 0.0
  %v2345 = vpack.c.bf16 %v2330, %v2329
  %v2346 = vpack.c.bf16 %v2332, %v2331
  %v2347 = vpack.c.bf16 %v2334, %v2333
  %v2348 = vpack.c.bf16 %v2336, %v2335
  %v2349 = vpack.c.bf16 %v2338, %v2337
  %v2350 = vpack.c.bf16 %v2340, %v2339
  %v2351 = vpack.c.bf16 %v2342, %v2341
  %v2352 = vpack.c.bf16 %v2344, %v2343
  %v2353 = vld [vmem:[%s19] sm:$0xf]
  %v2354 = vld [vmem:[%s19 + $0x4] sm:$0xf]
  %v2355 = vld [vmem:[%s19 + $0x8] sm:$0xf]
  %v2356 = vld [vmem:[%s19 + $0xc] sm:$0xf]
  %v2357 = vld [vmem:[%s21] sm:$0x1]
  %v2359 = vlaneseq
  %v2360 = vshrl.u32 %v2359, 7
  %v2361 = vsub.s32 0, %v2360
  %v2362 = vrot.slane %v2357, %v2361
  %v2368 = vunpack.c.l.b16 %v2353
  %v2369 = vunpack.c.l.b16 %v2354
  %v2370 = vunpack.c.l.b16 %v2355
  %v2371 = vunpack.c.l.b16 %v2356
  %v2372 = vpack.c.b16 %v2369, %v2368
  %v2373 = vpack.c.b16 %v2371, %v2370
  %vm2376 = vcmask 261120
  %v2378 = vsel %vm2376, %v2345, 0
  %v2381 = vsel %vm2376, %v2346, 0
  %v2384 = vsel %vm2376, %v2347, 0
  %v2387 = vsel %vm2376, %v2348, 0
  %v2390 = vsel %vm2376, %v2349, 0
  %v2393 = vsel %vm2376, %v2350, 0
  %v2396 = vsel %vm2376, %v2351, 0
  %v2399 = vsel %vm2376, %v2352, 0
  %2401 = vmatprep.subr.bf16.mxu0 0
  %2402 = vmatpush1.bf16.msra.mxu0 0
  %2403 = vmatprep.subr.bf16.mxu0 0
  %2404 = vmatpush1.bf16.msra.mxu0 0
  %2405 = vmatprep.subr.bf16.mxu0 0
  %2406 = vmatpush1.bf16.msra.mxu0 0
  %2407 = vmatprep.subr.bf16.mxu0 0
  %2408 = vmatpush1.bf16.msra.mxu0 0
  %2409 = vmatprep.subr.bf16.mxu0 0
  %2410 = vmatpush1.bf16.msra.mxu0 0
  %2411 = vmatprep.subr.bf16.mxu0 0
  %2412 = vmatpush1.bf16.msra.mxu0 0
  %2413 = vmatprep.subr.bf16.mxu0 0
  %2414 = vmatpush1.bf16.msra.mxu0 %v2373
  %2415 = vmatprep.subr.bf16.mxu0 0
  %2416 = vmatpush1.bf16.msra.mxu0 %v2372
  %2417 = vmatprep.subr.bf16.mxu0 0
  %2418 = vmatpush2.bf16.msra.mxu0 0
  %2419 = vmatprep.subr.bf16.mxu0 0
  %2420 = vmatpush2.bf16.msra.mxu0 0
  %2421 = vmatprep.subr.bf16.mxu0 0
  %2422 = vmatpush2.bf16.msra.mxu0 0
  %2423 = vmatprep.subr.bf16.mxu0 0
  %2424 = vmatpush2.bf16.msra.mxu0 0
  %2425 = vmatprep.subr.bf16.mxu0 0
  %2426 = vmatpush2.bf16.msra.mxu0 0
  %2427 = vmatprep.subr.bf16.mxu0 0
  %2428 = vmatpush2.bf16.msra.mxu0 0
  %2429 = vmatprep.subr.bf16.mxu0 0
  %2430 = vmatpush2.bf16.msra.mxu0 0
  %2431 = vmatprep.subr.bf16.mxu0 0
  %2432 = vmatpush2.bf16.msra.mxu0 0
  %2433 = vmatprep.mubr.bf16.mxu0 0
  %2434 = vmatmul.mubr.bf16.gmra.mxu0 %v2378
  %v2435 = vpop.f32.mrf.mxu0
  %v2436 = vadd.f32 %v2362, %v2435
  %v2437 = vpop.f32.mrf.mxu0
  %v2438 = vpop.f32.mrf.mxu0
  %v2439 = vadd.f32 %v2362, %v2438
  %v2440 = vpop.f32.mrf.mxu0
  %2441 = vmatprep.mubr.bf16.mxu0 0
  %2442 = vmatmul.mubr.bf16.gmra.mxu0 %v2381
  %v2443 = vpop.f32.mrf.mxu0
  %v2444 = vadd.f32 %v2362, %v2443
  %v2445 = vpop.f32.mrf.mxu0
  %v2446 = vpop.f32.mrf.mxu0
  %v2447 = vadd.f32 %v2362, %v2446
  %v2448 = vpop.f32.mrf.mxu0
  %2449 = vmatprep.mubr.bf16.mxu0 0
  %2450 = vmatmul.mubr.bf16.gmra.mxu0 %v2384
  %v2451 = vpop.f32.mrf.mxu0
  %v2452 = vadd.f32 %v2362, %v2451
  %v2453 = vpop.f32.mrf.mxu0
  %v2454 = vpop.f32.mrf.mxu0
  %v2455 = vadd.f32 %v2362, %v2454
  %v2456 = vpop.f32.mrf.mxu0
  %2457 = vmatprep.mubr.bf16.mxu0 0
  %2458 = vmatmul.mubr.bf16.gmra.mxu0 %v2387
  %v2459 = vpop.f32.mrf.mxu0
  %v2460 = vadd.f32 %v2362, %v2459
  %v2461 = vpop.f32.mrf.mxu0
  %v2462 = vpop.f32.mrf.mxu0
  %v2463 = vadd.f32 %v2362, %v2462
  %v2464 = vpop.f32.mrf.mxu0
  %2465 = vmatprep.mubr.bf16.mxu0 0
  %2466 = vmatmul.mubr.bf16.gmra.mxu0 %v2390
  %v2467 = vpop.f32.mrf.mxu0
  %v2468 = vadd.f32 %v2362, %v2467
  %v2469 = vpop.f32.mrf.mxu0
  %v2470 = vpop.f32.mrf.mxu0
  %v2471 = vadd.f32 %v2362, %v2470
  %v2472 = vpop.f32.mrf.mxu0
  %2473 = vmatprep.mubr.bf16.mxu0 0
  %2474 = vmatmul.mubr.bf16.gmra.mxu0 %v2393
  %v2475 = vpop.f32.mrf.mxu0
  %v2476 = vadd.f32 %v2362, %v2475
  %v2477 = vpop.f32.mrf.mxu0
  %v2478 = vpop.f32.mrf.mxu0
  %v2479 = vadd.f32 %v2362, %v2478
  %v2480 = vpop.f32.mrf.mxu0
  %2481 = vmatprep.mubr.bf16.mxu0 0
  %2482 = vmatmul.mubr.bf16.gmra.mxu0 %v2396
  %v2483 = vpop.f32.mrf.mxu0
  %v2484 = vadd.f32 %v2362, %v2483
  %v2485 = vpop.f32.mrf.mxu0
  %v2486 = vpop.f32.mrf.mxu0
  %v2487 = vadd.f32 %v2362, %v2486
  %v2488 = vpop.f32.mrf.mxu0
  %2489 = vmatprep.mubr.bf16.mxu0 0
  %2490 = vmatmul.mubr.bf16.gmra.mxu0 %v2399
  %v2491 = vpop.f32.mrf.mxu0
  %v2492 = vadd.f32 %v2362, %v2491
  %v2493 = vpop.f32.mrf.mxu0
  %v2494 = vpop.f32.mrf.mxu0
  %v2495 = vadd.f32 %v2362, %v2494
  %v2496 = vpop.f32.mrf.mxu0
  %2497 = vdwg.mxu0
  %v2498 = vld [vmem:[%s23] sm:$0xf]
  %v2499 = vld [vmem:[%s23 + $0x4] sm:$0xf]
  %v2500 = vld [vmem:[%s23 + $0x8] sm:$0xf]
  %v2501 = vld [vmem:[%s23 + $0xc] sm:$0xf]
  %v2502 = vld [vmem:[%s25] sm:$0x1]
  %v2504 = vlaneseq
  %v2505 = vshrl.u32 %v2504, 7
  %v2506 = vsub.s32 0, %v2505
  %v2507 = vrot.slane %v2502, %v2506
  %v2513 = vunpack.c.l.b16 %v2498
  %v2514 = vunpack.c.l.b16 %v2499
  %v2515 = vunpack.c.l.b16 %v2500
  %v2516 = vunpack.c.l.b16 %v2501
  %v2517 = vpack.c.b16 %v2514, %v2513
  %v2518 = vpack.c.b16 %v2516, %v2515
  %2521 = vmatprep.subr.bf16.mxu0 0
  %2522 = vmatpush1.bf16.msra.mxu0 0
  %2523 = vmatprep.subr.bf16.mxu0 0
  %2524 = vmatpush1.bf16.msra.mxu0 0
  %2525 = vmatprep.subr.bf16.mxu0 0
  %2526 = vmatpush1.bf16.msra.mxu0 0
  %2527 = vmatprep.subr.bf16.mxu0 0
  %2528 = vmatpush1.bf16.msra.mxu0 0
  %2529 = vmatprep.subr.bf16.mxu0 0
  %2530 = vmatpush1.bf16.msra.mxu0 0
  %2531 = vmatprep.subr.bf16.mxu0 0
  %2532 = vmatpush1.bf16.msra.mxu0 0
  %2533 = vmatprep.subr.bf16.mxu0 0
  %2534 = vmatpush1.bf16.msra.mxu0 %v2518
  %2535 = vmatprep.subr.bf16.mxu0 0
  %2536 = vmatpush1.bf16.msra.mxu0 %v2517
  %2537 = vmatprep.subr.bf16.mxu0 0
  %2538 = vmatpush2.bf16.msra.mxu0 0
  %2539 = vmatprep.subr.bf16.mxu0 0
  %2540 = vmatpush2.bf16.msra.mxu0 0
  %2541 = vmatprep.subr.bf16.mxu0 0
  %2542 = vmatpush2.bf16.msra.mxu0 0
  %2543 = vmatprep.subr.bf16.mxu0 0
  %2544 = vmatpush2.bf16.msra.mxu0 0
  %2545 = vmatprep.subr.bf16.mxu0 0
  %2546 = vmatpush2.bf16.msra.mxu0 0
  %2547 = vmatprep.subr.bf16.mxu0 0
  %2548 = vmatpush2.bf16.msra.mxu0 0
  %2549 = vmatprep.subr.bf16.mxu0 0
  %2550 = vmatpush2.bf16.msra.mxu0 0
  %2551 = vmatprep.subr.bf16.mxu0 0
  %2552 = vmatpush2.bf16.msra.mxu0 0
  %2553 = vmatprep.mubr.bf16.mxu0 0
  %2554 = vmatmul.mubr.bf16.gmra.mxu0 %v2378
  %v2555 = vpop.f32.mrf.mxu0
  %v2556 = vadd.f32 %v2507, %v2555
  %v2557 = vpop.f32.mrf.mxu0
  %v2558 = vpop.f32.mrf.mxu0
  %v2559 = vadd.f32 %v2507, %v2558
  %v2560 = vpop.f32.mrf.mxu0
  %2561 = vmatprep.mubr.bf16.mxu0 0
  %2562 = vmatmul.mubr.bf16.gmra.mxu0 %v2381
  %v2563 = vpop.f32.mrf.mxu0
  %v2564 = vadd.f32 %v2507, %v2563
  %v2565 = vpop.f32.mrf.mxu0
  %v2566 = vpop.f32.mrf.mxu0
  %v2567 = vadd.f32 %v2507, %v2566
  %v2568 = vpop.f32.mrf.mxu0
  %2569 = vmatprep.mubr.bf16.mxu0 0
  %2570 = vmatmul.mubr.bf16.gmra.mxu0 %v2384
  %v2571 = vpop.f32.mrf.mxu0
  %v2572 = vadd.f32 %v2507, %v2571
  %v2573 = vpop.f32.mrf.mxu0
  %v2574 = vpop.f32.mrf.mxu0
  %v2575 = vadd.f32 %v2507, %v2574
  %v2576 = vpop.f32.mrf.mxu0
  %2577 = vmatprep.mubr.bf16.mxu0 0
  %2578 = vmatmul.mubr.bf16.gmra.mxu0 %v2387
  %v2579 = vpop.f32.mrf.mxu0
  %v2580 = vadd.f32 %v2507, %v2579
  %v2581 = vpop.f32.mrf.mxu0
  %v2582 = vpop.f32.mrf.mxu0
  %v2583 = vadd.f32 %v2507, %v2582
  %v2584 = vpop.f32.mrf.mxu0
  %2585 = vmatprep.mubr.bf16.mxu0 0
  %2586 = vmatmul.mubr.bf16.gmra.mxu0 %v2390
  %v2587 = vpop.f32.mrf.mxu0
  %v2588 = vadd.f32 %v2507, %v2587
  %v2589 = vpop.f32.mrf.mxu0
  %v2590 = vpop.f32.mrf.mxu0
  %v2591 = vadd.f32 %v2507, %v2590
  %v2592 = vpop.f32.mrf.mxu0
  %2593 = vmatprep.mubr.bf16.mxu0 0
  %2594 = vmatmul.mubr.bf16.gmra.mxu0 %v2393
  %v2595 = vpop.f32.mrf.mxu0
  %v2596 = vadd.f32 %v2507, %v2595
  %v2597 = vpop.f32.mrf.mxu0
  %v2598 = vpop.f32.mrf.mxu0
  %v2599 = vadd.f32 %v2507, %v2598
  %v2600 = vpop.f32.mrf.mxu0
  %2601 = vmatprep.mubr.bf16.mxu0 0
  %2602 = vmatmul.mubr.bf16.gmra.mxu0 %v2396
  %v2603 = vpop.f32.mrf.mxu0
  %v2604 = vadd.f32 %v2507, %v2603
  %v2605 = vpop.f32.mrf.mxu0
  %v2606 = vpop.f32.mrf.mxu0
  %v2607 = vadd.f32 %v2507, %v2606
  %v2608 = vpop.f32.mrf.mxu0
  %2609 = vmatprep.mubr.bf16.mxu0 0
  %2610 = vmatmul.mubr.bf16.gmra.mxu0 %v2399
  %v2611 = vpop.f32.mrf.mxu0
  %v2612 = vadd.f32 %v2507, %v2611
  %v2613 = vpop.f32.mrf.mxu0
  %v2614 = vpop.f32.mrf.mxu0
  %v2615 = vadd.f32 %v2507, %v2614
  %v2616 = vpop.f32.mrf.mxu0
  %2617 = vdwg.mxu0
  %v2618 = vmul.f32 %v2556, 0.5
  %v2619 = vmul.f32 %v2559, 0.5
  %v2620 = vmul.f32 %v2564, 0.5
  %v2621 = vmul.f32 %v2567, 0.5
  %v2622 = vmul.f32 %v2572, 0.5
  %v2623 = vmul.f32 %v2575, 0.5
  %v2624 = vmul.f32 %v2580, 0.5
  %v2625 = vmul.f32 %v2583, 0.5
  %v2626 = vmul.f32 %v2588, 0.5
  %v2627 = vmul.f32 %v2591, 0.5
  %v2628 = vmul.f32 %v2596, 0.5
  %v2629 = vmul.f32 %v2599, 0.5
  %v2630 = vmul.f32 %v2604, 0.5
  %v2631 = vmul.f32 %v2607, 0.5
  %v2632 = vmul.f32 %v2612, 0.5
  %v2633 = vmul.f32 %v2615, 0.5
  %v2634 = vmul.f32 %v2618, 1.442695
  %v2635 = vpow.pop %v2634
  %v2636 = vmul.f32 %v2619, 1.442695
  %v2637 = vpow.pop %v2636
  %v2638 = vmul.f32 %v2620, 1.442695
  %v2639 = vpow.pop %v2638
  %v2640 = vmul.f32 %v2621, 1.442695
  %v2641 = vpow.pop %v2640
  %v2642 = vmul.f32 %v2622, 1.442695
  %v2643 = vpow.pop %v2642
  %v2644 = vmul.f32 %v2623, 1.442695
  %v2645 = vpow.pop %v2644
  %v2646 = vmul.f32 %v2624, 1.442695
  %v2647 = vpow.pop %v2646
  %v2648 = vmul.f32 %v2625, 1.442695
  %v2649 = vpow.pop %v2648
  %v2650 = vmul.f32 %v2626, 1.442695
  %v2651 = vpow.pop %v2650
  %v2652 = vmul.f32 %v2627, 1.442695
  %v2653 = vpow.pop %v2652
  %v2654 = vmul.f32 %v2628, 1.442695
  %v2655 = vpow.pop %v2654
  %v2656 = vmul.f32 %v2629, 1.442695
  %v2657 = vpow.pop %v2656
  %v2658 = vmul.f32 %v2630, 1.442695
  %v2659 = vpow.pop %v2658
  %v2660 = vmul.f32 %v2631, 1.442695
  %v2661 = vpow.pop %v2660
  %v2662 = vmul.f32 %v2632, 1.442695
  %v2663 = vpow.pop %v2662
  %v2664 = vmul.f32 %v2633, 1.442695
  %v2665 = vpow.pop %v2664
  %v2666 = vmul.f32 %v186, %v2635
  %v2667 = vmul.f32 %v187, %v2637
  %v2668 = vmul.f32 %v188, %v2639
  %v2669 = vmul.f32 %v189, %v2641
  %v2670 = vmul.f32 %v190, %v2643
  %v2671 = vmul.f32 %v191, %v2645
  %v2672 = vmul.f32 %v192, %v2647
  %v2673 = vmul.f32 %v193, %v2649
  %v2674 = vmul.f32 %v194, %v2651
  %v2675 = vmul.f32 %v195, %v2653
  %v2676 = vmul.f32 %v196, %v2655
  %v2677 = vmul.f32 %v197, %v2657
  %v2678 = vmul.f32 %v198, %v2659
  %v2679 = vmul.f32 %v199, %v2661
  %v2680 = vmul.f32 %v200, %v2663
  %v2681 = vmul.f32 %v201, %v2665
  %v2682 = vadd.f32 %v2436, %v2666
  %v2683 = vadd.f32 %v2439, %v2667
  %v2684 = vadd.f32 %v2444, %v2668
  %v2685 = vadd.f32 %v2447, %v2669
  %v2686 = vadd.f32 %v2452, %v2670
  %v2687 = vadd.f32 %v2455, %v2671
  %v2688 = vadd.f32 %v2460, %v2672
  %v2689 = vadd.f32 %v2463, %v2673
  %v2690 = vadd.f32 %v2468, %v2674
  %v2691 = vadd.f32 %v2471, %v2675
  %v2692 = vadd.f32 %v2476, %v2676
  %v2693 = vadd.f32 %v2479, %v2677
  %v2694 = vadd.f32 %v2484, %v2678
  %v2695 = vadd.f32 %v2487, %v2679
  %v2696 = vadd.f32 %v2492, %v2680
  %v2697 = vadd.f32 %v2495, %v2681
  %v2698 = vpack.c.bf16 %v2683, %v2682
  %v2699 = vpack.c.bf16 %v2685, %v2684
  %v2700 = vpack.c.bf16 %v2687, %v2686
  %v2701 = vpack.c.bf16 %v2689, %v2688
  %v2702 = vpack.c.bf16 %v2691, %v2690
  %v2703 = vpack.c.bf16 %v2693, %v2692
  %v2704 = vpack.c.bf16 %v2695, %v2694
  %v2705 = vpack.c.bf16 %v2697, %v2696
  %v2706 = vld [vmem:[%s27] sm:$0xf]
  %v2707 = vld [vmem:[%s27 + $0x4] sm:$0xf]
  %v2708 = vld [vmem:[%s29] sm:$0xf]
  %v2709 = vld [vmem:[%s29 + $0x4] sm:$0xf]
  %v2710 = vld [vmem:[%s29 + $0x8] sm:$0xf]
  %v2711 = vld [vmem:[%s29 + $0xc] sm:$0xf]
  %v2712 = vld [vmem:[%s29 + $0x10] sm:$0xf]
  %v2713 = vld [vmem:[%s29 + $0x14] sm:$0xf]
  %v2714 = vld [vmem:[%s29 + $0x18] sm:$0xf]
  %v2715 = vld [vmem:[%s29 + $0x1c] sm:$0xf]
  %v2716 = vld [vmem:[%s29 + $0x20] sm:$0x1]
  %v2726 = vunpack.c.l.b16 %v2708
  %v2727 = vunpack.c.l.b16 %v2709
  %v2728 = vunpack.c.l.b16 %v2710
  %v2729 = vunpack.c.l.b16 %v2711
  %v2730 = vunpack.c.l.b16 %v2712
  %v2731 = vunpack.c.l.b16 %v2713
  %v2732 = vunpack.c.l.b16 %v2714
  %v2733 = vunpack.c.l.b16 %v2715
  %v2734 = vunpack.c.l.b16 %v2716
  %v2735 = vpack.c.b16 %v2727, %v2726
  %v2736 = vpack.c.b16 %v2729, %v2728
  %v2737 = vpack.c.b16 %v2731, %v2730
  %v2738 = vpack.c.b16 %v2733, %v2732
  %v2739 = vpack.c.b16 %v2734, %v2734
  %v2745 = vand.u32 %v2739, %v867
  %2747 = vmatprep.subr.bf16.mxu0 0
  %2748 = vmatpush1.bf16.msra.mxu0 0
  %2749 = vmatprep.subr.bf16.mxu0 0
  %2750 = vmatpush1.bf16.msra.mxu0 0
  %2751 = vmatprep.subr.bf16.mxu0 0
  %2752 = vmatpush1.bf16.msra.mxu0 0
  %2753 = vmatprep.subr.bf16.mxu0 0
  %2754 = vmatpush1.bf16.msra.mxu0 %v2745
  %2755 = vmatprep.subr.bf16.mxu0 0
  %2756 = vmatpush1.bf16.msra.mxu0 %v2738
  %2757 = vmatprep.subr.bf16.mxu0 0
  %2758 = vmatpush1.bf16.msra.mxu0 %v2737
  %2759 = vmatprep.subr.bf16.mxu0 0
  %2760 = vmatpush1.bf16.msra.mxu0 %v2736
  %2761 = vmatprep.subr.bf16.mxu0 0
  %2762 = vmatpush1.bf16.msra.mxu0 %v2735
  %2763 = vmatprep.subr.bf16.mxu0 0
  %2764 = vmatpush2.bf16.msra.mxu0 0
  %2765 = vmatprep.subr.bf16.mxu0 0
  %2766 = vmatpush2.bf16.msra.mxu0 0
  %2767 = vmatprep.subr.bf16.mxu0 0
  %2768 = vmatpush2.bf16.msra.mxu0 0
  %2769 = vmatprep.subr.bf16.mxu0 0
  %2770 = vmatpush2.bf16.msra.mxu0 0
  %2771 = vmatprep.subr.bf16.mxu0 0
  %2772 = vmatpush2.bf16.msra.mxu0 0
  %2773 = vmatprep.subr.bf16.mxu0 0
  %2774 = vmatpush2.bf16.msra.mxu0 0
  %2775 = vmatprep.subr.bf16.mxu0 0
  %2776 = vmatpush2.bf16.msra.mxu0 0
  %2777 = vmatprep.subr.bf16.mxu0 0
  %2778 = vmatpush2.bf16.msra.mxu0 0
  %2779 = vmatprep.mubr.bf16.mxu0 0
  %2780 = vmatmul.mubr.bf16.gmra.mxu0 %v842
  %v2781 = vpop.f32.mrf.mxu0
  %v2782 = vadd.f32 0.0, %v2781
  %v2783 = vpop.f32.mrf.mxu0
  %v2784 = vpop.f32.mrf.mxu0
  %v2785 = vadd.f32 0.0, %v2784
  %v2786 = vpop.f32.mrf.mxu0
  %2787 = vmatprep.mubr.bf16.mxu0 0
  %2788 = vmatmul.mubr.bf16.gmra.mxu0 %v845
  %v2789 = vpop.f32.mrf.mxu0
  %v2790 = vadd.f32 0.0, %v2789
  %v2791 = vpop.f32.mrf.mxu0
  %v2792 = vpop.f32.mrf.mxu0
  %v2793 = vadd.f32 0.0, %v2792
  %v2794 = vpop.f32.mrf.mxu0
  %2795 = vmatprep.mubr.bf16.mxu0 0
  %2796 = vmatmul.mubr.bf16.gmra.mxu0 %v848
  %v2797 = vpop.f32.mrf.mxu0
  %v2798 = vadd.f32 0.0, %v2797
  %v2799 = vpop.f32.mrf.mxu0
  %v2800 = vpop.f32.mrf.mxu0
  %v2801 = vadd.f32 0.0, %v2800
  %v2802 = vpop.f32.mrf.mxu0
  %2803 = vmatprep.mubr.bf16.mxu0 0
  %2804 = vmatmul.mubr.bf16.gmra.mxu0 %v851
  %v2805 = vpop.f32.mrf.mxu0
  %v2806 = vadd.f32 0.0, %v2805
  %v2807 = vpop.f32.mrf.mxu0
  %v2808 = vpop.f32.mrf.mxu0
  %v2809 = vadd.f32 0.0, %v2808
  %v2810 = vpop.f32.mrf.mxu0
  %2811 = vmatprep.mubr.bf16.mxu0 0
  %2812 = vmatmul.mubr.bf16.gmra.mxu0 %v854
  %v2813 = vpop.f32.mrf.mxu0
  %v2814 = vadd.f32 0.0, %v2813
  %v2815 = vpop.f32.mrf.mxu0
  %v2816 = vpop.f32.mrf.mxu0
  %v2817 = vadd.f32 0.0, %v2816
  %v2818 = vpop.f32.mrf.mxu0
  %2819 = vmatprep.mubr.bf16.mxu0 0
  %2820 = vmatmul.mubr.bf16.gmra.mxu0 %v857
  %v2821 = vpop.f32.mrf.mxu0
  %v2822 = vadd.f32 0.0, %v2821
  %v2823 = vpop.f32.mrf.mxu0
  %v2824 = vpop.f32.mrf.mxu0
  %v2825 = vadd.f32 0.0, %v2824
  %v2826 = vpop.f32.mrf.mxu0
  %2827 = vmatprep.mubr.bf16.mxu0 0
  %2828 = vmatmul.mubr.bf16.gmra.mxu0 %v860
  %v2829 = vpop.f32.mrf.mxu0
  %v2830 = vadd.f32 0.0, %v2829
  %v2831 = vpop.f32.mrf.mxu0
  %v2832 = vpop.f32.mrf.mxu0
  %v2833 = vadd.f32 0.0, %v2832
  %v2834 = vpop.f32.mrf.mxu0
  %2835 = vmatprep.mubr.bf16.mxu0 0
  %2836 = vmatmul.mubr.bf16.gmra.mxu0 %v863
  %v2837 = vpop.f32.mrf.mxu0
  %v2838 = vadd.f32 0.0, %v2837
  %v2839 = vpop.f32.mrf.mxu0
  %v2840 = vpop.f32.mrf.mxu0
  %v2841 = vadd.f32 0.0, %v2840
  %v2842 = vpop.f32.mrf.mxu0
  %2843 = vdwg.mxu0
  %v2844 = vmul.f32 %v2782, %v971
  %v2845 = vmul.f32 %v2785, %v976
  %v2846 = vmul.f32 %v2790, %v981
  %v2847 = vmul.f32 %v2793, %v986
  %v2848 = vmul.f32 %v2798, %v991
  %v2849 = vmul.f32 %v2801, %v996
  %v2850 = vmul.f32 %v2806, %v1001
  %v2851 = vmul.f32 %v2809, %v1006
  %v2852 = vmul.f32 %v2814, %v1011
  %v2853 = vmul.f32 %v2817, %v1016
  %v2854 = vmul.f32 %v2822, %v1021
  %v2855 = vmul.f32 %v2825, %v1026
  %v2856 = vmul.f32 %v2830, %v1031
  %v2857 = vmul.f32 %v2833, %v1036
  %v2858 = vmul.f32 %v2838, %v1041
  %v2859 = vmul.f32 %v2841, %v1046
  %v2862 = vunpack.c.l.b16 %v2706
  %v2863 = vunpack.c.l.b16 %v2707
  %v2864 = vpack.c.b16 %v2863, %v2862
  %vm2866 = vcmask 130048
  %v2868 = vsel %vm2866, %v2698, 0
  %v2871 = vsel %vm2866, %v2699, 0
  %v2874 = vsel %vm2866, %v2700, 0
  %v2877 = vsel %vm2866, %v2701, 0
  %v2880 = vsel %vm2866, %v2702, 0
  %v2883 = vsel %vm2866, %v2703, 0
  %v2886 = vsel %vm2866, %v2704, 0
  %v2889 = vsel %vm2866, %v2705, 0
  %2891 = vmatprep.subr.bf16.mxu0 0
  %2892 = vmatpush1.bf16.msra.mxu0 0
  %2893 = vmatprep.subr.bf16.mxu0 0
  %2894 = vmatpush1.bf16.msra.mxu0 0
  %2895 = vmatprep.subr.bf16.mxu0 0
  %2896 = vmatpush1.bf16.msra.mxu0 0
  %2897 = vmatprep.subr.bf16.mxu0 0
  %2898 = vmatpush1.bf16.msra.mxu0 0
  %2899 = vmatprep.subr.bf16.mxu0 0
  %2900 = vmatpush1.bf16.msra.mxu0 0
  %2901 = vmatprep.subr.bf16.mxu0 0
  %2902 = vmatpush1.bf16.msra.mxu0 0
  %2903 = vmatprep.subr.bf16.mxu0 0
  %2904 = vmatpush1.bf16.msra.mxu0 0
  %2905 = vmatprep.subr.bf16.mxu0 0
  %2906 = vmatpush1.bf16.msra.mxu0 %v2864
  %2907 = vmatprep.subr.bf16.mxu0 0
  %2908 = vmatpush2.bf16.msra.mxu0 0
  %2909 = vmatprep.subr.bf16.mxu0 0
  %2910 = vmatpush2.bf16.msra.mxu0 0
  %2911 = vmatprep.subr.bf16.mxu0 0
  %2912 = vmatpush2.bf16.msra.mxu0 0
  %2913 = vmatprep.subr.bf16.mxu0 0
  %2914 = vmatpush2.bf16.msra.mxu0 0
  %2915 = vmatprep.subr.bf16.mxu0 0
  %2916 = vmatpush2.bf16.msra.mxu0 0
  %2917 = vmatprep.subr.bf16.mxu0 0
  %2918 = vmatpush2.bf16.msra.mxu0 0
  %2919 = vmatprep.subr.bf16.mxu0 0
  %2920 = vmatpush2.bf16.msra.mxu0 0
  %2921 = vmatprep.subr.bf16.mxu0 0
  %2922 = vmatpush2.bf16.msra.mxu0 0
  %2923 = vmatprep.mubr.bf16.mxu0 0
  %2924 = vmatmul.mubr.bf16.gmra.mxu0 %v2868
  %v2925 = vpop.f32.mrf.mxu0
  %v2926 = vadd.f32 %v2844, %v2925
  %v2927 = vpop.f32.mrf.mxu0
  %v2928 = vpop.f32.mrf.mxu0
  %v2929 = vadd.f32 %v2845, %v2928
  %v2930 = vpop.f32.mrf.mxu0
  %2931 = vmatprep.mubr.bf16.mxu0 0
  %2932 = vmatmul.mubr.bf16.gmra.mxu0 %v2871
  %v2933 = vpop.f32.mrf.mxu0
  %v2934 = vadd.f32 %v2846, %v2933
  %v2935 = vpop.f32.mrf.mxu0
  %v2936 = vpop.f32.mrf.mxu0
  %v2937 = vadd.f32 %v2847, %v2936
  %v2938 = vpop.f32.mrf.mxu0
  %2939 = vmatprep.mubr.bf16.mxu0 0
  %2940 = vmatmul.mubr.bf16.gmra.mxu0 %v2874
  %v2941 = vpop.f32.mrf.mxu0
  %v2942 = vadd.f32 %v2848, %v2941
  %v2943 = vpop.f32.mrf.mxu0
  %v2944 = vpop.f32.mrf.mxu0
  %v2945 = vadd.f32 %v2849, %v2944
  %v2946 = vpop.f32.mrf.mxu0
  %2947 = vmatprep.mubr.bf16.mxu0 0
  %2948 = vmatmul.mubr.bf16.gmra.mxu0 %v2877
  %v2949 = vpop.f32.mrf.mxu0
  %v2950 = vadd.f32 %v2850, %v2949
  %v2951 = vpop.f32.mrf.mxu0
  %v2952 = vpop.f32.mrf.mxu0
  %v2953 = vadd.f32 %v2851, %v2952
  %v2954 = vpop.f32.mrf.mxu0
  %2955 = vmatprep.mubr.bf16.mxu0 0
  %2956 = vmatmul.mubr.bf16.gmra.mxu0 %v2880
  %v2957 = vpop.f32.mrf.mxu0
  %v2958 = vadd.f32 %v2852, %v2957
  %v2959 = vpop.f32.mrf.mxu0
  %v2960 = vpop.f32.mrf.mxu0
  %v2961 = vadd.f32 %v2853, %v2960
  %v2962 = vpop.f32.mrf.mxu0
  %2963 = vmatprep.mubr.bf16.mxu0 0
  %2964 = vmatmul.mubr.bf16.gmra.mxu0 %v2883
  %v2965 = vpop.f32.mrf.mxu0
  %v2966 = vadd.f32 %v2854, %v2965
  %v2967 = vpop.f32.mrf.mxu0
  %v2968 = vpop.f32.mrf.mxu0
  %v2969 = vadd.f32 %v2855, %v2968
  %v2970 = vpop.f32.mrf.mxu0
  %2971 = vmatprep.mubr.bf16.mxu0 0
  %2972 = vmatmul.mubr.bf16.gmra.mxu0 %v2886
  %v2973 = vpop.f32.mrf.mxu0
  %v2974 = vadd.f32 %v2856, %v2973
  %v2975 = vpop.f32.mrf.mxu0
  %v2976 = vpop.f32.mrf.mxu0
  %v2977 = vadd.f32 %v2857, %v2976
  %v2978 = vpop.f32.mrf.mxu0
  %2979 = vmatprep.mubr.bf16.mxu0 0
  %2980 = vmatmul.mubr.bf16.gmra.mxu0 %v2889
  %v2981 = vpop.f32.mrf.mxu0
  %v2982 = vadd.f32 %v2858, %v2981
  %v2983 = vpop.f32.mrf.mxu0
  %v2984 = vpop.f32.mrf.mxu0
  %v2985 = vadd.f32 %v2859, %v2984
  %v2986 = vpop.f32.mrf.mxu0
  %2987 = vdwg.mxu0
  %v2988 = vld [vmem:[%s31] sm:$0x3]
  %v2990 = vsel %vm1130, %v2988, 0
  %2992 = vmatprep.subr.bf16.mxu0 0
  %2993 = vmatpush1.bf16.msra.mxu0 0
  %2994 = vmatprep.subr.bf16.mxu0 0
  %2995 = vmatpush1.bf16.msra.mxu0 0
  %2996 = vmatprep.subr.bf16.mxu0 0
  %2997 = vmatpush1.bf16.msra.mxu0 0
  %2998 = vmatprep.subr.bf16.mxu0 0
  %2999 = vmatpush1.bf16.msra.mxu0 0
  %3000 = vmatprep.subr.bf16.mxu0 0
  %3001 = vmatpush1.bf16.msra.mxu0 0
  %3002 = vmatprep.subr.bf16.mxu0 0
  %3003 = vmatpush1.bf16.msra.mxu0 0
  %3004 = vmatprep.subr.bf16.mxu0 0
  %3005 = vmatpush1.bf16.msra.mxu0 0
  %3006 = vmatprep.subr.bf16.mxu0 0
  %3007 = vmatpush1.bf16.msra.mxu0 %v2990
  %3008 = vmatprep.subr.bf16.mxu0 0
  %3009 = vmatpush2.bf16.msra.mxu0 0
  %3010 = vmatprep.subr.bf16.mxu0 0
  %3011 = vmatpush2.bf16.msra.mxu0 0
  %3012 = vmatprep.subr.bf16.mxu0 0
  %3013 = vmatpush2.bf16.msra.mxu0 0
  %3014 = vmatprep.subr.bf16.mxu0 0
  %3015 = vmatpush2.bf16.msra.mxu0 0
  %3016 = vmatprep.subr.bf16.mxu0 0
  %3017 = vmatpush2.bf16.msra.mxu0 0
  %3018 = vmatprep.subr.bf16.mxu0 0
  %3019 = vmatpush2.bf16.msra.mxu0 0
  %3020 = vmatprep.subr.bf16.mxu0 0
  %3021 = vmatpush2.bf16.msra.mxu0 0
  %3022 = vmatprep.subr.bf16.mxu0 0
  %3023 = vmatpush2.bf16.msra.mxu0 0
  %3024 = vmatprep.mubr.bf16.mxu0 0
  %3025 = vmatmul.mubr.bf16.gmra.mxu0 %v1107
  %v3026 = vpop.f32.mrf.mxu0
  %v3027 = vadd.f32 0.0, %v3026
  %v3028 = vpop.f32.mrf.mxu0
  %v3029 = vpop.f32.mrf.mxu0
  %v3030 = vadd.f32 0.0, %v3029
  %v3031 = vpop.f32.mrf.mxu0
  %3032 = vmatprep.mubr.bf16.mxu0 0
  %3033 = vmatmul.mubr.bf16.gmra.mxu0 %v1110
  %v3034 = vpop.f32.mrf.mxu0
  %v3035 = vadd.f32 0.0, %v3034
  %v3036 = vpop.f32.mrf.mxu0
  %v3037 = vpop.f32.mrf.mxu0
  %v3038 = vadd.f32 0.0, %v3037
  %v3039 = vpop.f32.mrf.mxu0
  %3040 = vmatprep.mubr.bf16.mxu0 0
  %3041 = vmatmul.mubr.bf16.gmra.mxu0 %v1113
  %v3042 = vpop.f32.mrf.mxu0
  %v3043 = vadd.f32 0.0, %v3042
  %v3044 = vpop.f32.mrf.mxu0
  %v3045 = vpop.f32.mrf.mxu0
  %v3046 = vadd.f32 0.0, %v3045
  %v3047 = vpop.f32.mrf.mxu0
  %3048 = vmatprep.mubr.bf16.mxu0 0
  %3049 = vmatmul.mubr.bf16.gmra.mxu0 %v1116
  %v3050 = vpop.f32.mrf.mxu0
  %v3051 = vadd.f32 0.0, %v3050
  %v3052 = vpop.f32.mrf.mxu0
  %v3053 = vpop.f32.mrf.mxu0
  %v3054 = vadd.f32 0.0, %v3053
  %v3055 = vpop.f32.mrf.mxu0
  %3056 = vmatprep.mubr.bf16.mxu0 0
  %3057 = vmatmul.mubr.bf16.gmra.mxu0 %v1119
  %v3058 = vpop.f32.mrf.mxu0
  %v3059 = vadd.f32 0.0, %v3058
  %v3060 = vpop.f32.mrf.mxu0
  %v3061 = vpop.f32.mrf.mxu0
  %v3062 = vadd.f32 0.0, %v3061
  %v3063 = vpop.f32.mrf.mxu0
  %3064 = vmatprep.mubr.bf16.mxu0 0
  %3065 = vmatmul.mubr.bf16.gmra.mxu0 %v1122
  %v3066 = vpop.f32.mrf.mxu0
  %v3067 = vadd.f32 0.0, %v3066
  %v3068 = vpop.f32.mrf.mxu0
  %v3069 = vpop.f32.mrf.mxu0
  %v3070 = vadd.f32 0.0, %v3069
  %v3071 = vpop.f32.mrf.mxu0
  %3072 = vmatprep.mubr.bf16.mxu0 0
  %3073 = vmatmul.mubr.bf16.gmra.mxu0 %v1125
  %v3074 = vpop.f32.mrf.mxu0
  %v3075 = vadd.f32 0.0, %v3074
  %v3076 = vpop.f32.mrf.mxu0
  %v3077 = vpop.f32.mrf.mxu0
  %v3078 = vadd.f32 0.0, %v3077
  %v3079 = vpop.f32.mrf.mxu0
  %3080 = vmatprep.mubr.bf16.mxu0 0
  %3081 = vmatmul.mubr.bf16.gmra.mxu0 %v1128
  %v3082 = vpop.f32.mrf.mxu0
  %v3083 = vadd.f32 0.0, %v3082
  %v3084 = vpop.f32.mrf.mxu0
  %v3085 = vpop.f32.mrf.mxu0
  %v3086 = vadd.f32 0.0, %v3085
  %v3087 = vpop.f32.mrf.mxu0
  %3088 = vdwg.mxu0
  %v3089 = vadd.f32 %v2926, %v3027
  %v3090 = vadd.f32 %v2929, %v3030
  %v3091 = vadd.f32 %v2934, %v3035
  %v3092 = vadd.f32 %v2937, %v3038
  %v3093 = vadd.f32 %v2942, %v3043
  %v3094 = vadd.f32 %v2945, %v3046
  %v3095 = vadd.f32 %v2950, %v3051
  %v3096 = vadd.f32 %v2953, %v3054
  %v3097 = vadd.f32 %v2958, %v3059
  %v3098 = vadd.f32 %v2961, %v3062
  %v3099 = vadd.f32 %v2966, %v3067
  %v3100 = vadd.f32 %v2969, %v3070
  %v3101 = vadd.f32 %v2974, %v3075
  %v3102 = vadd.f32 %v2977, %v3078
  %v3103 = vadd.f32 %v2982, %v3083
  %v3104 = vadd.f32 %v2985, %v3086
  %v3105 = vld [vmem:[%s33] sm:$0x1]
  %v3107 = vlaneseq
  %v3108 = vshrl.u32 %v3107, 7
  %v3109 = vsub.s32 0, %v3108
  %v3110 = vrot.slane %v3105, %v3109
  %v3112 = vadd.f32 %v3089, %v3110
  %v3113 = vadd.f32 %v3090, %v3110
  %v3114 = vadd.f32 %v3091, %v3110
  %v3115 = vadd.f32 %v3092, %v3110
  %v3116 = vadd.f32 %v3093, %v3110
  %v3117 = vadd.f32 %v3094, %v3110
  %v3118 = vadd.f32 %v3095, %v3110
  %v3119 = vadd.f32 %v3096, %v3110
  %v3120 = vadd.f32 %v3097, %v3110
  %v3121 = vadd.f32 %v3098, %v3110
  %v3122 = vadd.f32 %v3099, %v3110
  %v3123 = vadd.f32 %v3100, %v3110
  %v3124 = vadd.f32 %v3101, %v3110
  %v3125 = vadd.f32 %v3102, %v3110
  %v3126 = vadd.f32 %v3103, %v3110
  %v3127 = vadd.f32 %v3104, %v3110
  %v3128 = vmax.f32 %v3112, 0.0
  %v3129 = vmax.f32 %v3113, 0.0
  %v3130 = vmax.f32 %v3114, 0.0
  %v3131 = vmax.f32 %v3115, 0.0
  %v3132 = vmax.f32 %v3116, 0.0
  %v3133 = vmax.f32 %v3117, 0.0
  %v3134 = vmax.f32 %v3118, 0.0
  %v3135 = vmax.f32 %v3119, 0.0
  %v3136 = vmax.f32 %v3120, 0.0
  %v3137 = vmax.f32 %v3121, 0.0
  %v3138 = vmax.f32 %v3122, 0.0
  %v3139 = vmax.f32 %v3123, 0.0
  %v3140 = vmax.f32 %v3124, 0.0
  %v3141 = vmax.f32 %v3125, 0.0
  %v3142 = vmax.f32 %v3126, 0.0
  %v3143 = vmax.f32 %v3127, 0.0
  %v3144 = vpack.c.bf16 %v3129, %v3128
  %v3145 = vpack.c.bf16 %v3131, %v3130
  %v3146 = vpack.c.bf16 %v3133, %v3132
  %v3147 = vpack.c.bf16 %v3135, %v3134
  %v3148 = vpack.c.bf16 %v3137, %v3136
  %v3149 = vpack.c.bf16 %v3139, %v3138
  %v3150 = vpack.c.bf16 %v3141, %v3140
  %v3151 = vpack.c.bf16 %v3143, %v3142
  %v3152 = vld [vmem:[%s35] sm:$0xff]
  %v3153 = vld [vmem:[%s35 + $0x8] sm:$0xff]
  %v3154 = vld [vmem:[%s35 + $0x10] sm:$0xff]
  %v3155 = vld [vmem:[%s35 + $0x18] sm:$0xff]
  %v3156 = vld [vmem:[%s37] sm:$0x3]
  %v3158 = vlaneseq
  %v3159 = vshrl.u32 %v3158, 7
  %v3160 = vsub.s32 0, %v3159
  %v3161 = vrot.slane %v3156, %v3160
  %v3162 = vlaneseq
  %v3163 = vshrl.u32 %v3162, 7
  %v3164 = vsub.s32 1, %v3163
  %v3165 = vrot.slane %v3156, %v3164
  %v3172 = vunpack.c.l.b16 %v3152
  %v3173 = vunpack.c.h.b16 %v3152
  %v3174 = vunpack.c.l.b16 %v3153
  %v3175 = vunpack.c.h.b16 %v3153
  %v3176 = vunpack.c.l.b16 %v3154
  %v3177 = vunpack.c.h.b16 %v3154
  %v3178 = vunpack.c.l.b16 %v3155
  %v3179 = vunpack.c.h.b16 %v3155
  %v3180 = vpack.c.b16 %v3174, %v3172
  %v3181 = vpack.c.b16 %v3175, %v3173
  %v3182 = vpack.c.b16 %v3178, %v3176
  %v3183 = vpack.c.b16 %v3179, %v3177
  %v3189 = vsel %vm2376, %v3144, 0
  %v3192 = vsel %vm2376, %v3145, 0
  %v3195 = vsel %vm2376, %v3146, 0
  %v3198 = vsel %vm2376, %v3147, 0
  %v3201 = vsel %vm2376, %v3148, 0
  %v3204 = vsel %vm2376, %v3149, 0
  %v3207 = vsel %vm2376, %v3150, 0
  %v3210 = vsel %vm2376, %v3151, 0
  %3212 = vmatprep.subr.bf16.mxu0 0
  %3213 = vmatpush1.bf16.msra.mxu0 0
  %3214 = vmatprep.subr.bf16.mxu0 0
  %3215 = vmatpush1.bf16.msra.mxu0 0
  %3216 = vmatprep.subr.bf16.mxu0 0
  %3217 = vmatpush1.bf16.msra.mxu0 0
  %3218 = vmatprep.subr.bf16.mxu0 0
  %3219 = vmatpush1.bf16.msra.mxu0 0
  %3220 = vmatprep.subr.bf16.mxu0 0
  %3221 = vmatpush1.bf16.msra.mxu0 0
  %3222 = vmatprep.subr.bf16.mxu0 0
  %3223 = vmatpush1.bf16.msra.mxu0 0
  %3224 = vmatprep.subr.bf16.mxu0 %v3183
  %3225 = vmatpush1.bf16.msra.mxu0 %v3182
  %3226 = vmatprep.subr.bf16.mxu0 %v3181
  %3227 = vmatpush1.bf16.msra.mxu0 %v3180
  %3228 = vmatprep.subr.bf16.mxu0 0
  %3229 = vmatpush2.bf16.msra.mxu0 0
  %3230 = vmatprep.subr.bf16.mxu0 0
  %3231 = vmatpush2.bf16.msra.mxu0 0
  %3232 = vmatprep.subr.bf16.mxu0 0
  %3233 = vmatpush2.bf16.msra.mxu0 0
  %3234 = vmatprep.subr.bf16.mxu0 0
  %3235 = vmatpush2.bf16.msra.mxu0 0
  %3236 = vmatprep.subr.bf16.mxu0 0
  %3237 = vmatpush2.bf16.msra.mxu0 0
  %3238 = vmatprep.subr.bf16.mxu0 0
  %3239 = vmatpush2.bf16.msra.mxu0 0
  %3240 = vmatprep.subr.bf16.mxu0 0
  %3241 = vmatpush2.bf16.msra.mxu0 0
  %3242 = vmatprep.subr.bf16.mxu0 0
  %3243 = vmatpush2.bf16.msra.mxu0 0
  %3244 = vmatprep.mubr.bf16.mxu0 0
  %3245 = vmatmul.mubr.bf16.gmra.mxu0 %v3189
  %v3246 = vpop.f32.mrf.mxu0
  %v3247 = vadd.f32 %v3161, %v3246
  %v3248 = vpop.f32.mrf.mxu0
  %v3249 = vadd.f32 %v3165, %v3248
  %v3250 = vpop.f32.mrf.mxu0
  %v3251 = vadd.f32 %v3161, %v3250
  %v3252 = vpop.f32.mrf.mxu0
  %v3253 = vadd.f32 %v3165, %v3252
  %3254 = vmatprep.mubr.bf16.mxu0 0
  %3255 = vmatmul.mubr.bf16.gmra.mxu0 %v3192
  %v3256 = vpop.f32.mrf.mxu0
  %v3257 = vadd.f32 %v3161, %v3256
  %v3258 = vpop.f32.mrf.mxu0
  %v3259 = vadd.f32 %v3165, %v3258
  %v3260 = vpop.f32.mrf.mxu0
  %v3261 = vadd.f32 %v3161, %v3260
  %v3262 = vpop.f32.mrf.mxu0
  %v3263 = vadd.f32 %v3165, %v3262
  %3264 = vmatprep.mubr.bf16.mxu0 0
  %3265 = vmatmul.mubr.bf16.gmra.mxu0 %v3195
  %v3266 = vpop.f32.mrf.mxu0
  %v3267 = vadd.f32 %v3161, %v3266
  %v3268 = vpop.f32.mrf.mxu0
  %v3269 = vadd.f32 %v3165, %v3268
  %v3270 = vpop.f32.mrf.mxu0
  %v3271 = vadd.f32 %v3161, %v3270
  %v3272 = vpop.f32.mrf.mxu0
  %v3273 = vadd.f32 %v3165, %v3272
  %3274 = vmatprep.mubr.bf16.mxu0 0
  %3275 = vmatmul.mubr.bf16.gmra.mxu0 %v3198
  %v3276 = vpop.f32.mrf.mxu0
  %v3277 = vadd.f32 %v3161, %v3276
  %v3278 = vpop.f32.mrf.mxu0
  %v3279 = vadd.f32 %v3165, %v3278
  %v3280 = vpop.f32.mrf.mxu0
  %v3281 = vadd.f32 %v3161, %v3280
  %v3282 = vpop.f32.mrf.mxu0
  %v3283 = vadd.f32 %v3165, %v3282
  %3284 = vmatprep.mubr.bf16.mxu0 0
  %3285 = vmatmul.mubr.bf16.gmra.mxu0 %v3201
  %v3286 = vpop.f32.mrf.mxu0
  %v3287 = vadd.f32 %v3161, %v3286
  %v3288 = vpop.f32.mrf.mxu0
  %v3289 = vadd.f32 %v3165, %v3288
  %v3290 = vpop.f32.mrf.mxu0
  %v3291 = vadd.f32 %v3161, %v3290
  %v3292 = vpop.f32.mrf.mxu0
  %v3293 = vadd.f32 %v3165, %v3292
  %3294 = vmatprep.mubr.bf16.mxu0 0
  %3295 = vmatmul.mubr.bf16.gmra.mxu0 %v3204
  %v3296 = vpop.f32.mrf.mxu0
  %v3297 = vadd.f32 %v3161, %v3296
  %v3298 = vpop.f32.mrf.mxu0
  %v3299 = vadd.f32 %v3165, %v3298
  %v3300 = vpop.f32.mrf.mxu0
  %v3301 = vadd.f32 %v3161, %v3300
  %v3302 = vpop.f32.mrf.mxu0
  %v3303 = vadd.f32 %v3165, %v3302
  %3304 = vmatprep.mubr.bf16.mxu0 0
  %3305 = vmatmul.mubr.bf16.gmra.mxu0 %v3207
  %v3306 = vpop.f32.mrf.mxu0
  %v3307 = vadd.f32 %v3161, %v3306
  %v3308 = vpop.f32.mrf.mxu0
  %v3309 = vadd.f32 %v3165, %v3308
  %v3310 = vpop.f32.mrf.mxu0
  %v3311 = vadd.f32 %v3161, %v3310
  %v3312 = vpop.f32.mrf.mxu0
  %v3313 = vadd.f32 %v3165, %v3312
  %3314 = vmatprep.mubr.bf16.mxu0 0
  %3315 = vmatmul.mubr.bf16.gmra.mxu0 %v3210
  %v3316 = vpop.f32.mrf.mxu0
  %v3317 = vadd.f32 %v3161, %v3316
  %v3318 = vpop.f32.mrf.mxu0
  %v3319 = vadd.f32 %v3165, %v3318
  %v3320 = vpop.f32.mrf.mxu0
  %v3321 = vadd.f32 %v3161, %v3320
  %v3322 = vpop.f32.mrf.mxu0
  %v3323 = vadd.f32 %v3165, %v3322
  %3324 = vdwg.mxu0
  %v3325 = vld [vmem:[%s39] sm:$0xf]
  %v3326 = vld [vmem:[%s39 + $0x4] sm:$0xf]
  %v3327 = vld [vmem:[%s39 + $0x8] sm:$0xf]
  %v3328 = vld [vmem:[%s39 + $0xc] sm:$0xf]
  %v3329 = vld [vmem:[%s39 + $0x10] sm:$0xf]
  %v3330 = vld [vmem:[%s39 + $0x14] sm:$0xf]
  %v3331 = vld [vmem:[%s39 + $0x18] sm:$0xf]
  %v3332 = vld [vmem:[%s39 + $0x1c] sm:$0xf]
  %v3333 = vld [vmem:[%s39 + $0x20] sm:$0x1]
  %v3343 = vunpack.c.l.b16 %v3325
  %v3344 = vunpack.c.l.b16 %v3326
  %v3345 = vunpack.c.l.b16 %v3327
  %v3346 = vunpack.c.l.b16 %v3328
  %v3347 = vunpack.c.l.b16 %v3329
  %v3348 = vunpack.c.l.b16 %v3330
  %v3349 = vunpack.c.l.b16 %v3331
  %v3350 = vunpack.c.l.b16 %v3332
  %v3351 = vunpack.c.l.b16 %v3333
  %v3352 = vpack.c.b16 %v3344, %v3343
  %v3353 = vpack.c.b16 %v3346, %v3345
  %v3354 = vpack.c.b16 %v3348, %v3347
  %v3355 = vpack.c.b16 %v3350, %v3349
  %v3356 = vpack.c.b16 %v3351, %v3351
  %v3362 = vand.u32 %v3356, %v867
  %3364 = vmatprep.subr.bf16.mxu0 0
  %3365 = vmatpush1.bf16.msra.mxu0 0
  %3366 = vmatprep.subr.bf16.mxu0 0
  %3367 = vmatpush1.bf16.msra.mxu0 0
  %3368 = vmatprep.subr.bf16.mxu0 0
  %3369 = vmatpush1.bf16.msra.mxu0 0
  %3370 = vmatprep.subr.bf16.mxu0 0
  %3371 = vmatpush1.bf16.msra.mxu0 %v3362
  %3372 = vmatprep.subr.bf16.mxu0 0
  %3373 = vmatpush1.bf16.msra.mxu0 %v3355
  %3374 = vmatprep.subr.bf16.mxu0 0
  %3375 = vmatpush1.bf16.msra.mxu0 %v3354
  %3376 = vmatprep.subr.bf16.mxu0 0
  %3377 = vmatpush1.bf16.msra.mxu0 %v3353
  %3378 = vmatprep.subr.bf16.mxu0 0
  %3379 = vmatpush1.bf16.msra.mxu0 %v3352
  %3380 = vmatprep.subr.bf16.mxu0 0
  %3381 = vmatpush2.bf16.msra.mxu0 0
  %3382 = vmatprep.subr.bf16.mxu0 0
  %3383 = vmatpush2.bf16.msra.mxu0 0
  %3384 = vmatprep.subr.bf16.mxu0 0
  %3385 = vmatpush2.bf16.msra.mxu0 0
  %3386 = vmatprep.subr.bf16.mxu0 0
  %3387 = vmatpush2.bf16.msra.mxu0 0
  %3388 = vmatprep.subr.bf16.mxu0 0
  %3389 = vmatpush2.bf16.msra.mxu0 0
  %3390 = vmatprep.subr.bf16.mxu0 0
  %3391 = vmatpush2.bf16.msra.mxu0 0
  %3392 = vmatprep.subr.bf16.mxu0 0
  %3393 = vmatpush2.bf16.msra.mxu0 0
  %3394 = vmatprep.subr.bf16.mxu0 0
  %3395 = vmatpush2.bf16.msra.mxu0 0
  %3396 = vmatprep.mubr.bf16.mxu0 0
  %3397 = vmatmul.mubr.bf16.gmra.mxu0 %v842
  %v3398 = vpop.f32.mrf.mxu0
  %v3399 = vadd.f32 0.0, %v3398
  %v3400 = vpop.f32.mrf.mxu0
  %v3401 = vpop.f32.mrf.mxu0
  %v3402 = vadd.f32 0.0, %v3401
  %v3403 = vpop.f32.mrf.mxu0
  %3404 = vmatprep.mubr.bf16.mxu0 0
  %3405 = vmatmul.mubr.bf16.gmra.mxu0 %v845
  %v3406 = vpop.f32.mrf.mxu0
  %v3407 = vadd.f32 0.0, %v3406
  %v3408 = vpop.f32.mrf.mxu0
  %v3409 = vpop.f32.mrf.mxu0
  %v3410 = vadd.f32 0.0, %v3409
  %v3411 = vpop.f32.mrf.mxu0
  %3412 = vmatprep.mubr.bf16.mxu0 0
  %3413 = vmatmul.mubr.bf16.gmra.mxu0 %v848
  %v3414 = vpop.f32.mrf.mxu0
  %v3415 = vadd.f32 0.0, %v3414
  %v3416 = vpop.f32.mrf.mxu0
  %v3417 = vpop.f32.mrf.mxu0
  %v3418 = vadd.f32 0.0, %v3417
  %v3419 = vpop.f32.mrf.mxu0
  %3420 = vmatprep.mubr.bf16.mxu0 0
  %3421 = vmatmul.mubr.bf16.gmra.mxu0 %v851
  %v3422 = vpop.f32.mrf.mxu0
  %v3423 = vadd.f32 0.0, %v3422
  %v3424 = vpop.f32.mrf.mxu0
  %v3425 = vpop.f32.mrf.mxu0
  %v3426 = vadd.f32 0.0, %v3425
  %v3427 = vpop.f32.mrf.mxu0
  %3428 = vmatprep.mubr.bf16.mxu0 0
  %3429 = vmatmul.mubr.bf16.gmra.mxu0 %v854
  %v3430 = vpop.f32.mrf.mxu0
  %v3431 = vadd.f32 0.0, %v3430
  %v3432 = vpop.f32.mrf.mxu0
  %v3433 = vpop.f32.mrf.mxu0
  %v3434 = vadd.f32 0.0, %v3433
  %v3435 = vpop.f32.mrf.mxu0
  %3436 = vmatprep.mubr.bf16.mxu0 0
  %3437 = vmatmul.mubr.bf16.gmra.mxu0 %v857
  %v3438 = vpop.f32.mrf.mxu0
  %v3439 = vadd.f32 0.0, %v3438
  %v3440 = vpop.f32.mrf.mxu0
  %v3441 = vpop.f32.mrf.mxu0
  %v3442 = vadd.f32 0.0, %v3441
  %v3443 = vpop.f32.mrf.mxu0
  %3444 = vmatprep.mubr.bf16.mxu0 0
  %3445 = vmatmul.mubr.bf16.gmra.mxu0 %v860
  %v3446 = vpop.f32.mrf.mxu0
  %v3447 = vadd.f32 0.0, %v3446
  %v3448 = vpop.f32.mrf.mxu0
  %v3449 = vpop.f32.mrf.mxu0
  %v3450 = vadd.f32 0.0, %v3449
  %v3451 = vpop.f32.mrf.mxu0
  %3452 = vmatprep.mubr.bf16.mxu0 0
  %3453 = vmatmul.mubr.bf16.gmra.mxu0 %v863
  %v3454 = vpop.f32.mrf.mxu0
  %v3455 = vadd.f32 0.0, %v3454
  %v3456 = vpop.f32.mrf.mxu0
  %v3457 = vpop.f32.mrf.mxu0
  %v3458 = vadd.f32 0.0, %v3457
  %v3459 = vpop.f32.mrf.mxu0
  %3460 = vdwg.mxu0
  %v3461 = vmul.f32 %v3399, %v971
  %v3462 = vmul.f32 %v3402, %v976
  %v3463 = vmul.f32 %v3407, %v981
  %v3464 = vmul.f32 %v3410, %v986
  %v3465 = vmul.f32 %v3415, %v991
  %v3466 = vmul.f32 %v3418, %v996
  %v3467 = vmul.f32 %v3423, %v1001
  %v3468 = vmul.f32 %v3426, %v1006
  %v3469 = vmul.f32 %v3431, %v1011
  %v3470 = vmul.f32 %v3434, %v1016
  %v3471 = vmul.f32 %v3439, %v1021
  %v3472 = vmul.f32 %v3442, %v1026
  %v3473 = vmul.f32 %v3447, %v1031
  %v3474 = vmul.f32 %v3450, %v1036
  %v3475 = vmul.f32 %v3455, %v1041
  %v3476 = vmul.f32 %v3458, %v1046
  %v3477 = vld [vmem:[%s41] sm:$0x3]
  %v3479 = vsel %vm1130, %v3477, 0
  %3481 = vmatprep.subr.bf16.mxu0 0
  %3482 = vmatpush1.bf16.msra.mxu0 0
  %3483 = vmatprep.subr.bf16.mxu0 0
  %3484 = vmatpush1.bf16.msra.mxu0 0
  %3485 = vmatprep.subr.bf16.mxu0 0
  %3486 = vmatpush1.bf16.msra.mxu0 0
  %3487 = vmatprep.subr.bf16.mxu0 0
  %3488 = vmatpush1.bf16.msra.mxu0 0
  %3489 = vmatprep.subr.bf16.mxu0 0
  %3490 = vmatpush1.bf16.msra.mxu0 0
  %3491 = vmatprep.subr.bf16.mxu0 0
  %3492 = vmatpush1.bf16.msra.mxu0 0
  %3493 = vmatprep.subr.bf16.mxu0 0
  %3494 = vmatpush1.bf16.msra.mxu0 0
  %3495 = vmatprep.subr.bf16.mxu0 0
  %3496 = vmatpush1.bf16.msra.mxu0 %v3479
  %3497 = vmatprep.subr.bf16.mxu0 0
  %3498 = vmatpush2.bf16.msra.mxu0 0
  %3499 = vmatprep.subr.bf16.mxu0 0
  %3500 = vmatpush2.bf16.msra.mxu0 0
  %3501 = vmatprep.subr.bf16.mxu0 0
  %3502 = vmatpush2.bf16.msra.mxu0 0
  %3503 = vmatprep.subr.bf16.mxu0 0
  %3504 = vmatpush2.bf16.msra.mxu0 0
  %3505 = vmatprep.subr.bf16.mxu0 0
  %3506 = vmatpush2.bf16.msra.mxu0 0
  %3507 = vmatprep.subr.bf16.mxu0 0
  %3508 = vmatpush2.bf16.msra.mxu0 0
  %3509 = vmatprep.subr.bf16.mxu0 0
  %3510 = vmatpush2.bf16.msra.mxu0 0
  %3511 = vmatprep.subr.bf16.mxu0 0
  %3512 = vmatpush2.bf16.msra.mxu0 0
  %3513 = vmatprep.mubr.bf16.mxu0 0
  %3514 = vmatmul.mubr.bf16.gmra.mxu0 %v1107
  %v3515 = vpop.f32.mrf.mxu0
  %v3516 = vadd.f32 0.0, %v3515
  %v3517 = vpop.f32.mrf.mxu0
  %v3518 = vpop.f32.mrf.mxu0
  %v3519 = vadd.f32 0.0, %v3518
  %v3520 = vpop.f32.mrf.mxu0
  %3521 = vmatprep.mubr.bf16.mxu0 0
  %3522 = vmatmul.mubr.bf16.gmra.mxu0 %v1110
  %v3523 = vpop.f32.mrf.mxu0
  %v3524 = vadd.f32 0.0, %v3523
  %v3525 = vpop.f32.mrf.mxu0
  %v3526 = vpop.f32.mrf.mxu0
  %v3527 = vadd.f32 0.0, %v3526
  %v3528 = vpop.f32.mrf.mxu0
  %3529 = vmatprep.mubr.bf16.mxu0 0
  %3530 = vmatmul.mubr.bf16.gmra.mxu0 %v1113
  %v3531 = vpop.f32.mrf.mxu0
  %v3532 = vadd.f32 0.0, %v3531
  %v3533 = vpop.f32.mrf.mxu0
  %v3534 = vpop.f32.mrf.mxu0
  %v3535 = vadd.f32 0.0, %v3534
  %v3536 = vpop.f32.mrf.mxu0
  %3537 = vmatprep.mubr.bf16.mxu0 0
  %3538 = vmatmul.mubr.bf16.gmra.mxu0 %v1116
  %v3539 = vpop.f32.mrf.mxu0
  %v3540 = vadd.f32 0.0, %v3539
  %v3541 = vpop.f32.mrf.mxu0
  %v3542 = vpop.f32.mrf.mxu0
  %v3543 = vadd.f32 0.0, %v3542
  %v3544 = vpop.f32.mrf.mxu0
  %3545 = vmatprep.mubr.bf16.mxu0 0
  %3546 = vmatmul.mubr.bf16.gmra.mxu0 %v1119
  %v3547 = vpop.f32.mrf.mxu0
  %v3548 = vadd.f32 0.0, %v3547
  %v3549 = vpop.f32.mrf.mxu0
  %v3550 = vpop.f32.mrf.mxu0
  %v3551 = vadd.f32 0.0, %v3550
  %v3552 = vpop.f32.mrf.mxu0
  %3553 = vmatprep.mubr.bf16.mxu0 0
  %3554 = vmatmul.mubr.bf16.gmra.mxu0 %v1122
  %v3555 = vpop.f32.mrf.mxu0
  %v3556 = vadd.f32 0.0, %v3555
  %v3557 = vpop.f32.mrf.mxu0
  %v3558 = vpop.f32.mrf.mxu0
  %v3559 = vadd.f32 0.0, %v3558
  %v3560 = vpop.f32.mrf.mxu0
  %3561 = vmatprep.mubr.bf16.mxu0 0
  %3562 = vmatmul.mubr.bf16.gmra.mxu0 %v1125
  %v3563 = vpop.f32.mrf.mxu0
  %v3564 = vadd.f32 0.0, %v3563
  %v3565 = vpop.f32.mrf.mxu0
  %v3566 = vpop.f32.mrf.mxu0
  %v3567 = vadd.f32 0.0, %v3566
  %v3568 = vpop.f32.mrf.mxu0
  %3569 = vmatprep.mubr.bf16.mxu0 0
  %3570 = vmatmul.mubr.bf16.gmra.mxu0 %v1128
  %v3571 = vpop.f32.mrf.mxu0
  %v3572 = vadd.f32 0.0, %v3571
  %v3573 = vpop.f32.mrf.mxu0
  %v3574 = vpop.f32.mrf.mxu0
  %v3575 = vadd.f32 0.0, %v3574
  %v3576 = vpop.f32.mrf.mxu0
  %3577 = vdwg.mxu0
  %v3578 = vadd.f32 %v3461, %v3516
  %v3579 = vadd.f32 %v3462, %v3519
  %v3580 = vadd.f32 %v3463, %v3524
  %v3581 = vadd.f32 %v3464, %v3527
  %v3582 = vadd.f32 %v3465, %v3532
  %v3583 = vadd.f32 %v3466, %v3535
  %v3584 = vadd.f32 %v3467, %v3540
  %v3585 = vadd.f32 %v3468, %v3543
  %v3586 = vadd.f32 %v3469, %v3548
  %v3587 = vadd.f32 %v3470, %v3551
  %v3588 = vadd.f32 %v3471, %v3556
  %v3589 = vadd.f32 %v3472, %v3559
  %v3590 = vadd.f32 %v3473, %v3564
  %v3591 = vadd.f32 %v3474, %v3567
  %v3592 = vadd.f32 %v3475, %v3572
  %v3593 = vadd.f32 %v3476, %v3575
  %v3594 = vld [vmem:[%s43] sm:$0x1]
  %v3596 = vlaneseq
  %v3597 = vshrl.u32 %v3596, 7
  %v3598 = vsub.s32 0, %v3597
  %v3599 = vrot.slane %v3594, %v3598
  %v3601 = vadd.f32 %v3578, %v3599
  %v3602 = vadd.f32 %v3579, %v3599
  %v3603 = vadd.f32 %v3580, %v3599
  %v3604 = vadd.f32 %v3581, %v3599
  %v3605 = vadd.f32 %v3582, %v3599
  %v3606 = vadd.f32 %v3583, %v3599
  %v3607 = vadd.f32 %v3584, %v3599
  %v3608 = vadd.f32 %v3585, %v3599
  %v3609 = vadd.f32 %v3586, %v3599
  %v3610 = vadd.f32 %v3587, %v3599
  %v3611 = vadd.f32 %v3588, %v3599
  %v3612 = vadd.f32 %v3589, %v3599
  %v3613 = vadd.f32 %v3590, %v3599
  %v3614 = vadd.f32 %v3591, %v3599
  %v3615 = vadd.f32 %v3592, %v3599
  %v3616 = vadd.f32 %v3593, %v3599
  %v3617 = vmax.f32 %v3601, 0.0
  %v3618 = vmax.f32 %v3602, 0.0
  %v3619 = vmax.f32 %v3603, 0.0
  %v3620 = vmax.f32 %v3604, 0.0
  %v3621 = vmax.f32 %v3605, 0.0
  %v3622 = vmax.f32 %v3606, 0.0
  %v3623 = vmax.f32 %v3607, 0.0
  %v3624 = vmax.f32 %v3608, 0.0
  %v3625 = vmax.f32 %v3609, 0.0
  %v3626 = vmax.f32 %v3610, 0.0
  %v3627 = vmax.f32 %v3611, 0.0
  %v3628 = vmax.f32 %v3612, 0.0
  %v3629 = vmax.f32 %v3613, 0.0
  %v3630 = vmax.f32 %v3614, 0.0
  %v3631 = vmax.f32 %v3615, 0.0
  %v3632 = vmax.f32 %v3616, 0.0
  %v3633 = vpack.c.bf16 %v3618, %v3617
  %v3634 = vpack.c.bf16 %v3620, %v3619
  %v3635 = vpack.c.bf16 %v3622, %v3621
  %v3636 = vpack.c.bf16 %v3624, %v3623
  %v3637 = vpack.c.bf16 %v3626, %v3625
  %v3638 = vpack.c.bf16 %v3628, %v3627
  %v3639 = vpack.c.bf16 %v3630, %v3629
  %v3640 = vpack.c.bf16 %v3632, %v3631
  %v3641 = vld [vmem:[%s45] sm:$0xf]
  %v3642 = vld [vmem:[%s45 + $0x4] sm:$0xf]
  %v3643 = vld [vmem:[%s45 + $0x8] sm:$0xf]
  %v3644 = vld [vmem:[%s45 + $0xc] sm:$0xf]
  %v3645 = vld [vmem:[%s47] sm:$0x1]
  %v3647 = vlaneseq
  %v3648 = vshrl.u32 %v3647, 7
  %v3649 = vsub.s32 0, %v3648
  %v3650 = vrot.slane %v3645, %v3649
  %v3656 = vunpack.c.l.b16 %v3641
  %v3657 = vunpack.c.l.b16 %v3642
  %v3658 = vunpack.c.l.b16 %v3643
  %v3659 = vunpack.c.l.b16 %v3644
  %v3660 = vpack.c.b16 %v3657, %v3656
  %v3661 = vpack.c.b16 %v3659, %v3658
  %v3665 = vsel %vm2376, %v3633, 0
  %v3668 = vsel %vm2376, %v3634, 0
  %v3671 = vsel %vm2376, %v3635, 0
  %v3674 = vsel %vm2376, %v3636, 0
  %v3677 = vsel %vm2376, %v3637, 0
  %v3680 = vsel %vm2376, %v3638, 0
  %v3683 = vsel %vm2376, %v3639, 0
  %v3686 = vsel %vm2376, %v3640, 0
  %3688 = vmatprep.subr.bf16.mxu0 0
  %3689 = vmatpush1.bf16.msra.mxu0 0
  %3690 = vmatprep.subr.bf16.mxu0 0
  %3691 = vmatpush1.bf16.msra.mxu0 0
  %3692 = vmatprep.subr.bf16.mxu0 0
  %3693 = vmatpush1.bf16.msra.mxu0 0
  %3694 = vmatprep.subr.bf16.mxu0 0
  %3695 = vmatpush1.bf16.msra.mxu0 0
  %3696 = vmatprep.subr.bf16.mxu0 0
  %3697 = vmatpush1.bf16.msra.mxu0 0
  %3698 = vmatprep.subr.bf16.mxu0 0
  %3699 = vmatpush1.bf16.msra.mxu0 0
  %3700 = vmatprep.subr.bf16.mxu0 0
  %3701 = vmatpush1.bf16.msra.mxu0 %v3661
  %3702 = vmatprep.subr.bf16.mxu0 0
  %3703 = vmatpush1.bf16.msra.mxu0 %v3660
  %3704 = vmatprep.subr.bf16.mxu0 0
  %3705 = vmatpush2.bf16.msra.mxu0 0
  %3706 = vmatprep.subr.bf16.mxu0 0
  %3707 = vmatpush2.bf16.msra.mxu0 0
  %3708 = vmatprep.subr.bf16.mxu0 0
  %3709 = vmatpush2.bf16.msra.mxu0 0
  %3710 = vmatprep.subr.bf16.mxu0 0
  %3711 = vmatpush2.bf16.msra.mxu0 0
  %3712 = vmatprep.subr.bf16.mxu0 0
  %3713 = vmatpush2.bf16.msra.mxu0 0
  %3714 = vmatprep.subr.bf16.mxu0 0
  %3715 = vmatpush2.bf16.msra.mxu0 0
  %3716 = vmatprep.subr.bf16.mxu0 0
  %3717 = vmatpush2.bf16.msra.mxu0 0
  %3718 = vmatprep.subr.bf16.mxu0 0
  %3719 = vmatpush2.bf16.msra.mxu0 0
  %3720 = vmatprep.mubr.bf16.mxu0 0
  %3721 = vmatmul.mubr.bf16.gmra.mxu0 %v3665
  %v3722 = vpop.f32.mrf.mxu0
  %v3723 = vadd.f32 %v3650, %v3722
  %v3724 = vpop.f32.mrf.mxu0
  %v3725 = vpop.f32.mrf.mxu0
  %v3726 = vadd.f32 %v3650, %v3725
  %v3727 = vpop.f32.mrf.mxu0
  %3728 = vmatprep.mubr.bf16.mxu0 0
  %3729 = vmatmul.mubr.bf16.gmra.mxu0 %v3668
  %v3730 = vpop.f32.mrf.mxu0
  %v3731 = vadd.f32 %v3650, %v3730
  %v3732 = vpop.f32.mrf.mxu0
  %v3733 = vpop.f32.mrf.mxu0
  %v3734 = vadd.f32 %v3650, %v3733
  %v3735 = vpop.f32.mrf.mxu0
  %3736 = vmatprep.mubr.bf16.mxu0 0
  %3737 = vmatmul.mubr.bf16.gmra.mxu0 %v3671
  %v3738 = vpop.f32.mrf.mxu0
  %v3739 = vadd.f32 %v3650, %v3738
  %v3740 = vpop.f32.mrf.mxu0
  %v3741 = vpop.f32.mrf.mxu0
  %v3742 = vadd.f32 %v3650, %v3741
  %v3743 = vpop.f32.mrf.mxu0
  %3744 = vmatprep.mubr.bf16.mxu0 0
  %3745 = vmatmul.mubr.bf16.gmra.mxu0 %v3674
  %v3746 = vpop.f32.mrf.mxu0
  %v3747 = vadd.f32 %v3650, %v3746
  %v3748 = vpop.f32.mrf.mxu0
  %v3749 = vpop.f32.mrf.mxu0
  %v3750 = vadd.f32 %v3650, %v3749
  %v3751 = vpop.f32.mrf.mxu0
  %3752 = vmatprep.mubr.bf16.mxu0 0
  %3753 = vmatmul.mubr.bf16.gmra.mxu0 %v3677
  %v3754 = vpop.f32.mrf.mxu0
  %v3755 = vadd.f32 %v3650, %v3754
  %v3756 = vpop.f32.mrf.mxu0
  %v3757 = vpop.f32.mrf.mxu0
  %v3758 = vadd.f32 %v3650, %v3757
  %v3759 = vpop.f32.mrf.mxu0
  %3760 = vmatprep.mubr.bf16.mxu0 0
  %3761 = vmatmul.mubr.bf16.gmra.mxu0 %v3680
  %v3762 = vpop.f32.mrf.mxu0
  %v3763 = vadd.f32 %v3650, %v3762
  %v3764 = vpop.f32.mrf.mxu0
  %v3765 = vpop.f32.mrf.mxu0
  %v3766 = vadd.f32 %v3650, %v3765
  %v3767 = vpop.f32.mrf.mxu0
  %3768 = vmatprep.mubr.bf16.mxu0 0
  %3769 = vmatmul.mubr.bf16.gmra.mxu0 %v3683
  %v3770 = vpop.f32.mrf.mxu0
  %v3771 = vadd.f32 %v3650, %v3770
  %v3772 = vpop.f32.mrf.mxu0
  %v3773 = vpop.f32.mrf.mxu0
  %v3774 = vadd.f32 %v3650, %v3773
  %v3775 = vpop.f32.mrf.mxu0
  %3776 = vmatprep.mubr.bf16.mxu0 0
  %3777 = vmatmul.mubr.bf16.gmra.mxu0 %v3686
  %v3778 = vpop.f32.mrf.mxu0
  %v3779 = vadd.f32 %v3650, %v3778
  %v3780 = vpop.f32.mrf.mxu0
  %v3781 = vpop.f32.mrf.mxu0
  %v3782 = vadd.f32 %v3650, %v3781
  %v3783 = vpop.f32.mrf.mxu0
  %3784 = vdwg.mxu0
  %v3785 = vld [vmem:[%s49] sm:$0xf]
  %v3786 = vld [vmem:[%s49 + $0x4] sm:$0xf]
  %v3787 = vld [vmem:[%s49 + $0x8] sm:$0xf]
  %v3788 = vld [vmem:[%s49 + $0xc] sm:$0xf]
  %v3789 = vld [vmem:[%s51] sm:$0x1]
  %v3791 = vlaneseq
  %v3792 = vshrl.u32 %v3791, 7
  %v3793 = vsub.s32 0, %v3792
  %v3794 = vrot.slane %v3789, %v3793
  %v3800 = vunpack.c.l.b16 %v3785
  %v3801 = vunpack.c.l.b16 %v3786
  %v3802 = vunpack.c.l.b16 %v3787
  %v3803 = vunpack.c.l.b16 %v3788
  %v3804 = vpack.c.b16 %v3801, %v3800
  %v3805 = vpack.c.b16 %v3803, %v3802
  %3808 = vmatprep.subr.bf16.mxu0 0
  %3809 = vmatpush1.bf16.msra.mxu0 0
  %3810 = vmatprep.subr.bf16.mxu0 0
  %3811 = vmatpush1.bf16.msra.mxu0 0
  %3812 = vmatprep.subr.bf16.mxu0 0
  %3813 = vmatpush1.bf16.msra.mxu0 0
  %3814 = vmatprep.subr.bf16.mxu0 0
  %3815 = vmatpush1.bf16.msra.mxu0 0
  %3816 = vmatprep.subr.bf16.mxu0 0
  %3817 = vmatpush1.bf16.msra.mxu0 0
  %3818 = vmatprep.subr.bf16.mxu0 0
  %3819 = vmatpush1.bf16.msra.mxu0 0
  %3820 = vmatprep.subr.bf16.mxu0 0
  %3821 = vmatpush1.bf16.msra.mxu0 %v3805
  %3822 = vmatprep.subr.bf16.mxu0 0
  %3823 = vmatpush1.bf16.msra.mxu0 %v3804
  %3824 = vmatprep.subr.bf16.mxu0 0
  %3825 = vmatpush2.bf16.msra.mxu0 0
  %3826 = vmatprep.subr.bf16.mxu0 0
  %3827 = vmatpush2.bf16.msra.mxu0 0
  %3828 = vmatprep.subr.bf16.mxu0 0
  %3829 = vmatpush2.bf16.msra.mxu0 0
  %3830 = vmatprep.subr.bf16.mxu0 0
  %3831 = vmatpush2.bf16.msra.mxu0 0
  %3832 = vmatprep.subr.bf16.mxu0 0
  %3833 = vmatpush2.bf16.msra.mxu0 0
  %3834 = vmatprep.subr.bf16.mxu0 0
  %3835 = vmatpush2.bf16.msra.mxu0 0
  %3836 = vmatprep.subr.bf16.mxu0 0
  %3837 = vmatpush2.bf16.msra.mxu0 0
  %3838 = vmatprep.subr.bf16.mxu0 0
  %3839 = vmatpush2.bf16.msra.mxu0 0
  %3840 = vmatprep.mubr.bf16.mxu0 0
  %3841 = vmatmul.mubr.bf16.gmra.mxu0 %v3665
  %v3842 = vpop.f32.mrf.mxu0
  %v3843 = vadd.f32 %v3794, %v3842
  %v3844 = vpop.f32.mrf.mxu0
  %v3845 = vpop.f32.mrf.mxu0
  %v3846 = vadd.f32 %v3794, %v3845
  %v3847 = vpop.f32.mrf.mxu0
  %3848 = vmatprep.mubr.bf16.mxu0 0
  %3849 = vmatmul.mubr.bf16.gmra.mxu0 %v3668
  %v3850 = vpop.f32.mrf.mxu0
  %v3851 = vadd.f32 %v3794, %v3850
  %v3852 = vpop.f32.mrf.mxu0
  %v3853 = vpop.f32.mrf.mxu0
  %v3854 = vadd.f32 %v3794, %v3853
  %v3855 = vpop.f32.mrf.mxu0
  %3856 = vmatprep.mubr.bf16.mxu0 0
  %3857 = vmatmul.mubr.bf16.gmra.mxu0 %v3671
  %v3858 = vpop.f32.mrf.mxu0
  %v3859 = vadd.f32 %v3794, %v3858
  %v3860 = vpop.f32.mrf.mxu0
  %v3861 = vpop.f32.mrf.mxu0
  %v3862 = vadd.f32 %v3794, %v3861
  %v3863 = vpop.f32.mrf.mxu0
  %3864 = vmatprep.mubr.bf16.mxu0 0
  %3865 = vmatmul.mubr.bf16.gmra.mxu0 %v3674
  %v3866 = vpop.f32.mrf.mxu0
  %v3867 = vadd.f32 %v3794, %v3866
  %v3868 = vpop.f32.mrf.mxu0
  %v3869 = vpop.f32.mrf.mxu0
  %v3870 = vadd.f32 %v3794, %v3869
  %v3871 = vpop.f32.mrf.mxu0
  %3872 = vmatprep.mubr.bf16.mxu0 0
  %3873 = vmatmul.mubr.bf16.gmra.mxu0 %v3677
  %v3874 = vpop.f32.mrf.mxu0
  %v3875 = vadd.f32 %v3794, %v3874
  %v3876 = vpop.f32.mrf.mxu0
  %v3877 = vpop.f32.mrf.mxu0
  %v3878 = vadd.f32 %v3794, %v3877
  %v3879 = vpop.f32.mrf.mxu0
  %3880 = vmatprep.mubr.bf16.mxu0 0
  %3881 = vmatmul.mubr.bf16.gmra.mxu0 %v3680
  %v3882 = vpop.f32.mrf.mxu0
  %v3883 = vadd.f32 %v3794, %v3882
  %v3884 = vpop.f32.mrf.mxu0
  %v3885 = vpop.f32.mrf.mxu0
  %v3886 = vadd.f32 %v3794, %v3885
  %v3887 = vpop.f32.mrf.mxu0
  %3888 = vmatprep.mubr.bf16.mxu0 0
  %3889 = vmatmul.mubr.bf16.gmra.mxu0 %v3683
  %v3890 = vpop.f32.mrf.mxu0
  %v3891 = vadd.f32 %v3794, %v3890
  %v3892 = vpop.f32.mrf.mxu0
  %v3893 = vpop.f32.mrf.mxu0
  %v3894 = vadd.f32 %v3794, %v3893
  %v3895 = vpop.f32.mrf.mxu0
  %3896 = vmatprep.mubr.bf16.mxu0 0
  %3897 = vmatmul.mubr.bf16.gmra.mxu0 %v3686
  %v3898 = vpop.f32.mrf.mxu0
  %v3899 = vadd.f32 %v3794, %v3898
  %v3900 = vpop.f32.mrf.mxu0
  %v3901 = vpop.f32.mrf.mxu0
  %v3902 = vadd.f32 %v3794, %v3901
  %v3903 = vpop.f32.mrf.mxu0
  %3904 = vdwg.mxu0
  %3905 = vst [vmem:[%s53] sm:$0xff] %v3247
  %3906 = vst [vmem:[%s53 + $0x8] sm:$0xff] %v3249
  %3907 = vst [vmem:[%s53 + $0x10] sm:$0xff] %v3251
  %3908 = vst [vmem:[%s53 + $0x18] sm:$0xff] %v3253
  %3909 = vst [vmem:[%s53 + $0x20] sm:$0xff] %v3257
  %3910 = vst [vmem:[%s53 + $0x28] sm:$0xff] %v3259
  %3911 = vst [vmem:[%s53 + $0x30] sm:$0xff] %v3261
  %3912 = vst [vmem:[%s53 + $0x38] sm:$0xff] %v3263
  %3913 = vst [vmem:[%s53 + $0x40] sm:$0xff] %v3267
  %3914 = vst [vmem:[%s53 + $0x48] sm:$0xff] %v3269
  %3915 = vst [vmem:[%s53 + $0x50] sm:$0xff] %v3271
  %3916 = vst [vmem:[%s53 + $0x58] sm:$0xff] %v3273
  %3917 = vst [vmem:[%s53 + $0x60] sm:$0xff] %v3277
  %3918 = vst [vmem:[%s53 + $0x68] sm:$0xff] %v3279
  %3919 = vst [vmem:[%s53 + $0x70] sm:$0xff] %v3281
  %3920 = vst [vmem:[%s53 + $0x78] sm:$0xff] %v3283
  %3921 = vst [vmem:[%s53 + $0x80] sm:$0xff] %v3287
  %3922 = vst [vmem:[%s53 + $0x88] sm:$0xff] %v3289
  %3923 = vst [vmem:[%s53 + $0x90] sm:$0xff] %v3291
  %3924 = vst [vmem:[%s53 + $0x98] sm:$0xff] %v3293
  %3925 = vst [vmem:[%s53 + $0xa0] sm:$0xff] %v3297
  %3926 = vst [vmem:[%s53 + $0xa8] sm:$0xff] %v3299
  %3927 = vst [vmem:[%s53 + $0xb0] sm:$0xff] %v3301
  %3928 = vst [vmem:[%s53 + $0xb8] sm:$0xff] %v3303
  %3929 = vst [vmem:[%s53 + $0xc0] sm:$0xff] %v3307
  %3930 = vst [vmem:[%s53 + $0xc8] sm:$0xff] %v3309
  %3931 = vst [vmem:[%s53 + $0xd0] sm:$0xff] %v3311
  %3932 = vst [vmem:[%s53 + $0xd8] sm:$0xff] %v3313
  %3933 = vst [vmem:[%s53 + $0xe0] sm:$0xff] %v3317
  %3934 = vst [vmem:[%s53 + $0xe8] sm:$0xff] %v3319
  %3935 = vst [vmem:[%s53 + $0xf0] sm:$0xff] %v3321
  %3936 = vst [vmem:[%s53 + $0xf8] sm:$0xff] %v3323
  %3937 = vst.msk [vmem:[%s55] sm:$0xff] %vm2866, %v2436
  %3938 = vst.msk [vmem:[%s55 + $0x8] sm:$0xff] %vm2866, %v2439
  %3939 = vst.msk [vmem:[%s55 + $0x10] sm:$0xff] %vm2866, %v2444
  %3940 = vst.msk [vmem:[%s55 + $0x18] sm:$0xff] %vm2866, %v2447
  %3941 = vst.msk [vmem:[%s55 + $0x20] sm:$0xff] %vm2866, %v2452
  %3942 = vst.msk [vmem:[%s55 + $0x28] sm:$0xff] %vm2866, %v2455
  %3943 = vst.msk [vmem:[%s55 + $0x30] sm:$0xff] %vm2866, %v2460
  %3944 = vst.msk [vmem:[%s55 + $0x38] sm:$0xff] %vm2866, %v2463
  %3945 = vst.msk [vmem:[%s55 + $0x40] sm:$0xff] %vm2866, %v2468
  %3946 = vst.msk [vmem:[%s55 + $0x48] sm:$0xff] %vm2866, %v2471
  %3947 = vst.msk [vmem:[%s55 + $0x50] sm:$0xff] %vm2866, %v2476
  %3948 = vst.msk [vmem:[%s55 + $0x58] sm:$0xff] %vm2866, %v2479
  %3949 = vst.msk [vmem:[%s55 + $0x60] sm:$0xff] %vm2866, %v2484
  %3950 = vst.msk [vmem:[%s55 + $0x68] sm:$0xff] %vm2866, %v2487
  %3951 = vst.msk [vmem:[%s55 + $0x70] sm:$0xff] %vm2866, %v2492
  %3952 = vst.msk [vmem:[%s55 + $0x78] sm:$0xff] %vm2866, %v2495
  %3953 = vst.msk [vmem:[%s57] sm:$0xff] %vm2866, %v2556
  %3954 = vst.msk [vmem:[%s57 + $0x8] sm:$0xff] %vm2866, %v2559
  %3955 = vst.msk [vmem:[%s57 + $0x10] sm:$0xff] %vm2866, %v2564
  %3956 = vst.msk [vmem:[%s57 + $0x18] sm:$0xff] %vm2866, %v2567
  %3957 = vst.msk [vmem:[%s57 + $0x20] sm:$0xff] %vm2866, %v2572
  %3958 = vst.msk [vmem:[%s57 + $0x28] sm:$0xff] %vm2866, %v2575
  %3959 = vst.msk [vmem:[%s57 + $0x30] sm:$0xff] %vm2866, %v2580
  %3960 = vst.msk [vmem:[%s57 + $0x38] sm:$0xff] %vm2866, %v2583
  %3961 = vst.msk [vmem:[%s57 + $0x40] sm:$0xff] %vm2866, %v2588
  %3962 = vst.msk [vmem:[%s57 + $0x48] sm:$0xff] %vm2866, %v2591
  %3963 = vst.msk [vmem:[%s57 + $0x50] sm:$0xff] %vm2866, %v2596
  %3964 = vst.msk [vmem:[%s57 + $0x58] sm:$0xff] %vm2866, %v2599
  %3965 = vst.msk [vmem:[%s57 + $0x60] sm:$0xff] %vm2866, %v2604
  %3966 = vst.msk [vmem:[%s57 + $0x68] sm:$0xff] %vm2866, %v2607
  %3967 = vst.msk [vmem:[%s57 + $0x70] sm:$0xff] %vm2866, %v2612
  %3968 = vst.msk [vmem:[%s57 + $0x78] sm:$0xff] %vm2866, %v2615
  %3969 = vst.msk [vmem:[%s59] sm:$0xff] %vm2866, %v3723
  %3970 = vst.msk [vmem:[%s59 + $0x8] sm:$0xff] %vm2866, %v3726
  %3971 = vst.msk [vmem:[%s59 + $0x10] sm:$0xff] %vm2866, %v3731
  %3972 = vst.msk [vmem:[%s59 + $0x18] sm:$0xff] %vm2866, %v3734
  %3973 = vst.msk [vmem:[%s59 + $0x20] sm:$0xff] %vm2866, %v3739
  %3974 = vst.msk [vmem:[%s59 + $0x28] sm:$0xff] %vm2866, %v3742
  %3975 = vst.msk [vmem:[%s59 + $0x30] sm:$0xff] %vm2866, %v3747
  %3976 = vst.msk [vmem:[%s59 + $0x38] sm:$0xff] %vm2866, %v3750
  %3977 = vst.msk [vmem:[%s59 + $0x40] sm:$0xff] %vm2866, %v3755
  %3978 = vst.msk [vmem:[%s59 + $0x48] sm:$0xff] %vm2866, %v3758
  %3979 = vst.msk [vmem:[%s59 + $0x50] sm:$0xff] %vm2866, %v3763
  %3980 = vst.msk [vmem:[%s59 + $0x58] sm:$0xff] %vm2866, %v3766
  %3981 = vst.msk [vmem:[%s59 + $0x60] sm:$0xff] %vm2866, %v3771
  %3982 = vst.msk [vmem:[%s59 + $0x68] sm:$0xff] %vm2866, %v3774
  %3983 = vst.msk [vmem:[%s59 + $0x70] sm:$0xff] %vm2866, %v3779
  %3984 = vst.msk [vmem:[%s59 + $0x78] sm:$0xff] %vm2866, %v3782
  %3985 = vst.msk [vmem:[%s61] sm:$0xff] %vm2866, %v3843
  %3986 = vst.msk [vmem:[%s61 + $0x8] sm:$0xff] %vm2866, %v3846
  %3987 = vst.msk [vmem:[%s61 + $0x10] sm:$0xff] %vm2866, %v3851
  %3988 = vst.msk [vmem:[%s61 + $0x18] sm:$0xff] %vm2866, %v3854
  %3989 = vst.msk [vmem:[%s61 + $0x20] sm:$0xff] %vm2866, %v3859
  %3990 = vst.msk [vmem:[%s61 + $0x28] sm:$0xff] %vm2866, %v3862
  %3991 = vst.msk [vmem:[%s61 + $0x30] sm:$0xff] %vm2866, %v3867
  %3992 = vst.msk [vmem:[%s61 + $0x38] sm:$0xff] %vm2866, %v3870
  %3993 = vst.msk [vmem:[%s61 + $0x40] sm:$0xff] %vm2866, %v3875
  %3994 = vst.msk [vmem:[%s61 + $0x48] sm:$0xff] %vm2866, %v3878
  %3995 = vst.msk [vmem:[%s61 + $0x50] sm:$0xff] %vm2866, %v3883
  %3996 = vst.msk [vmem:[%s61 + $0x58] sm:$0xff] %vm2866, %v3886
  %3997 = vst.msk [vmem:[%s61 + $0x60] sm:$0xff] %vm2866, %v3891
  %3998 = vst.msk [vmem:[%s61 + $0x68] sm:$0xff] %vm2866, %v3894
  %3999 = vst.msk [vmem:[%s61 + $0x70] sm:$0xff] %vm2866, %v3899
  %4000 = vst.msk [vmem:[%s61 + $0x78] sm:$0xff] %vm2866, %v3902
  %4001 = vst.msk [vmem:[%s63] sm:$0xff] %vm2376, %v2329
  %4002 = vst.msk [vmem:[%s63 + $0x8] sm:$0xff] %vm2376, %v2330
  %4003 = vst.msk [vmem:[%s63 + $0x10] sm:$0xff] %vm2376, %v2331
  %4004 = vst.msk [vmem:[%s63 + $0x18] sm:$0xff] %vm2376, %v2332
  %4005 = vst.msk [vmem:[%s63 + $0x20] sm:$0xff] %vm2376, %v2333
  %4006 = vst.msk [vmem:[%s63 + $0x28] sm:$0xff] %vm2376, %v2334
  %4007 = vst.msk [vmem:[%s63 + $0x30] sm:$0xff] %vm2376, %v2335
  %4008 = vst.msk [vmem:[%s63 + $0x38] sm:$0xff] %vm2376, %v2336
  %4009 = vst.msk [vmem:[%s63 + $0x40] sm:$0xff] %vm2376, %v2337
  %4010 = vst.msk [vmem:[%s63 + $0x48] sm:$0xff] %vm2376, %v2338
  %4011 = vst.msk [vmem:[%s63 + $0x50] sm:$0xff] %vm2376, %v2339
  %4012 = vst.msk [vmem:[%s63 + $0x58] sm:$0xff] %vm2376, %v2340
  %4013 = vst.msk [vmem:[%s63 + $0x60] sm:$0xff] %vm2376, %v2341
  %4014 = vst.msk [vmem:[%s63 + $0x68] sm:$0xff] %vm2376, %v2342
  %4015 = vst.msk [vmem:[%s63 + $0x70] sm:$0xff] %vm2376, %v2343
  %4016 = vst.msk [vmem:[%s63 + $0x78] sm:$0xff] %vm2376, %v2344
  // Predicated region
  $region106: #{forward.1} parent=0 // pred_check
    _
  $region107: #{forward.1} parent=0 // pred_check_branch
    %4018 = sbr.rel (0) target = $region109
  $region108: #{forward.1} parent=0 // pred_region
    _
  $region109: #{forward.1} parent=0 // pred_fallthru
    _
  // Predicated region
  $region110: #{forward.1} parent=0 // pred_check
    _
  $region111: #{forward.1} parent=0 // pred_check_branch
    %4020 = sbr.rel (0) target = $region113
  $region112: #{forward.1} parent=0 // pred_region
    _
  $region113: #{forward.1} parent=0 // pred_fallthru
    _
  // Predicated region
  $region114: #{forward.1} parent=0 // pred_check
    _
  $region115: #{forward.1} parent=0 // pred_check_branch
    %4022 = sbr.rel (0) target = $region117
  $region116: #{forward.1} parent=0 // pred_region
    _
  $region117: #{forward.1} parent=0 // pred_fallthru
    _
  // Predicated region
  $region118: #{forward.1} parent=0 // pred_check
    _
  $region119: #{forward.1} parent=0 // pred_check_branch
    %4024 = sbr.rel (0) target = $region121
  $region120: #{forward.1} parent=0 // pred_region
    _
  $region121: #{forward.1} parent=0 // pred_fallthru
    _
  // Predicated region
  $region122: #{forward.1} parent=0 // pred_check
    _
  $region123: #{forward.1} parent=0 // pred_check_branch
    %4026 = sbr.rel (0) target = $region125
  $region124: #{forward.1} parent=0 // pred_region
    _
  $region125: #{forward.1} parent=0 // pred_fallthru
    _
  // Predicated region
  $region126: #{forward.1} parent=0 // pred_check
    _
  $region127: #{forward.1} parent=0 // pred_check_branch
    %4028 = sbr.rel (0) target = $region129
  $region128: #{forward.1} parent=0 // pred_region
    _
  $region129: #{forward.1} parent=0 // pred_fallthru
    _
  // Predicated region
  $region130: #{forward.1} parent=0 // pred_check
    _
  $region131: #{forward.1} parent=0 // pred_check_branch
    %4030 = sbr.rel (0) target = $region133
  $region132: #{forward.1} parent=0 // pred_region
    _
  $region133: #{forward.1} parent=0 // pred_fallthru
    _
  // Predicated region
  $region134: #{forward.1} parent=0 // pred_check
    _
  $region135: #{forward.1} parent=0 // pred_check_branch
    %4032 = sbr.rel (0) target = $region137
  $region136: #{forward.1} parent=0 // pred_region
    _
  $region137: #{forward.1} parent=0 // pred_fallthru
    _
  // Predicated region
  $region138: #{forward.1} parent=0 // pred_check
    _
  $region139: #{forward.1} parent=0 // pred_check_branch
    %4034 = sbr.rel (0) target = $region141
  $region140: #{forward.1} parent=0 // pred_region
    _
  $region141: #{forward.1} parent=0 // pred_fallthru
    _
  // Predicated region
  $region142: #{forward.1} parent=0 // pred_check
    _
  $region143: #{forward.1} parent=0 // pred_check_branch
    %4036 = sbr.rel (0) target = $region145
  $region144: #{forward.1} parent=0 // pred_region
    _
  $region145: #{forward.1} parent=0 // pred_fallthru
    _
  // Predicated region
  $region146: #{forward.1} parent=0 // pred_check
    _
  $region147: #{forward.1} parent=0 // pred_check_branch
    %4038 = sbr.rel (0) target = $region149
  $region148: #{forward.1} parent=0 // pred_region
    _
  $region149: #{forward.1} parent=0 // pred_fallthru
    _
  // Predicated region
  $region150: #{forward.1} parent=0 // pred_check
    _
  $region151: #{forward.1} parent=0 // pred_check_branch
    %4040 = sbr.rel (0) target = $region153
  $region152: #{forward.1} parent=0 // pred_region
    _
  $region153: #{forward.1} parent=0 // pred_fallthru
    _

</llo_original>
